<compile_context>
chip_gen: v5e
topology: v5e:2x2
jax: 0.10.0
libtpu: 0.0.40
codegen_flags: <defaults>
</compile_context>

<pallas_src>
import functools

import jax
import jax.numpy as jnp
from jax.experimental import pallas as pl
from jax.experimental.pallas import tpu as pltpu


def ssb_kernel(x_ref, masks_ref,
               w1_ref, b1_ref, w2_ref, b2_ref,
               w3_ref, b3_ref, w4_ref, b4_ref,
               wd1_ref, bd1_ref, wd2t_ref, bd2_ref,
               out_ref, *, W, HW, BB, C, res_scale):
    f32 = jnp.float32
    Nb = BB * HW                         # lane width of this block (BB images)
    mm = w1_ref.dtype                    # matmul operand dtype (bf16 or f32)

    x = x_ref[...]                       # (C, Nb) f32
    masks = masks_ref[...]               # (9, 1, Nb) f32, precomputed boundary masks

    # 3x3 tap lane offsets, (dy, dx) row-major; index 4 is the centre tap.
    tap_offsets = [(dy - 1) * W + (dx - 1) for dy in range(3) for dx in range(3)]

    def conv3x3(a, w_ref, b_ref):
        # Fused im2col: 9 rolled+masked copies of `a`, cast per-column to the
        # matmul dtype (avoids a full-width f32 slab), one MXU matmul K = 9*C.
        cols = []
        for idx, off in enumerate(tap_offsets):
            s = a if off == 0 else pltpu.roll(a, (-off) % Nb, axis=1)
            if idx != 4:                              # centre tap needs no mask
                s = s * masks[idx]                    # (1, Nb) broadcast multiply
            cols.append(s.astype(mm))
        slab = jnp.concatenate(cols, axis=0)          # (9C, Nb) in mm dtype
        return jnp.dot(w_ref[...], slab, preferred_element_type=f32) + b_ref[...]

    # ---------------- spa: ResBlock ------------------------------------------
    h1 = jnp.maximum(conv3x3(x, w1_ref, b1_ref), 0.0)
    y1 = x + res_scale * conv3x3(h1, w2_ref, b2_ref)

    # ---------------- spc: ResAttentionBlock (1x1 convs + CALayer) -----------
    t = jnp.maximum(
        jnp.dot(w3_ref[...], y1.astype(mm), preferred_element_type=f32) + b3_ref[...],
        0.0)
    t = jnp.dot(w4_ref[...], t.astype(mm), preferred_element_type=f32) + b4_ref[...]

    # CALayer per image (BB images laid side by side on the lane axis).
    wd1 = wd1_ref[...]          # (C, Cr)
    bd1 = bd1_ref[...]          # (1, Cr)
    wd2t = wd2t_ref[...]        # (C, Cr)
    bd2 = bd2_ref[...]          # (C, 1)
    gate_cols = []
    for b in range(BB):
        seg = t[:, b * HW:(b + 1) * HW]                                   # aligned lane slice
        pooled = jnp.sum(seg, axis=1, keepdims=True) * (1.0 / HW)         # (C, 1)
        d_row = jnp.maximum(
            jnp.sum(wd1 * pooled, axis=0, keepdims=True) + bd1, 0.0)      # (1, Cr)
        g = jax.nn.sigmoid(
            jnp.sum(wd2t * d_row, axis=1, keepdims=True) + bd2)           # (C, 1)
        gate_cols.append(jnp.broadcast_to(g, (C, HW)))
    gate = jnp.concatenate(gate_cols, axis=1) if BB > 1 else gate_cols[0]  # (C, Nb)

    out_ref[...] = (y1 + res_scale * (t * gate)).astype(out_ref.dtype)


def _default_num_groups(B):
    """Grid steps: 1 wide step on single-TC chips (v5e/v6e); 2 parallel steps
    on multi-TC chips (v7x / v4 / v5p) so both TensorCores get work."""
    try:
        kind = jax.devices()[0].device_kind.lower()
    except Exception:
        kind = ""
    multi_tc = any(tag in kind for tag in ("v7", "v4", "v5p"))
    if multi_tc and B >= 2 and B % 2 == 0:
        return 2
    return 1


def ssb_forward(x_nchw, params, *, res_scale=0.1, mm_dtype=jnp.bfloat16,
                num_groups=None):
    """SSB forward. Input/output are NCHW (PyTorch convention)."""
    B, C, H, W = x_nchw.shape
    HW = H * W
    Cr = params["wd1"].shape[1]

    if num_groups is None:
        num_groups = _default_num_groups(B)
    num_groups = max(1, min(int(num_groups), B))
    while B % num_groups:
        num_groups -= 1
    BB = B // num_groups
    Nb = BB * HW

    # (C, B*HW): channels on sublanes, images concatenated along lanes.
    x = jnp.transpose(x_nchw.reshape(B, C, HW), (1, 0, 2)) \
           .reshape(C, B * HW).astype(jnp.float32)

    # Precomputed boundary masks: one (1, HW) row per tap (0 where the tap
    # would read outside its own image), tiled across the BB folded images.
    hh = jnp.arange(HW, dtype=jnp.int32) // W
    ww = jnp.arange(HW, dtype=jnp.int32) % W
    mrows = []
    for dy in range(3):
        for dx in range(3):
            m = jnp.ones((HW,), jnp.float32)
            if dy == 0:
                m = m * (hh >= 1)
            if dy == 2:
                m = m * (hh <= H - 2)
            if dx == 0:
                m = m * (ww >= 1)
            if dx == 2:
                m = m * (ww <= W - 2)
            mrows.append(m.astype(jnp.float32))
    masks = jnp.stack(mrows, axis=0)                          # (9, HW)
    masks = jnp.tile(masks, (1, BB)).reshape(9, 1, Nb)        # (9, 1, Nb)

    # Fuse 3x3 conv weights: HWIO (3,3,Ci,Co) -> (Co, 9*Ci), tap-major (dy, dx).
    def fuse(w):
        co, ci = w.shape[3], w.shape[2]
        return jnp.transpose(w, (3, 0, 1, 2)).reshape(co, 9 * ci).astype(mm_dtype)

    w1f = fuse(params["w1"])
    w2f = fuse(params["w2"])
    w3t = params["w3"].T.astype(mm_dtype)              # (Cout, Cin)
    w4t = params["w4"].T.astype(mm_dtype)
    wd1 = params["wd1"].astype(jnp.float32)             # (C, Cr)
    wd2t = params["wd2"].T.astype(jnp.float32)          # (C, Cr)

    col = lambda v: v.reshape(-1, 1).astype(jnp.float32)
    row = lambda v: v.reshape(1, -1).astype(jnp.float32)

    def full(shape):
        n = len(shape)
        return pl.BlockSpec(shape, lambda i, _n=n: (0,) * _n)

    kernel = functools.partial(ssb_kernel, W=W, HW=HW, BB=BB, C=C,
                               res_scale=float(res_scale))

    out = pl.pallas_call(
        kernel,
        out_shape=jax.ShapeDtypeStruct((C, B * HW), jnp.float32),
        grid=(num_groups,),
        in_specs=[
            pl.BlockSpec((C, Nb), lambda i: (0, i)),   # x: BB images per step
            full((9, 1, Nb)),                          # boundary masks (resident)
            full((C, 9 * C)), full((C, 1)),            # spa conv1 (fused im2col)
            full((C, 9 * C)), full((C, 1)),            # spa conv2 (fused im2col)
            full((C, C)), full((C, 1)),                # spc conv1 (1x1)
            full((C, C)), full((C, 1)),                # spc conv2 (1x1)
            full((C, Cr)), full((1, Cr)),              # CALayer squeeze
            full((C, Cr)), full((C, 1)),               # CALayer excite (transposed)
        ],
        out_specs=pl.BlockSpec((C, Nb), lambda i: (0, i)),
        compiler_params=pltpu.CompilerParams(dimension_semantics=("parallel",)),
    )(x, masks,
      w1f, col(params["b1"]),
      w2f, col(params["b2"]),
      w3t, col(params["b3"]),
      w4t, col(params["b4"]),
      wd1, row(params["bd1"]),
      wd2t, col(params["bd2"]))

    return jnp.transpose(out.reshape(C, B, HW), (1, 0, 2)).reshape(B, C, H, W)


def ref_ssb(x_nchw, p, res_scale):
    """Pure-JAX reference (matches the PyTorch module semantics, f32)."""
    x = jnp.transpose(x_nchw, (0, 2, 3, 1))
    conv = lambda a, w, b: jax.lax.conv_general_dilated(
        a, w, (1, 1), "SAME", dimension_numbers=("NHWC", "HWIO", "NHWC")) + b
    h = jax.nn.relu(conv(x, p["w1"], p["b1"]))
    h = conv(h, p["w2"], p["b2"])
    y1 = x + res_scale * h
    t = jax.nn.relu(jnp.einsum("bhwc,cd->bhwd", y1, p["w3"]) + p["b3"])
    t = jnp.einsum("bhwc,cd->bhwd", t, p["w4"]) + p["b4"]
    pooled = jnp.mean(t, axis=(1, 2))
    d = jax.nn.relu(pooled @ p["wd1"] + p["bd1"])
    d = jax.nn.sigmoid(d @ p["wd2"] + p["bd2"])
    out = y1 + res_scale * (t * d[:, None, None, :])
    return jnp.transpose(out, (0, 3, 1, 2))


if __name__ == "__main__":
    key = jax.random.PRNGKey(0)
    # n_feats=32, kernel_size=3, res_scale=0.1 (SSPSR defaults); CALayer reduction=16 -> Cr=2
    B, C, H, W = 2, 32, 16, 16
    Cr = C // 16
    res_scale = 0.1

    keys = jax.random.split(key, 13)

    def init(k, shape, fan_in):
        return (jax.random.normal(k, shape, jnp.float32) / jnp.sqrt(fan_in)).astype(jnp.float32)

    params = {
        "w1": init(keys[0], (3, 3, C, C), 9 * C), "b1": init(keys[1], (C,), C),
        "w2": init(keys[2], (3, 3, C, C), 9 * C), "b2": init(keys[3], (C,), C),
        "w3": init(keys[4], (C, C), C),           "b3": init(keys[5], (C,), C),
        "w4": init(keys[6], (C, C), C),           "b4": init(keys[7], (C,), C),
        "wd1": init(keys[8], (C, Cr), C),         "bd1": init(keys[9], (Cr,), C),
        "wd2": init(keys[10], (Cr, C), Cr),       "bd2": init(keys[11], (C,), Cr),
    }
    x = jax.random.normal(keys[12], (B, C, H, W), jnp.float32)

    ref = ref_ssb(x, params, res_scale)

    # Exact path (f32 MXU operands), batch fully folded onto the lane axis.
    out_fold = jax.block_until_ready(
        ssb_forward(x, params, res_scale=res_scale, mm_dtype=jnp.float32, num_groups=1))
    assert out_fold.shape == (B, C, H, W), out_fold.shape
    err = float(jnp.max(jnp.abs(out_fold - ref)))
    assert jnp.allclose(out_fold, ref, rtol=1e-4, atol=1e-4), err

    # Exact path, 2 parallel grid steps (v7x-style two-TensorCore sharding).
    out_split = jax.block_until_ready(
        ssb_forward(x, params, res_scale=res_scale, mm_dtype=jnp.float32, num_groups=2))
    err = float(jnp.max(jnp.abs(out_split - ref)))
    assert jnp.allclose(out_split, ref, rtol=1e-4, atol=1e-4), err

    # Fast path (bf16 MXU operands, f32 accumulation), hardware-default grouping.
    out_bf16 = jax.block_until_ready(
        ssb_forward(x, params, res_scale=res_scale, mm_dtype=jnp.bfloat16))
    assert out_bf16.shape == (B, C, H, W), out_bf16.shape
    err = float(jnp.max(jnp.abs(out_bf16 - ref)))
    assert jnp.allclose(out_bf16, ref, rtol=2e-2, atol=2e-2), err

    print("KERNEL_OK")
</pallas_src>

<mosaic_0001>
module attributes {stable_mosaic.version = 11 : i64} {
  func.func @ssb_kernel(%arg0: i32, %arg1: memref<32x512xf32, #tpu.memory_space<vmem>>, %arg2: memref<9x1x512xf32, #tpu.memory_space<vmem>>, %arg3: memref<32x288xf32, #tpu.memory_space<vmem>>, %arg4: memref<32x1xf32, #tpu.memory_space<vmem>>, %arg5: memref<32x288xf32, #tpu.memory_space<vmem>>, %arg6: memref<32x1xf32, #tpu.memory_space<vmem>>, %arg7: memref<32x32xf32, #tpu.memory_space<vmem>>, %arg8: memref<32x1xf32, #tpu.memory_space<vmem>>, %arg9: memref<32x32xf32, #tpu.memory_space<vmem>>, %arg10: memref<32x1xf32, #tpu.memory_space<vmem>>, %arg11: memref<32x2xf32, #tpu.memory_space<vmem>>, %arg12: memref<1x2xf32, #tpu.memory_space<vmem>>, %arg13: memref<32x2xf32, #tpu.memory_space<vmem>>, %arg14: memref<32x1xf32, #tpu.memory_space<vmem>>, %arg15: memref<32x512xf32, #tpu.memory_space<vmem>>) attributes {dimension_semantics = [#tpu.dimension_semantics<parallel>], iteration_bounds = array<i64: 1>, scalar_prefetch = 0 : i64, scratch_operands = 0 : i64, tpu.core_type = #tpu.core_type<tc>, window_params = [{transform_indices = @transform_0, window_bounds = array<i64: 32, 512>}, {pipeline_mode = #tpu.pipeline_mode<synchronous>, transform_indices = @transform_1, window_bounds = array<i64: 9, 1, 512>}, {pipeline_mode = #tpu.pipeline_mode<synchronous>, transform_indices = @transform_2, window_bounds = array<i64: 32, 288>}, {pipeline_mode = #tpu.pipeline_mode<synchronous>, transform_indices = @transform_3, window_bounds = array<i64: 32, 1>}, {pipeline_mode = #tpu.pipeline_mode<synchronous>, transform_indices = @transform_4, window_bounds = array<i64: 32, 288>}, {pipeline_mode = #tpu.pipeline_mode<synchronous>, transform_indices = @transform_5, window_bounds = array<i64: 32, 1>}, {pipeline_mode = #tpu.pipeline_mode<synchronous>, transform_indices = @transform_6, window_bounds = array<i64: 32, 32>}, {pipeline_mode = #tpu.pipeline_mode<synchronous>, transform_indices = @transform_7, window_bounds = array<i64: 32, 1>}, {pipeline_mode = #tpu.pipeline_mode<synchronous>, transform_indices = @transform_8, window_bounds = array<i64: 32, 32>}, {pipeline_mode = #tpu.pipeline_mode<synchronous>, transform_indices = @transform_9, window_bounds = array<i64: 32, 1>}, {pipeline_mode = #tpu.pipeline_mode<synchronous>, transform_indices = @transform_10, window_bounds = array<i64: 32, 2>}, {pipeline_mode = #tpu.pipeline_mode<synchronous>, transform_indices = @transform_11, window_bounds = array<i64: 1, 2>}, {pipeline_mode = #tpu.pipeline_mode<synchronous>, transform_indices = @transform_12, window_bounds = array<i64: 32, 2>}, {pipeline_mode = #tpu.pipeline_mode<synchronous>, transform_indices = @transform_13, window_bounds = array<i64: 32, 1>}, {transform_indices = @transform_14, window_bounds = array<i64: 32, 512>}]} {
    %c0 = arith.constant 0 : index
    %c0_0 = arith.constant 0 : index
    %0 = vector.load %arg1[%c0, %c0_0] : memref<32x512xf32, #tpu.memory_space<vmem>>, vector<32x512xf32>
    %c0_1 = arith.constant 0 : index
    %c0_2 = arith.constant 0 : index
    %c0_3 = arith.constant 0 : index
    %1 = vector.load %arg2[%c0_1, %c0_2, %c0_3] : memref<9x1x512xf32, #tpu.memory_space<vmem>>, vector<9x1x512xf32>
    %c17_i32 = arith.constant 17 : i32
    %2 = tpu.dynamic_rotate %0 by %c17_i32 dim 1 : vector<32x512xf32>, i32 -> vector<32x512xf32>
    %3 = vector.extract_strided_slice %1 {offsets = [0, 0, 0], sizes = [1, 1, 512], strides = [1, 1, 1]} : vector<9x1x512xf32> to vector<1x1x512xf32>
    %4 = vector.shape_cast %3 : vector<1x1x512xf32> to vector<1x512xf32>
    %5 = vector.broadcast %4 : vector<1x512xf32> to vector<32x512xf32>
    %6 = arith.mulf %2, %5 : vector<32x512xf32>
    %c16_i32 = arith.constant 16 : i32
    %7 = tpu.dynamic_rotate %0 by %c16_i32 dim 1 : vector<32x512xf32>, i32 -> vector<32x512xf32>
    %8 = vector.extract_strided_slice %1 {offsets = [1, 0, 0], sizes = [1, 1, 512], strides = [1, 1, 1]} : vector<9x1x512xf32> to vector<1x1x512xf32>
    %9 = vector.shape_cast %8 : vector<1x1x512xf32> to vector<1x512xf32>
    %10 = vector.broadcast %9 : vector<1x512xf32> to vector<32x512xf32>
    %11 = arith.mulf %7, %10 : vector<32x512xf32>
    %c15_i32 = arith.constant 15 : i32
    %12 = tpu.dynamic_rotate %0 by %c15_i32 dim 1 : vector<32x512xf32>, i32 -> vector<32x512xf32>
    %13 = vector.extract_strided_slice %1 {offsets = [2, 0, 0], sizes = [1, 1, 512], strides = [1, 1, 1]} : vector<9x1x512xf32> to vector<1x1x512xf32>
    %14 = vector.shape_cast %13 : vector<1x1x512xf32> to vector<1x512xf32>
    %15 = vector.broadcast %14 : vector<1x512xf32> to vector<32x512xf32>
    %16 = arith.mulf %12, %15 : vector<32x512xf32>
    %c1_i32 = arith.constant 1 : i32
    %17 = tpu.dynamic_rotate %0 by %c1_i32 dim 1 : vector<32x512xf32>, i32 -> vector<32x512xf32>
    %18 = vector.extract_strided_slice %1 {offsets = [3, 0, 0], sizes = [1, 1, 512], strides = [1, 1, 1]} : vector<9x1x512xf32> to vector<1x1x512xf32>
    %19 = vector.shape_cast %18 : vector<1x1x512xf32> to vector<1x512xf32>
    %20 = vector.broadcast %19 : vector<1x512xf32> to vector<32x512xf32>
    %21 = arith.mulf %17, %20 : vector<32x512xf32>
    %c511_i32 = arith.constant 511 : i32
    %22 = tpu.dynamic_rotate %0 by %c511_i32 dim 1 : vector<32x512xf32>, i32 -> vector<32x512xf32>
    %23 = vector.extract_strided_slice %1 {offsets = [5, 0, 0], sizes = [1, 1, 512], strides = [1, 1, 1]} : vector<9x1x512xf32> to vector<1x1x512xf32>
    %24 = vector.shape_cast %23 : vector<1x1x512xf32> to vector<1x512xf32>
    %25 = vector.broadcast %24 : vector<1x512xf32> to vector<32x512xf32>
    %26 = arith.mulf %22, %25 : vector<32x512xf32>
    %c497_i32 = arith.constant 497 : i32
    %27 = tpu.dynamic_rotate %0 by %c497_i32 dim 1 : vector<32x512xf32>, i32 -> vector<32x512xf32>
    %28 = vector.extract_strided_slice %1 {offsets = [6, 0, 0], sizes = [1, 1, 512], strides = [1, 1, 1]} : vector<9x1x512xf32> to vector<1x1x512xf32>
    %29 = vector.shape_cast %28 : vector<1x1x512xf32> to vector<1x512xf32>
    %30 = vector.broadcast %29 : vector<1x512xf32> to vector<32x512xf32>
    %31 = arith.mulf %27, %30 : vector<32x512xf32>
    %c496_i32 = arith.constant 496 : i32
    %32 = tpu.dynamic_rotate %0 by %c496_i32 dim 1 : vector<32x512xf32>, i32 -> vector<32x512xf32>
    %33 = vector.extract_strided_slice %1 {offsets = [7, 0, 0], sizes = [1, 1, 512], strides = [1, 1, 1]} : vector<9x1x512xf32> to vector<1x1x512xf32>
    %34 = vector.shape_cast %33 : vector<1x1x512xf32> to vector<1x512xf32>
    %35 = vector.broadcast %34 : vector<1x512xf32> to vector<32x512xf32>
    %36 = arith.mulf %32, %35 : vector<32x512xf32>
    %c495_i32 = arith.constant 495 : i32
    %37 = tpu.dynamic_rotate %0 by %c495_i32 dim 1 : vector<32x512xf32>, i32 -> vector<32x512xf32>
    %38 = vector.extract_strided_slice %1 {offsets = [8, 0, 0], sizes = [1, 1, 512], strides = [1, 1, 1]} : vector<9x1x512xf32> to vector<1x1x512xf32>
    %39 = vector.shape_cast %38 : vector<1x1x512xf32> to vector<1x512xf32>
    %40 = vector.broadcast %39 : vector<1x512xf32> to vector<32x512xf32>
    %41 = arith.mulf %37, %40 : vector<32x512xf32>
    %42 = tpu.concatenate %6, %11, %16, %21, %0, %26, %31, %36, %41 in 0 : vector<32x512xf32>, vector<32x512xf32>, vector<32x512xf32>, vector<32x512xf32>, vector<32x512xf32>, vector<32x512xf32>, vector<32x512xf32>, vector<32x512xf32>, vector<32x512xf32> -> vector<288x512xf32>
    %c0_4 = arith.constant 0 : index
    %c0_5 = arith.constant 0 : index
    %43 = vector.load %arg3[%c0_4, %c0_5] : memref<32x288xf32, #tpu.memory_space<vmem>>, vector<32x288xf32>
    %cst = arith.constant dense<0.000000e+00> : vector<32x512xf32>
    %44 = tpu.matmul %43, %42, %cst {dimension_numbers = #tpu.dot_dimension_numbers<[1], [0], [0], [1], [0, 0, 1, 1], [], []>} : vector<32x288xf32>, vector<288x512xf32>, vector<32x512xf32> -> vector<32x512xf32>
    %c0_6 = arith.constant 0 : index
    %c0_7 = arith.constant 0 : index
    %45 = vector.load %arg4[%c0_6, %c0_7] : memref<32x1xf32, #tpu.memory_space<vmem>>, vector<32x1xf32>
    %46 = vector.broadcast %45 : vector<32x1xf32> to vector<32x512xf32>
    %47 = arith.addf %44, %46 : vector<32x512xf32>
    %cst_8 = arith.constant 0.000000e+00 : f32
    %48 = vector.broadcast %cst_8 : f32 to vector<32x512xf32>
    %49 = arith.maximumf %47, %48 : vector<32x512xf32>
    %c17_i32_9 = arith.constant 17 : i32
    %50 = tpu.dynamic_rotate %49 by %c17_i32_9 dim 1 : vector<32x512xf32>, i32 -> vector<32x512xf32>
    %51 = vector.extract_strided_slice %1 {offsets = [0, 0, 0], sizes = [1, 1, 512], strides = [1, 1, 1]} : vector<9x1x512xf32> to vector<1x1x512xf32>
    %52 = vector.shape_cast %51 : vector<1x1x512xf32> to vector<1x512xf32>
    %53 = vector.broadcast %52 : vector<1x512xf32> to vector<32x512xf32>
    %54 = arith.mulf %50, %53 : vector<32x512xf32>
    %c16_i32_10 = arith.constant 16 : i32
    %55 = tpu.dynamic_rotate %49 by %c16_i32_10 dim 1 : vector<32x512xf32>, i32 -> vector<32x512xf32>
    %56 = vector.extract_strided_slice %1 {offsets = [1, 0, 0], sizes = [1, 1, 512], strides = [1, 1, 1]} : vector<9x1x512xf32> to vector<1x1x512xf32>
    %57 = vector.shape_cast %56 : vector<1x1x512xf32> to vector<1x512xf32>
    %58 = vector.broadcast %57 : vector<1x512xf32> to vector<32x512xf32>
    %59 = arith.mulf %55, %58 : vector<32x512xf32>
    %c15_i32_11 = arith.constant 15 : i32
    %60 = tpu.dynamic_rotate %49 by %c15_i32_11 dim 1 : vector<32x512xf32>, i32 -> vector<32x512xf32>
    %61 = vector.extract_strided_slice %1 {offsets = [2, 0, 0], sizes = [1, 1, 512], strides = [1, 1, 1]} : vector<9x1x512xf32> to vector<1x1x512xf32>
    %62 = vector.shape_cast %61 : vector<1x1x512xf32> to vector<1x512xf32>
    %63 = vector.broadcast %62 : vector<1x512xf32> to vector<32x512xf32>
    %64 = arith.mulf %60, %63 : vector<32x512xf32>
    %c1_i32_12 = arith.constant 1 : i32
    %65 = tpu.dynamic_rotate %49 by %c1_i32_12 dim 1 : vector<32x512xf32>, i32 -> vector<32x512xf32>
    %66 = vector.extract_strided_slice %1 {offsets = [3, 0, 0], sizes = [1, 1, 512], strides = [1, 1, 1]} : vector<9x1x512xf32> to vector<1x1x512xf32>
    %67 = vector.shape_cast %66 : vector<1x1x512xf32> to vector<1x512xf32>
    %68 = vector.broadcast %67 : vector<1x512xf32> to vector<32x512xf32>
    %69 = arith.mulf %65, %68 : vector<32x512xf32>
    %c511_i32_13 = arith.constant 511 : i32
    %70 = tpu.dynamic_rotate %49 by %c511_i32_13 dim 1 : vector<32x512xf32>, i32 -> vector<32x512xf32>
    %71 = vector.extract_strided_slice %1 {offsets = [5, 0, 0], sizes = [1, 1, 512], strides = [1, 1, 1]} : vector<9x1x512xf32> to vector<1x1x512xf32>
    %72 = vector.shape_cast %71 : vector<1x1x512xf32> to vector<1x512xf32>
    %73 = vector.broadcast %72 : vector<1x512xf32> to vector<32x512xf32>
    %74 = arith.mulf %70, %73 : vector<32x512xf32>
    %c497_i32_14 = arith.constant 497 : i32
    %75 = tpu.dynamic_rotate %49 by %c497_i32_14 dim 1 : vector<32x512xf32>, i32 -> vector<32x512xf32>
    %76 = vector.extract_strided_slice %1 {offsets = [6, 0, 0], sizes = [1, 1, 512], strides = [1, 1, 1]} : vector<9x1x512xf32> to vector<1x1x512xf32>
    %77 = vector.shape_cast %76 : vector<1x1x512xf32> to vector<1x512xf32>
    %78 = vector.broadcast %77 : vector<1x512xf32> to vector<32x512xf32>
    %79 = arith.mulf %75, %78 : vector<32x512xf32>
    %c496_i32_15 = arith.constant 496 : i32
    %80 = tpu.dynamic_rotate %49 by %c496_i32_15 dim 1 : vector<32x512xf32>, i32 -> vector<32x512xf32>
    %81 = vector.extract_strided_slice %1 {offsets = [7, 0, 0], sizes = [1, 1, 512], strides = [1, 1, 1]} : vector<9x1x512xf32> to vector<1x1x512xf32>
    %82 = vector.shape_cast %81 : vector<1x1x512xf32> to vector<1x512xf32>
    %83 = vector.broadcast %82 : vector<1x512xf32> to vector<32x512xf32>
    %84 = arith.mulf %80, %83 : vector<32x512xf32>
    %c495_i32_16 = arith.constant 495 : i32
    %85 = tpu.dynamic_rotate %49 by %c495_i32_16 dim 1 : vector<32x512xf32>, i32 -> vector<32x512xf32>
    %86 = vector.extract_strided_slice %1 {offsets = [8, 0, 0], sizes = [1, 1, 512], strides = [1, 1, 1]} : vector<9x1x512xf32> to vector<1x1x512xf32>
    %87 = vector.shape_cast %86 : vector<1x1x512xf32> to vector<1x512xf32>
    %88 = vector.broadcast %87 : vector<1x512xf32> to vector<32x512xf32>
    %89 = arith.mulf %85, %88 : vector<32x512xf32>
    %90 = tpu.concatenate %54, %59, %64, %69, %49, %74, %79, %84, %89 in 0 : vector<32x512xf32>, vector<32x512xf32>, vector<32x512xf32>, vector<32x512xf32>, vector<32x512xf32>, vector<32x512xf32>, vector<32x512xf32>, vector<32x512xf32>, vector<32x512xf32> -> vector<288x512xf32>
    %c0_17 = arith.constant 0 : index
    %c0_18 = arith.constant 0 : index
    %91 = vector.load %arg5[%c0_17, %c0_18] : memref<32x288xf32, #tpu.memory_space<vmem>>, vector<32x288xf32>
    %cst_19 = arith.constant dense<0.000000e+00> : vector<32x512xf32>
    %92 = tpu.matmul %91, %90, %cst_19 {dimension_numbers = #tpu.dot_dimension_numbers<[1], [0], [0], [1], [0, 0, 1, 1], [], []>} : vector<32x288xf32>, vector<288x512xf32>, vector<32x512xf32> -> vector<32x512xf32>
    %c0_20 = arith.constant 0 : index
    %c0_21 = arith.constant 0 : index
    %93 = vector.load %arg6[%c0_20, %c0_21] : memref<32x1xf32, #tpu.memory_space<vmem>>, vector<32x1xf32>
    %94 = vector.broadcast %93 : vector<32x1xf32> to vector<32x512xf32>
    %95 = arith.addf %92, %94 : vector<32x512xf32>
    %cst_22 = arith.constant 1.000000e-01 : f32
    %96 = vector.broadcast %cst_22 : f32 to vector<32x512xf32>
    %97 = arith.mulf %96, %95 : vector<32x512xf32>
    %98 = arith.addf %0, %97 : vector<32x512xf32>
    %c0_23 = arith.constant 0 : index
    %c0_24 = arith.constant 0 : index
    %99 = vector.load %arg7[%c0_23, %c0_24] : memref<32x32xf32, #tpu.memory_space<vmem>>, vector<32x32xf32>
    %cst_25 = arith.constant dense<0.000000e+00> : vector<32x512xf32>
    %100 = tpu.matmul %99, %98, %cst_25 {dimension_numbers = #tpu.dot_dimension_numbers<[1], [0], [0], [1], [0, 0, 1, 1], [], []>} : vector<32x32xf32>, vector<32x512xf32>, vector<32x512xf32> -> vector<32x512xf32>
    %c0_26 = arith.constant 0 : index
    %c0_27 = arith.constant 0 : index
    %101 = vector.load %arg8[%c0_26, %c0_27] : memref<32x1xf32, #tpu.memory_space<vmem>>, vector<32x1xf32>
    %102 = vector.broadcast %101 : vector<32x1xf32> to vector<32x512xf32>
    %103 = arith.addf %100, %102 : vector<32x512xf32>
    %cst_28 = arith.constant 0.000000e+00 : f32
    %104 = vector.broadcast %cst_28 : f32 to vector<32x512xf32>
    %105 = arith.maximumf %103, %104 : vector<32x512xf32>
    %c0_29 = arith.constant 0 : index
    %c0_30 = arith.constant 0 : index
    %106 = vector.load %arg9[%c0_29, %c0_30] : memref<32x32xf32, #tpu.memory_space<vmem>>, vector<32x32xf32>
    %cst_31 = arith.constant dense<0.000000e+00> : vector<32x512xf32>
    %107 = tpu.matmul %106, %105, %cst_31 {dimension_numbers = #tpu.dot_dimension_numbers<[1], [0], [0], [1], [0, 0, 1, 1], [], []>} : vector<32x32xf32>, vector<32x512xf32>, vector<32x512xf32> -> vector<32x512xf32>
    %c0_32 = arith.constant 0 : index
    %c0_33 = arith.constant 0 : index
    %108 = vector.load %arg10[%c0_32, %c0_33] : memref<32x1xf32, #tpu.memory_space<vmem>>, vector<32x1xf32>
    %109 = vector.broadcast %108 : vector<32x1xf32> to vector<32x512xf32>
    %110 = arith.addf %107, %109 : vector<32x512xf32>
    %c0_34 = arith.constant 0 : index
    %c0_35 = arith.constant 0 : index
    %111 = vector.load %arg11[%c0_34, %c0_35] : memref<32x2xf32, #tpu.memory_space<vmem>>, vector<32x2xf32>
    %c0_36 = arith.constant 0 : index
    %c0_37 = arith.constant 0 : index
    %112 = vector.load %arg12[%c0_36, %c0_37] : memref<1x2xf32, #tpu.memory_space<vmem>>, vector<1x2xf32>
    %c0_38 = arith.constant 0 : index
    %c0_39 = arith.constant 0 : index
    %113 = vector.load %arg13[%c0_38, %c0_39] : memref<32x2xf32, #tpu.memory_space<vmem>>, vector<32x2xf32>
    %c0_40 = arith.constant 0 : index
    %c0_41 = arith.constant 0 : index
    %114 = vector.load %arg14[%c0_40, %c0_41] : memref<32x1xf32, #tpu.memory_space<vmem>>, vector<32x1xf32>
    %115 = vector.extract_strided_slice %110 {offsets = [0, 0], sizes = [32, 256], strides = [1, 1]} : vector<32x512xf32> to vector<32x256xf32>
    %cst_42 = arith.constant dense<0.000000e+00> : vector<32xf32>
    %116 = vector.multi_reduction <add>, %115, %cst_42 [1] : vector<32x256xf32> to vector<32xf32>
    %117 = vector.shape_cast %116 : vector<32xf32> to vector<32x1xf32>
    %cst_43 = arith.constant 3.906250e-03 : f32
    %118 = vector.broadcast %cst_43 : f32 to vector<32x1xf32>
    %119 = arith.mulf %117, %118 : vector<32x1xf32>
    %120 = vector.broadcast %119 : vector<32x1xf32> to vector<32x2xf32>
    %121 = arith.mulf %111, %120 : vector<32x2xf32>
    %cst_44 = arith.constant dense<0.000000e+00> : vector<2xf32>
    %122 = vector.multi_reduction <add>, %121, %cst_44 [0] : vector<32x2xf32> to vector<2xf32>
    %123 = vector.shape_cast %122 : vector<2xf32> to vector<1x2xf32>
    %124 = arith.addf %123, %112 : vector<1x2xf32>
    %cst_45 = arith.constant 0.000000e+00 : f32
    %125 = vector.broadcast %cst_45 : f32 to vector<1x2xf32>
    %126 = arith.maximumf %124, %125 : vector<1x2xf32>
    %127 = vector.broadcast %126 : vector<1x2xf32> to vector<32x2xf32>
    %128 = arith.mulf %113, %127 : vector<32x2xf32>
    %cst_46 = arith.constant dense<0.000000e+00> : vector<32xf32>
    %129 = vector.multi_reduction <add>, %128, %cst_46 [1] : vector<32x2xf32> to vector<32xf32>
    %130 = vector.shape_cast %129 : vector<32xf32> to vector<32x1xf32>
    %131 = arith.addf %130, %114 : vector<32x1xf32>
    %132 = arith.negf %131 : vector<32x1xf32>
    %133 = math.exp %132 : vector<32x1xf32>
    %cst_47 = arith.constant 1.000000e+00 : f32
    %134 = vector.broadcast %cst_47 : f32 to vector<32x1xf32>
    %135 = arith.addf %134, %133 : vector<32x1xf32>
    %136 = arith.divf %134, %135 : vector<32x1xf32>
    %137 = vector.shape_cast %136 : vector<32x1xf32> to vector<32x1xf32>
    %138 = vector.broadcast %137 : vector<32x1xf32> to vector<32x256xf32>
    %139 = vector.extract_strided_slice %110 {offsets = [0, 256], sizes = [32, 256], strides = [1, 1]} : vector<32x512xf32> to vector<32x256xf32>
    %cst_48 = arith.constant dense<0.000000e+00> : vector<32xf32>
    %140 = vector.multi_reduction <add>, %139, %cst_48 [1] : vector<32x256xf32> to vector<32xf32>
    %141 = vector.shape_cast %140 : vector<32xf32> to vector<32x1xf32>
    %cst_49 = arith.constant 3.906250e-03 : f32
    %142 = vector.broadcast %cst_49 : f32 to vector<32x1xf32>
    %143 = arith.mulf %141, %142 : vector<32x1xf32>
    %144 = vector.broadcast %143 : vector<32x1xf32> to vector<32x2xf32>
    %145 = arith.mulf %111, %144 : vector<32x2xf32>
    %cst_50 = arith.constant dense<0.000000e+00> : vector<2xf32>
    %146 = vector.multi_reduction <add>, %145, %cst_50 [0] : vector<32x2xf32> to vector<2xf32>
    %147 = vector.shape_cast %146 : vector<2xf32> to vector<1x2xf32>
    %148 = arith.addf %147, %112 : vector<1x2xf32>
    %cst_51 = arith.constant 0.000000e+00 : f32
    %149 = vector.broadcast %cst_51 : f32 to vector<1x2xf32>
    %150 = arith.maximumf %148, %149 : vector<1x2xf32>
    %151 = vector.broadcast %150 : vector<1x2xf32> to vector<32x2xf32>
    %152 = arith.mulf %113, %151 : vector<32x2xf32>
    %cst_52 = arith.constant dense<0.000000e+00> : vector<32xf32>
    %153 = vector.multi_reduction <add>, %152, %cst_52 [1] : vector<32x2xf32> to vector<32xf32>
    %154 = vector.shape_cast %153 : vector<32xf32> to vector<32x1xf32>
    %155 = arith.addf %154, %114 : vector<32x1xf32>
    %156 = arith.negf %155 : vector<32x1xf32>
    %157 = math.exp %156 : vector<32x1xf32>
    %cst_53 = arith.constant 1.000000e+00 : f32
    %158 = vector.broadcast %cst_53 : f32 to vector<32x1xf32>
    %159 = arith.addf %158, %157 : vector<32x1xf32>
    %160 = arith.divf %158, %159 : vector<32x1xf32>
    %161 = vector.shape_cast %160 : vector<32x1xf32> to vector<32x1xf32>
    %162 = vector.broadcast %161 : vector<32x1xf32> to vector<32x256xf32>
    %163 = tpu.concatenate %138, %162 in 1 : vector<32x256xf32>, vector<32x256xf32> -> vector<32x512xf32>
    %164 = arith.mulf %110, %163 : vector<32x512xf32>
    %cst_54 = arith.constant 1.000000e-01 : f32
    %165 = vector.broadcast %cst_54 : f32 to vector<32x512xf32>
    %166 = arith.mulf %165, %164 : vector<32x512xf32>
    %167 = arith.addf %98, %166 : vector<32x512xf32>
    %c0_55 = arith.constant 0 : index
    %c0_56 = arith.constant 0 : index
    %168 = vector.load %arg15[%c0_55, %c0_56] : memref<32x512xf32, #tpu.memory_space<vmem>>, vector<32x512xf32>
    tpu.vector_store %arg15[%c0_55, %c0_56], %167 {strides = array<i32>} : memref<32x512xf32, #tpu.memory_space<vmem>>, vector<32x512xf32>,
    return
  }
  func.func @transform_0(%arg0: i32) -> (i32, i32) {
    %c0_i32 = arith.constant 0 : i32
    %c0_i32_0 = arith.constant 0 : i32
    return %c0_i32, %arg0 : i32, i32
  }
  func.func @transform_1(%arg0: i32) -> (i32, i32, i32) {
    %c0_i32 = arith.constant 0 : i32
    %c0_i32_0 = arith.constant 0 : i32
    %c0_i32_1 = arith.constant 0 : i32
    %c0_i32_2 = arith.constant 0 : i32
    return %c0_i32, %c0_i32_0, %c0_i32_1 : i32, i32, i32
  }
  func.func @transform_2(%arg0: i32) -> (i32, i32) {
    %c0_i32 = arith.constant 0 : i32
    %c0_i32_0 = arith.constant 0 : i32
    %c0_i32_1 = arith.constant 0 : i32
    return %c0_i32, %c0_i32_0 : i32, i32
  }
  func.func @transform_3(%arg0: i32) -> (i32, i32) {
    %c0_i32 = arith.constant 0 : i32
    %c0_i32_0 = arith.constant 0 : i32
    %c0_i32_1 = arith.constant 0 : i32
    return %c0_i32, %c0_i32_0 : i32, i32
  }
  func.func @transform_4(%arg0: i32) -> (i32, i32) {
    %c0_i32 = arith.constant 0 : i32
    %c0_i32_0 = arith.constant 0 : i32
    %c0_i32_1 = arith.constant 0 : i32
    return %c0_i32, %c0_i32_0 : i32, i32
  }
  func.func @transform_5(%arg0: i32) -> (i32, i32) {
    %c0_i32 = arith.constant 0 : i32
    %c0_i32_0 = arith.constant 0 : i32
    %c0_i32_1 = arith.constant 0 : i32
    return %c0_i32, %c0_i32_0 : i32, i32
  }
  func.func @transform_6(%arg0: i32) -> (i32, i32) {
    %c0_i32 = arith.constant 0 : i32
    %c0_i32_0 = arith.constant 0 : i32
    %c0_i32_1 = arith.constant 0 : i32
    return %c0_i32, %c0_i32_0 : i32, i32
  }
  func.func @transform_7(%arg0: i32) -> (i32, i32) {
    %c0_i32 = arith.constant 0 : i32
    %c0_i32_0 = arith.constant 0 : i32
    %c0_i32_1 = arith.constant 0 : i32
    return %c0_i32, %c0_i32_0 : i32, i32
  }
  func.func @transform_8(%arg0: i32) -> (i32, i32) {
    %c0_i32 = arith.constant 0 : i32
    %c0_i32_0 = arith.constant 0 : i32
    %c0_i32_1 = arith.constant 0 : i32
    return %c0_i32, %c0_i32_0 : i32, i32
  }
  func.func @transform_9(%arg0: i32) -> (i32, i32) {
    %c0_i32 = arith.constant 0 : i32
    %c0_i32_0 = arith.constant 0 : i32
    %c0_i32_1 = arith.constant 0 : i32
    return %c0_i32, %c0_i32_0 : i32, i32
  }
  func.func @transform_10(%arg0: i32) -> (i32, i32) {
    %c0_i32 = arith.constant 0 : i32
    %c0_i32_0 = arith.constant 0 : i32
    %c0_i32_1 = arith.constant 0 : i32
    return %c0_i32, %c0_i32_0 : i32, i32
  }
  func.func @transform_11(%arg0: i32) -> (i32, i32) {
    %c0_i32 = arith.constant 0 : i32
    %c0_i32_0 = arith.constant 0 : i32
    %c0_i32_1 = arith.constant 0 : i32
    return %c0_i32, %c0_i32_0 : i32, i32
  }
  func.func @transform_12(%arg0: i32) -> (i32, i32) {
    %c0_i32 = arith.constant 0 : i32
    %c0_i32_0 = arith.constant 0 : i32
    %c0_i32_1 = arith.constant 0 : i32
    return %c0_i32, %c0_i32_0 : i32, i32
  }
  func.func @transform_13(%arg0: i32) -> (i32, i32) {
    %c0_i32 = arith.constant 0 : i32
    %c0_i32_0 = arith.constant 0 : i32
    %c0_i32_1 = arith.constant 0 : i32
    return %c0_i32, %c0_i32_0 : i32, i32
  }
  func.func @transform_14(%arg0: i32) -> (i32, i32) {
    %c0_i32 = arith.constant 0 : i32
    %c0_i32_0 = arith.constant 0 : i32
    return %c0_i32, %arg0 : i32, i32
  }
}

</mosaic_0001>

<llo_original>
// kernel: tpu_custom_call.1
$region0: #{tpu_custom_call.1}
  #allocation0 [shape = 'u32[]', space=smem, size = 0x4, offset = 0x4, fixed_abs, tag = 'smem constant byte address 0x4 - core index']
  #allocation1 [shape = 'u32[72,128]{1,0:T(1,128)}', space=vmem, size = 0x9000, scoped, tag = 'internal scratch']
  %s0 = inlined_call_operand.hbm [shape: f32[32,512], index: 0, kind: input, shape index: {}]
  %s1 = inlined_call_operand.vmem [shape: f32[9,1,512], index: 1, kind: input, shape index: {}]
  %s2 = inlined_call_operand.hbm [shape: f32[32,288], index: 2, kind: input, shape index: {}]
  %s3 = inlined_call_operand.vmem [shape: f32[32,1], index: 3, kind: input, shape index: {}]
  %s4 = inlined_call_operand.hbm [shape: f32[32,288], index: 4, kind: input, shape index: {}]
  %s5 = inlined_call_operand.vmem [shape: f32[32,1], index: 5, kind: input, shape index: {}]
  %s6 = inlined_call_operand.vmem [shape: f32[32,32], index: 6, kind: input, shape index: {}]
  %s7 = inlined_call_operand.vmem [shape: f32[32,1], index: 7, kind: input, shape index: {}]
  %s8 = inlined_call_operand.vmem [shape: f32[32,32], index: 8, kind: input, shape index: {}]
  %s9 = inlined_call_operand.vmem [shape: f32[32,1], index: 9, kind: input, shape index: {}]
  %s10 = inlined_call_operand.vmem [shape: f32[32,2], index: 10, kind: input, shape index: {}]
  %s11 = inlined_call_operand.vmem [shape: f32[1,2], index: 11, kind: input, shape index: {}]
  %s12 = inlined_call_operand.vmem [shape: f32[32,2], index: 12, kind: input, shape index: {}]
  %s13 = inlined_call_operand.vmem [shape: f32[32,1], index: 13, kind: input, shape index: {}]
  %s14 = inlined_call_operand.hbm [shape: f32[32,512], index: 14, kind: output, shape index: {}]
  %s15 = sld [smem:[#allocation0]]
  $region78: #{tpu_custom_call.1} parent=0
    _
  %s17 = ssub.s32 1, %s15
  %s18 = scalar_select 0, %s17, %s15
  $region1: #{tpu_custom_call.1} parent=0
    #allocation2 [shape = 'u8[65536]{0}', space=vmem, size = 0x10000, scoped, tag = 'input window, operand 0, single buffered']
    #allocation3 [shape = 's32[1]{0}', space=sflag, size = 0x4, scoped, tag = 'scoped memory for tpu_custom_call.1']
    #allocation4 [shape = 's32[1]{0}', space=sflag, size = 0x4, scoped, tag = 'scoped memory for tpu_custom_call.1']
    #allocation5 [shape = 'u8[49152]{0}', space=vmem, size = 0xc000, scoped, tag = 'input window, operand 2, single buffered']
    #allocation6 [shape = 's32[1]{0}', space=sflag, size = 0x4, scoped, tag = 'scoped memory for tpu_custom_call.1']
    #allocation7 [shape = 'u8[49152]{0}', space=vmem, size = 0xc000, scoped, tag = 'input window, operand 4, single buffered']
    #allocation8 [shape = 'u8[65536]{0}', space=vmem, size = 0x10000, scoped, tag = 'output window, operand 0, single buffered']
    %19 = vsyncpa [#allocation3], 0
    %20 = vsyncpa [#allocation6], 0
    %21 = vsyncpa [#allocation4], 0
    // Predicated region
    $region2: #{tpu_custom_call.1} parent=1 // pred_check
      _
    $region3: #{tpu_custom_call.1} parent=1 // pred_check_branch
      %23 = sbr.rel (0) target = $region5
    $region4: #{tpu_custom_call.1} parent=1 // pred_region
      %25 = vsyncadd [#allocation3], 0
      %s26 = sshll.u32 %s0, 4
      %s27 = int_to_ptr.hbm [resolvable:$true] %s26
      %s28 = sshll.u32 [#allocation2], 4
      %s29 = int_to_ptr.vmem [resolvable:$true] %s28
      %34 = dma.hbm_to_vmem [thread:$0]  %s27, 2048, %s29, [#allocation3], 512, 512, 32
    $region5: #{tpu_custom_call.1} parent=1 // pred_fallthru
      _
    // Predicated region
    $region6: #{tpu_custom_call.1} parent=1 // pred_check
      _
    $region7: #{tpu_custom_call.1} parent=1 // pred_check_branch
      %36 = sbr.rel (0) target = $region9
    $region8: #{tpu_custom_call.1} parent=1 // pred_region
      _
    $region9: #{tpu_custom_call.1} parent=1 // pred_fallthru
      _
    // Predicated region
    $region10: #{tpu_custom_call.1} parent=1 // pred_check
      _
    $region11: #{tpu_custom_call.1} parent=1 // pred_check_branch
      %38 = sbr.rel (0) target = $region13
    $region12: #{tpu_custom_call.1} parent=1 // pred_region
      %40 = vsyncadd [#allocation6], 0
      %s41 = sshll.u32 %s2, 4
      %s42 = int_to_ptr.hbm [resolvable:$true] %s41
      %s43 = sshll.u32 [#allocation5], 4
      %s44 = int_to_ptr.vmem [resolvable:$true] %s43
      %49 = dma.hbm_to_vmem [thread:$0]  %s42, 1536, %s44, [#allocation6], 384, 384, 24
    $region13: #{tpu_custom_call.1} parent=1 // pred_fallthru
      _
    // Predicated region
    $region14: #{tpu_custom_call.1} parent=1 // pred_check
      _
    $region15: #{tpu_custom_call.1} parent=1 // pred_check_branch
      %51 = sbr.rel (0) target = $region17
    $region16: #{tpu_custom_call.1} parent=1 // pred_region
      _
    $region17: #{tpu_custom_call.1} parent=1 // pred_fallthru
      _
    // Predicated region
    $region18: #{tpu_custom_call.1} parent=1 // pred_check
      _
    $region19: #{tpu_custom_call.1} parent=1 // pred_check_branch
      %53 = sbr.rel (0) target = $region21
    $region20: #{tpu_custom_call.1} parent=1 // pred_region
      %55 = vsyncadd [#allocation6], 0
      %s56 = sshll.u32 %s4, 4
      %s57 = int_to_ptr.hbm [resolvable:$true] %s56
      %s58 = sshll.u32 [#allocation7], 4
      %s59 = int_to_ptr.vmem [resolvable:$true] %s58
      %64 = dma.hbm_to_vmem [thread:$0]  %s57, 1536, %s59, [#allocation6], 384, 384, 24
    $region21: #{tpu_custom_call.1} parent=1 // pred_fallthru
      _
    // Predicated region
    $region22: #{tpu_custom_call.1} parent=1 // pred_check
      _
    $region23: #{tpu_custom_call.1} parent=1 // pred_check_branch
      %66 = sbr.rel (0) target = $region25
    $region24: #{tpu_custom_call.1} parent=1 // pred_region
      _
    $region25: #{tpu_custom_call.1} parent=1 // pred_fallthru
      _
    // Predicated region
    $region26: #{tpu_custom_call.1} parent=1 // pred_check
      _
    $region27: #{tpu_custom_call.1} parent=1 // pred_check_branch
      %68 = sbr.rel (0) target = $region29
    $region28: #{tpu_custom_call.1} parent=1 // pred_region
      _
    $region29: #{tpu_custom_call.1} parent=1 // pred_fallthru
      _
    // Predicated region
    $region30: #{tpu_custom_call.1} parent=1 // pred_check
      _
    $region31: #{tpu_custom_call.1} parent=1 // pred_check_branch
      %70 = sbr.rel (0) target = $region33
    $region32: #{tpu_custom_call.1} parent=1 // pred_region
      _
    $region33: #{tpu_custom_call.1} parent=1 // pred_fallthru
      _
    // Predicated region
    $region34: #{tpu_custom_call.1} parent=1 // pred_check
      _
    $region35: #{tpu_custom_call.1} parent=1 // pred_check_branch
      %72 = sbr.rel (0) target = $region37
    $region36: #{tpu_custom_call.1} parent=1 // pred_region
      _
    $region37: #{tpu_custom_call.1} parent=1 // pred_fallthru
      _
    // Predicated region
    $region38: #{tpu_custom_call.1} parent=1 // pred_check
      _
    $region39: #{tpu_custom_call.1} parent=1 // pred_check_branch
      %74 = sbr.rel (0) target = $region41
    $region40: #{tpu_custom_call.1} parent=1 // pred_region
      _
    $region41: #{tpu_custom_call.1} parent=1 // pred_fallthru
      _
    // Predicated region
    $region42: #{tpu_custom_call.1} parent=1 // pred_check
      _
    $region43: #{tpu_custom_call.1} parent=1 // pred_check_branch
      %76 = sbr.rel (0) target = $region45
    $region44: #{tpu_custom_call.1} parent=1 // pred_region
      _
    $region45: #{tpu_custom_call.1} parent=1 // pred_fallthru
      _
    // Predicated region
    $region46: #{tpu_custom_call.1} parent=1 // pred_check
      _
    $region47: #{tpu_custom_call.1} parent=1 // pred_check_branch
      %78 = sbr.rel (0) target = $region49
    $region48: #{tpu_custom_call.1} parent=1 // pred_region
      _
    $region49: #{tpu_custom_call.1} parent=1 // pred_fallthru
      _
    // Predicated region
    $region50: #{tpu_custom_call.1} parent=1 // pred_check
      _
    $region51: #{tpu_custom_call.1} parent=1 // pred_check_branch
      %80 = sbr.rel (0) target = $region53
    $region52: #{tpu_custom_call.1} parent=1 // pred_region
      _
    $region53: #{tpu_custom_call.1} parent=1 // pred_fallthru
      _
    // Predicated region
    $region54: #{tpu_custom_call.1} parent=1 // pred_check
      _
    $region55: #{tpu_custom_call.1} parent=1 // pred_check_branch
      %82 = sbr.rel (0) target = $region57
    $region56: #{tpu_custom_call.1} parent=1 // pred_region
      _
    $region57: #{tpu_custom_call.1} parent=1 // pred_fallthru
      _
    // Predicated region
    $region58: #{tpu_custom_call.1} parent=1 // pred_check
      _
    $region59: #{tpu_custom_call.1} parent=1 // pred_check_branch
      %84 = sbr.rel (0) target = $region61
    $region60: #{tpu_custom_call.1} parent=1 // pred_region
      %86 = dma.done [#allocation3], 2048
    $region61: #{tpu_custom_call.1} parent=1 // pred_fallthru
      _
    // Predicated region
    $region62: #{tpu_custom_call.1} parent=1 // pred_check
      _
    $region63: #{tpu_custom_call.1} parent=1 // pred_check_branch
      %88 = sbr.rel (0) target = $region65
    $region64: #{tpu_custom_call.1} parent=1 // pred_region
      %90 = dma.done [#allocation6], 1536
    $region65: #{tpu_custom_call.1} parent=1 // pred_fallthru
      _
    // Predicated region
    $region66: #{tpu_custom_call.1} parent=1 // pred_check
      _
    $region67: #{tpu_custom_call.1} parent=1 // pred_check_branch
      %92 = sbr.rel (0) target = $region69
    $region68: #{tpu_custom_call.1} parent=1 // pred_region
      %94 = dma.done [#allocation6], 1536
    $region69: #{tpu_custom_call.1} parent=1 // pred_fallthru
      _
    %v95 = vld [vmem:[#allocation2] sm:$0xff]
    %v96 = vld [vmem:[#allocation2 + $0x8] sm:$0xff]
    %v97 = vld [vmem:[#allocation2 + $0x10] sm:$0xff]
    %v98 = vld [vmem:[#allocation2 + $0x18] sm:$0xff]
    %v99 = vld [vmem:[#allocation2 + $0x20] sm:$0xff]
    %v100 = vld [vmem:[#allocation2 + $0x28] sm:$0xff]
    %v101 = vld [vmem:[#allocation2 + $0x30] sm:$0xff]
    %v102 = vld [vmem:[#allocation2 + $0x38] sm:$0xff]
    %v103 = vld [vmem:[#allocation2 + $0x40] sm:$0xff]
    %v104 = vld [vmem:[#allocation2 + $0x48] sm:$0xff]
    %v105 = vld [vmem:[#allocation2 + $0x50] sm:$0xff]
    %v106 = vld [vmem:[#allocation2 + $0x58] sm:$0xff]
    %v107 = vld [vmem:[#allocation2 + $0x60] sm:$0xff]
    %v108 = vld [vmem:[#allocation2 + $0x68] sm:$0xff]
    %v109 = vld [vmem:[#allocation2 + $0x70] sm:$0xff]
    %v110 = vld [vmem:[#allocation2 + $0x78] sm:$0xff]
    %v111 = vld [vmem:[%s1] sm:$0xf]
    %v112 = vld [vmem:[%s1 + $0x4] sm:$0xf]
    %v113 = vld [vmem:[%s1 + $0x8] sm:$0xf]
    %v114 = vld [vmem:[%s1 + $0xc] sm:$0xf]
    %v115 = vld [vmem:[%s1 + $0x14] sm:$0xf]
    %v116 = vld [vmem:[%s1 + $0x18] sm:$0xf]
    %v117 = vld [vmem:[%s1 + $0x1c] sm:$0xf]
    %v118 = vld [vmem:[%s1 + $0x20] sm:$0xf]
    %119 = vrot.lane.b32.xlu0 %v95, 17
    %v120 = vpop.permute.xlu0 %119
    %121 = vrot.lane.b32.xlu0 %v99, 17
    %v122 = vpop.permute.xlu0 %121
    %123 = vrot.lane.b32.xlu0 %v103, 17
    %v124 = vpop.permute.xlu0 %123
    %125 = vrot.lane.b32.xlu0 %v107, 17
    %v126 = vpop.permute.xlu0 %125
    %127 = vrot.lane.b32.xlu0 %v96, 17
    %v128 = vpop.permute.xlu0 %127
    %129 = vrot.lane.b32.xlu0 %v100, 17
    %v130 = vpop.permute.xlu0 %129
    %131 = vrot.lane.b32.xlu0 %v104, 17
    %v132 = vpop.permute.xlu0 %131
    %133 = vrot.lane.b32.xlu0 %v108, 17
    %v134 = vpop.permute.xlu0 %133
    %135 = vrot.lane.b32.xlu0 %v97, 17
    %v136 = vpop.permute.xlu0 %135
    %137 = vrot.lane.b32.xlu0 %v101, 17
    %v138 = vpop.permute.xlu0 %137
    %139 = vrot.lane.b32.xlu0 %v105, 17
    %v140 = vpop.permute.xlu0 %139
    %141 = vrot.lane.b32.xlu0 %v109, 17
    %v142 = vpop.permute.xlu0 %141
    %143 = vrot.lane.b32.xlu0 %v98, 17
    %v144 = vpop.permute.xlu0 %143
    %145 = vrot.lane.b32.xlu0 %v102, 17
    %v146 = vpop.permute.xlu0 %145
    %147 = vrot.lane.b32.xlu0 %v106, 17
    %v148 = vpop.permute.xlu0 %147
    %149 = vrot.lane.b32.xlu0 %v110, 17
    %v150 = vpop.permute.xlu0 %149
    %v151 = vlaneseq
    %v152 = vand.u32 %v151, 127
    %vm153 = vcmp.lt.s32.totalorder %v152, 17
    %v154 = vsel %vm153, %v136, %v144
    %v155 = vsel %vm153, %v138, %v146
    %v156 = vsel %vm153, %v140, %v148
    %v157 = vsel %vm153, %v142, %v150
    %v158 = vsel %vm153, %v128, %v136
    %v159 = vsel %vm153, %v130, %v138
    %v160 = vsel %vm153, %v132, %v140
    %v161 = vsel %vm153, %v134, %v142
    %v162 = vsel %vm153, %v120, %v128
    %v163 = vsel %vm153, %v122, %v130
    %v164 = vsel %vm153, %v124, %v132
    %v165 = vsel %vm153, %v126, %v134
    %v166 = vsel %vm153, %v144, %v120
    %v167 = vsel %vm153, %v146, %v122
    %v168 = vsel %vm153, %v148, %v124
    %v169 = vsel %vm153, %v150, %v126
    %v171 = vperm.slane %v111, 0
    %v172 = vperm.slane %v111, 1
    %v173 = vperm.slane %v111, 2
    %v174 = vperm.slane %v111, 3
    %v179 = vmul.f32 %v166, %v171
    %v180 = vmul.f32 %v162, %v172
    %v181 = vmul.f32 %v158, %v173
    %v182 = vmul.f32 %v154, %v174
    %v183 = vmul.f32 %v167, %v171
    %v184 = vmul.f32 %v163, %v172
    %v185 = vmul.f32 %v159, %v173
    %v186 = vmul.f32 %v155, %v174
    %v187 = vmul.f32 %v168, %v171
    %v188 = vmul.f32 %v164, %v172
    %v189 = vmul.f32 %v160, %v173
    %v190 = vmul.f32 %v156, %v174
    %v191 = vmul.f32 %v169, %v171
    %v192 = vmul.f32 %v165, %v172
    %v193 = vmul.f32 %v161, %v173
    %v194 = vmul.f32 %v157, %v174
    %195 = vrot.lane.b32.xlu0 %v95, 16
    %v196 = vpop.permute.xlu0 %195
    %197 = vrot.lane.b32.xlu0 %v99, 16
    %v198 = vpop.permute.xlu0 %197
    %199 = vrot.lane.b32.xlu0 %v103, 16
    %v200 = vpop.permute.xlu0 %199
    %201 = vrot.lane.b32.xlu0 %v107, 16
    %v202 = vpop.permute.xlu0 %201
    %203 = vrot.lane.b32.xlu0 %v96, 16
    %v204 = vpop.permute.xlu0 %203
    %205 = vrot.lane.b32.xlu0 %v100, 16
    %v206 = vpop.permute.xlu0 %205
    %207 = vrot.lane.b32.xlu0 %v104, 16
    %v208 = vpop.permute.xlu0 %207
    %209 = vrot.lane.b32.xlu0 %v108, 16
    %v210 = vpop.permute.xlu0 %209
    %211 = vrot.lane.b32.xlu0 %v97, 16
    %v212 = vpop.permute.xlu0 %211
    %213 = vrot.lane.b32.xlu0 %v101, 16
    %v214 = vpop.permute.xlu0 %213
    %215 = vrot.lane.b32.xlu0 %v105, 16
    %v216 = vpop.permute.xlu0 %215
    %217 = vrot.lane.b32.xlu0 %v109, 16
    %v218 = vpop.permute.xlu0 %217
    %219 = vrot.lane.b32.xlu0 %v98, 16
    %v220 = vpop.permute.xlu0 %219
    %221 = vrot.lane.b32.xlu0 %v102, 16
    %v222 = vpop.permute.xlu0 %221
    %223 = vrot.lane.b32.xlu0 %v106, 16
    %v224 = vpop.permute.xlu0 %223
    %225 = vrot.lane.b32.xlu0 %v110, 16
    %v226 = vpop.permute.xlu0 %225
    %vm227 = vcmp.lt.s32.totalorder %v152, 16
    %v228 = vsel %vm227, %v212, %v220
    %v229 = vsel %vm227, %v214, %v222
    %v230 = vsel %vm227, %v216, %v224
    %v231 = vsel %vm227, %v218, %v226
    %v232 = vsel %vm227, %v204, %v212
    %v233 = vsel %vm227, %v206, %v214
    %v234 = vsel %vm227, %v208, %v216
    %v235 = vsel %vm227, %v210, %v218
    %v236 = vsel %vm227, %v196, %v204
    %v237 = vsel %vm227, %v198, %v206
    %v238 = vsel %vm227, %v200, %v208
    %v239 = vsel %vm227, %v202, %v210
    %v240 = vsel %vm227, %v220, %v196
    %v241 = vsel %vm227, %v222, %v198
    %v242 = vsel %vm227, %v224, %v200
    %v243 = vsel %vm227, %v226, %v202
    %v245 = vperm.slane %v112, 0
    %v246 = vperm.slane %v112, 1
    %v247 = vperm.slane %v112, 2
    %v248 = vperm.slane %v112, 3
    %v253 = vmul.f32 %v240, %v245
    %v254 = vmul.f32 %v236, %v246
    %v255 = vmul.f32 %v232, %v247
    %v256 = vmul.f32 %v228, %v248
    %v257 = vmul.f32 %v241, %v245
    %v258 = vmul.f32 %v237, %v246
    %v259 = vmul.f32 %v233, %v247
    %v260 = vmul.f32 %v229, %v248
    %v261 = vmul.f32 %v242, %v245
    %v262 = vmul.f32 %v238, %v246
    %v263 = vmul.f32 %v234, %v247
    %v264 = vmul.f32 %v230, %v248
    %v265 = vmul.f32 %v243, %v245
    %v266 = vmul.f32 %v239, %v246
    %v267 = vmul.f32 %v235, %v247
    %v268 = vmul.f32 %v231, %v248
    %269 = vrot.lane.b32.xlu0 %v95, 15
    %v270 = vpop.permute.xlu0 %269
    %271 = vrot.lane.b32.xlu0 %v99, 15
    %v272 = vpop.permute.xlu0 %271
    %273 = vrot.lane.b32.xlu0 %v103, 15
    %v274 = vpop.permute.xlu0 %273
    %275 = vrot.lane.b32.xlu0 %v107, 15
    %v276 = vpop.permute.xlu0 %275
    %277 = vrot.lane.b32.xlu0 %v96, 15
    %v278 = vpop.permute.xlu0 %277
    %279 = vrot.lane.b32.xlu0 %v100, 15
    %v280 = vpop.permute.xlu0 %279
    %281 = vrot.lane.b32.xlu0 %v104, 15
    %v282 = vpop.permute.xlu0 %281
    %283 = vrot.lane.b32.xlu0 %v108, 15
    %v284 = vpop.permute.xlu0 %283
    %285 = vrot.lane.b32.xlu0 %v97, 15
    %v286 = vpop.permute.xlu0 %285
    %287 = vrot.lane.b32.xlu0 %v101, 15
    %v288 = vpop.permute.xlu0 %287
    %289 = vrot.lane.b32.xlu0 %v105, 15
    %v290 = vpop.permute.xlu0 %289
    %291 = vrot.lane.b32.xlu0 %v109, 15
    %v292 = vpop.permute.xlu0 %291
    %293 = vrot.lane.b32.xlu0 %v98, 15
    %v294 = vpop.permute.xlu0 %293
    %295 = vrot.lane.b32.xlu0 %v102, 15
    %v296 = vpop.permute.xlu0 %295
    %297 = vrot.lane.b32.xlu0 %v106, 15
    %v298 = vpop.permute.xlu0 %297
    %299 = vrot.lane.b32.xlu0 %v110, 15
    %v300 = vpop.permute.xlu0 %299
    %vm301 = vcmp.lt.s32.totalorder %v152, 15
    %v302 = vsel %vm301, %v286, %v294
    %v303 = vsel %vm301, %v288, %v296
    %v304 = vsel %vm301, %v290, %v298
    %v305 = vsel %vm301, %v292, %v300
    %v306 = vsel %vm301, %v278, %v286
    %v307 = vsel %vm301, %v280, %v288
    %v308 = vsel %vm301, %v282, %v290
    %v309 = vsel %vm301, %v284, %v292
    %v310 = vsel %vm301, %v270, %v278
    %v311 = vsel %vm301, %v272, %v280
    %v312 = vsel %vm301, %v274, %v282
    %v313 = vsel %vm301, %v276, %v284
    %v314 = vsel %vm301, %v294, %v270
    %v315 = vsel %vm301, %v296, %v272
    %v316 = vsel %vm301, %v298, %v274
    %v317 = vsel %vm301, %v300, %v276
    %v319 = vperm.slane %v113, 0
    %v320 = vperm.slane %v113, 1
    %v321 = vperm.slane %v113, 2
    %v322 = vperm.slane %v113, 3
    %v327 = vmul.f32 %v314, %v319
    %v328 = vmul.f32 %v310, %v320
    %v329 = vmul.f32 %v306, %v321
    %v330 = vmul.f32 %v302, %v322
    %v331 = vmul.f32 %v315, %v319
    %v332 = vmul.f32 %v311, %v320
    %v333 = vmul.f32 %v307, %v321
    %v334 = vmul.f32 %v303, %v322
    %v335 = vmul.f32 %v316, %v319
    %v336 = vmul.f32 %v312, %v320
    %v337 = vmul.f32 %v308, %v321
    %v338 = vmul.f32 %v304, %v322
    %v339 = vmul.f32 %v317, %v319
    %v340 = vmul.f32 %v313, %v320
    %v341 = vmul.f32 %v309, %v321
    %v342 = vmul.f32 %v305, %v322
    %343 = vrot.lane.b32.xlu0 %v95, 1
    %v344 = vpop.permute.xlu0 %343
    %345 = vrot.lane.b32.xlu0 %v99, 1
    %v346 = vpop.permute.xlu0 %345
    %347 = vrot.lane.b32.xlu0 %v103, 1
    %v348 = vpop.permute.xlu0 %347
    %349 = vrot.lane.b32.xlu0 %v107, 1
    %v350 = vpop.permute.xlu0 %349
    %351 = vrot.lane.b32.xlu0 %v96, 1
    %v352 = vpop.permute.xlu0 %351
    %353 = vrot.lane.b32.xlu0 %v100, 1
    %v354 = vpop.permute.xlu0 %353
    %355 = vrot.lane.b32.xlu0 %v104, 1
    %v356 = vpop.permute.xlu0 %355
    %357 = vrot.lane.b32.xlu0 %v108, 1
    %v358 = vpop.permute.xlu0 %357
    %359 = vrot.lane.b32.xlu0 %v97, 1
    %v360 = vpop.permute.xlu0 %359
    %361 = vrot.lane.b32.xlu0 %v101, 1
    %v362 = vpop.permute.xlu0 %361
    %363 = vrot.lane.b32.xlu0 %v105, 1
    %v364 = vpop.permute.xlu0 %363
    %365 = vrot.lane.b32.xlu0 %v109, 1
    %v366 = vpop.permute.xlu0 %365
    %367 = vrot.lane.b32.xlu0 %v98, 1
    %v368 = vpop.permute.xlu0 %367
    %369 = vrot.lane.b32.xlu0 %v102, 1
    %v370 = vpop.permute.xlu0 %369
    %371 = vrot.lane.b32.xlu0 %v106, 1
    %v372 = vpop.permute.xlu0 %371
    %373 = vrot.lane.b32.xlu0 %v110, 1
    %v374 = vpop.permute.xlu0 %373
    %vm375 = vcmp.lt.s32.totalorder %v152, 1
    %v376 = vsel %vm375, %v360, %v368
    %v377 = vsel %vm375, %v362, %v370
    %v378 = vsel %vm375, %v364, %v372
    %v379 = vsel %vm375, %v366, %v374
    %v380 = vsel %vm375, %v352, %v360
    %v381 = vsel %vm375, %v354, %v362
    %v382 = vsel %vm375, %v356, %v364
    %v383 = vsel %vm375, %v358, %v366
    %v384 = vsel %vm375, %v344, %v352
    %v385 = vsel %vm375, %v346, %v354
    %v386 = vsel %vm375, %v348, %v356
    %v387 = vsel %vm375, %v350, %v358
    %v388 = vsel %vm375, %v368, %v344
    %v389 = vsel %vm375, %v370, %v346
    %v390 = vsel %vm375, %v372, %v348
    %v391 = vsel %vm375, %v374, %v350
    %v393 = vperm.slane %v114, 0
    %v394 = vperm.slane %v114, 1
    %v395 = vperm.slane %v114, 2
    %v396 = vperm.slane %v114, 3
    %v401 = vmul.f32 %v388, %v393
    %v402 = vmul.f32 %v384, %v394
    %v403 = vmul.f32 %v380, %v395
    %v404 = vmul.f32 %v376, %v396
    %v405 = vmul.f32 %v389, %v393
    %v406 = vmul.f32 %v385, %v394
    %v407 = vmul.f32 %v381, %v395
    %v408 = vmul.f32 %v377, %v396
    %v409 = vmul.f32 %v390, %v393
    %v410 = vmul.f32 %v386, %v394
    %v411 = vmul.f32 %v382, %v395
    %v412 = vmul.f32 %v378, %v396
    %v413 = vmul.f32 %v391, %v393
    %v414 = vmul.f32 %v387, %v394
    %v415 = vmul.f32 %v383, %v395
    %v416 = vmul.f32 %v379, %v396
    %417 = vrot.lane.b32.xlu0 %v95, 127
    %v418 = vpop.permute.xlu0 %417
    %419 = vrot.lane.b32.xlu0 %v99, 127
    %v420 = vpop.permute.xlu0 %419
    %421 = vrot.lane.b32.xlu0 %v103, 127
    %v422 = vpop.permute.xlu0 %421
    %423 = vrot.lane.b32.xlu0 %v107, 127
    %v424 = vpop.permute.xlu0 %423
    %425 = vrot.lane.b32.xlu0 %v96, 127
    %v426 = vpop.permute.xlu0 %425
    %427 = vrot.lane.b32.xlu0 %v100, 127
    %v428 = vpop.permute.xlu0 %427
    %429 = vrot.lane.b32.xlu0 %v104, 127
    %v430 = vpop.permute.xlu0 %429
    %431 = vrot.lane.b32.xlu0 %v108, 127
    %v432 = vpop.permute.xlu0 %431
    %433 = vrot.lane.b32.xlu0 %v97, 127
    %v434 = vpop.permute.xlu0 %433
    %435 = vrot.lane.b32.xlu0 %v101, 127
    %v436 = vpop.permute.xlu0 %435
    %437 = vrot.lane.b32.xlu0 %v105, 127
    %v438 = vpop.permute.xlu0 %437
    %439 = vrot.lane.b32.xlu0 %v109, 127
    %v440 = vpop.permute.xlu0 %439
    %441 = vrot.lane.b32.xlu0 %v98, 127
    %v442 = vpop.permute.xlu0 %441
    %443 = vrot.lane.b32.xlu0 %v102, 127
    %v444 = vpop.permute.xlu0 %443
    %445 = vrot.lane.b32.xlu0 %v106, 127
    %v446 = vpop.permute.xlu0 %445
    %447 = vrot.lane.b32.xlu0 %v110, 127
    %v448 = vpop.permute.xlu0 %447
    %vm449 = vcmp.lt.s32.totalorder %v152, 127
    %v450 = vsel %vm449, %v434, %v442
    %v451 = vsel %vm449, %v436, %v444
    %v452 = vsel %vm449, %v438, %v446
    %v453 = vsel %vm449, %v440, %v448
    %v454 = vsel %vm449, %v426, %v434
    %v455 = vsel %vm449, %v428, %v436
    %v456 = vsel %vm449, %v430, %v438
    %v457 = vsel %vm449, %v432, %v440
    %v458 = vsel %vm449, %v418, %v426
    %v459 = vsel %vm449, %v420, %v428
    %v460 = vsel %vm449, %v422, %v430
    %v461 = vsel %vm449, %v424, %v432
    %v462 = vsel %vm449, %v442, %v418
    %v463 = vsel %vm449, %v444, %v420
    %v464 = vsel %vm449, %v446, %v422
    %v465 = vsel %vm449, %v448, %v424
    %v467 = vperm.slane %v115, 0
    %v468 = vperm.slane %v115, 1
    %v469 = vperm.slane %v115, 2
    %v470 = vperm.slane %v115, 3
    %v475 = vmul.f32 %v458, %v467
    %v476 = vmul.f32 %v454, %v468
    %v477 = vmul.f32 %v450, %v469
    %v478 = vmul.f32 %v462, %v470
    %v479 = vmul.f32 %v459, %v467
    %v480 = vmul.f32 %v455, %v468
    %v481 = vmul.f32 %v451, %v469
    %v482 = vmul.f32 %v463, %v470
    %v483 = vmul.f32 %v460, %v467
    %v484 = vmul.f32 %v456, %v468
    %v485 = vmul.f32 %v452, %v469
    %v486 = vmul.f32 %v464, %v470
    %v487 = vmul.f32 %v461, %v467
    %v488 = vmul.f32 %v457, %v468
    %v489 = vmul.f32 %v453, %v469
    %v490 = vmul.f32 %v465, %v470
    %491 = vrot.lane.b32.xlu0 %v95, 113
    %v492 = vpop.permute.xlu0 %491
    %493 = vrot.lane.b32.xlu0 %v99, 113
    %v494 = vpop.permute.xlu0 %493
    %495 = vrot.lane.b32.xlu0 %v103, 113
    %v496 = vpop.permute.xlu0 %495
    %497 = vrot.lane.b32.xlu0 %v107, 113
    %v498 = vpop.permute.xlu0 %497
    %499 = vrot.lane.b32.xlu0 %v96, 113
    %v500 = vpop.permute.xlu0 %499
    %501 = vrot.lane.b32.xlu0 %v100, 113
    %v502 = vpop.permute.xlu0 %501
    %503 = vrot.lane.b32.xlu0 %v104, 113
    %v504 = vpop.permute.xlu0 %503
    %505 = vrot.lane.b32.xlu0 %v108, 113
    %v506 = vpop.permute.xlu0 %505
    %507 = vrot.lane.b32.xlu0 %v97, 113
    %v508 = vpop.permute.xlu0 %507
    %509 = vrot.lane.b32.xlu0 %v101, 113
    %v510 = vpop.permute.xlu0 %509
    %511 = vrot.lane.b32.xlu0 %v105, 113
    %v512 = vpop.permute.xlu0 %511
    %513 = vrot.lane.b32.xlu0 %v109, 113
    %v514 = vpop.permute.xlu0 %513
    %515 = vrot.lane.b32.xlu0 %v98, 113
    %v516 = vpop.permute.xlu0 %515
    %517 = vrot.lane.b32.xlu0 %v102, 113
    %v518 = vpop.permute.xlu0 %517
    %519 = vrot.lane.b32.xlu0 %v106, 113
    %v520 = vpop.permute.xlu0 %519
    %521 = vrot.lane.b32.xlu0 %v110, 113
    %v522 = vpop.permute.xlu0 %521
    %vm523 = vcmp.lt.s32.totalorder %v152, 113
    %v524 = vsel %vm523, %v508, %v516
    %v525 = vsel %vm523, %v510, %v518
    %v526 = vsel %vm523, %v512, %v520
    %v527 = vsel %vm523, %v514, %v522
    %v528 = vsel %vm523, %v500, %v508
    %v529 = vsel %vm523, %v502, %v510
    %v530 = vsel %vm523, %v504, %v512
    %v531 = vsel %vm523, %v506, %v514
    %v532 = vsel %vm523, %v492, %v500
    %v533 = vsel %vm523, %v494, %v502
    %v534 = vsel %vm523, %v496, %v504
    %v535 = vsel %vm523, %v498, %v506
    %v536 = vsel %vm523, %v516, %v492
    %v537 = vsel %vm523, %v518, %v494
    %v538 = vsel %vm523, %v520, %v496
    %v539 = vsel %vm523, %v522, %v498
    %v541 = vperm.slane %v116, 0
    %v542 = vperm.slane %v116, 1
    %v543 = vperm.slane %v116, 2
    %v544 = vperm.slane %v116, 3
    %v549 = vmul.f32 %v532, %v541
    %v550 = vmul.f32 %v528, %v542
    %v551 = vmul.f32 %v524, %v543
    %v552 = vmul.f32 %v536, %v544
    %v553 = vmul.f32 %v533, %v541
    %v554 = vmul.f32 %v529, %v542
    %v555 = vmul.f32 %v525, %v543
    %v556 = vmul.f32 %v537, %v544
    %v557 = vmul.f32 %v534, %v541
    %v558 = vmul.f32 %v530, %v542
    %v559 = vmul.f32 %v526, %v543
    %v560 = vmul.f32 %v538, %v544
    %v561 = vmul.f32 %v535, %v541
    %v562 = vmul.f32 %v531, %v542
    %v563 = vmul.f32 %v527, %v543
    %v564 = vmul.f32 %v539, %v544
    %565 = vrot.lane.b32.xlu0 %v95, 112
    %v566 = vpop.permute.xlu0 %565
    %567 = vrot.lane.b32.xlu0 %v99, 112
    %v568 = vpop.permute.xlu0 %567
    %569 = vrot.lane.b32.xlu0 %v103, 112
    %v570 = vpop.permute.xlu0 %569
    %571 = vrot.lane.b32.xlu0 %v107, 112
    %v572 = vpop.permute.xlu0 %571
    %573 = vrot.lane.b32.xlu0 %v96, 112
    %v574 = vpop.permute.xlu0 %573
    %575 = vrot.lane.b32.xlu0 %v100, 112
    %v576 = vpop.permute.xlu0 %575
    %577 = vrot.lane.b32.xlu0 %v104, 112
    %v578 = vpop.permute.xlu0 %577
    %579 = vrot.lane.b32.xlu0 %v108, 112
    %v580 = vpop.permute.xlu0 %579
    %581 = vrot.lane.b32.xlu0 %v97, 112
    %v582 = vpop.permute.xlu0 %581
    %583 = vrot.lane.b32.xlu0 %v101, 112
    %v584 = vpop.permute.xlu0 %583
    %585 = vrot.lane.b32.xlu0 %v105, 112
    %v586 = vpop.permute.xlu0 %585
    %587 = vrot.lane.b32.xlu0 %v109, 112
    %v588 = vpop.permute.xlu0 %587
    %589 = vrot.lane.b32.xlu0 %v98, 112
    %v590 = vpop.permute.xlu0 %589
    %591 = vrot.lane.b32.xlu0 %v102, 112
    %v592 = vpop.permute.xlu0 %591
    %593 = vrot.lane.b32.xlu0 %v106, 112
    %v594 = vpop.permute.xlu0 %593
    %595 = vrot.lane.b32.xlu0 %v110, 112
    %v596 = vpop.permute.xlu0 %595
    %vm597 = vcmp.lt.s32.totalorder %v152, 112
    %v598 = vsel %vm597, %v582, %v590
    %v599 = vsel %vm597, %v584, %v592
    %v600 = vsel %vm597, %v586, %v594
    %v601 = vsel %vm597, %v588, %v596
    %v602 = vsel %vm597, %v574, %v582
    %v603 = vsel %vm597, %v576, %v584
    %v604 = vsel %vm597, %v578, %v586
    %v605 = vsel %vm597, %v580, %v588
    %v606 = vsel %vm597, %v566, %v574
    %v607 = vsel %vm597, %v568, %v576
    %v608 = vsel %vm597, %v570, %v578
    %v609 = vsel %vm597, %v572, %v580
    %v610 = vsel %vm597, %v590, %v566
    %v611 = vsel %vm597, %v592, %v568
    %v612 = vsel %vm597, %v594, %v570
    %v613 = vsel %vm597, %v596, %v572
    %v615 = vperm.slane %v117, 0
    %v616 = vperm.slane %v117, 1
    %v617 = vperm.slane %v117, 2
    %v618 = vperm.slane %v117, 3
    %v623 = vmul.f32 %v606, %v615
    %v624 = vmul.f32 %v602, %v616
    %v625 = vmul.f32 %v598, %v617
    %v626 = vmul.f32 %v610, %v618
    %v627 = vmul.f32 %v607, %v615
    %v628 = vmul.f32 %v603, %v616
    %v629 = vmul.f32 %v599, %v617
    %v630 = vmul.f32 %v611, %v618
    %v631 = vmul.f32 %v608, %v615
    %v632 = vmul.f32 %v604, %v616
    %v633 = vmul.f32 %v600, %v617
    %v634 = vmul.f32 %v612, %v618
    %v635 = vmul.f32 %v609, %v615
    %v636 = vmul.f32 %v605, %v616
    %v637 = vmul.f32 %v601, %v617
    %v638 = vmul.f32 %v613, %v618
    %639 = vrot.lane.b32.xlu0 %v95, 111
    %v640 = vpop.permute.xlu0 %639
    %641 = vrot.lane.b32.xlu0 %v99, 111
    %v642 = vpop.permute.xlu0 %641
    %643 = vrot.lane.b32.xlu0 %v103, 111
    %v644 = vpop.permute.xlu0 %643
    %645 = vrot.lane.b32.xlu0 %v107, 111
    %v646 = vpop.permute.xlu0 %645
    %647 = vrot.lane.b32.xlu0 %v96, 111
    %v648 = vpop.permute.xlu0 %647
    %649 = vrot.lane.b32.xlu0 %v100, 111
    %v650 = vpop.permute.xlu0 %649
    %651 = vrot.lane.b32.xlu0 %v104, 111
    %v652 = vpop.permute.xlu0 %651
    %653 = vrot.lane.b32.xlu0 %v108, 111
    %v654 = vpop.permute.xlu0 %653
    %655 = vrot.lane.b32.xlu0 %v97, 111
    %v656 = vpop.permute.xlu0 %655
    %657 = vrot.lane.b32.xlu0 %v101, 111
    %v658 = vpop.permute.xlu0 %657
    %659 = vrot.lane.b32.xlu0 %v105, 111
    %v660 = vpop.permute.xlu0 %659
    %661 = vrot.lane.b32.xlu0 %v109, 111
    %v662 = vpop.permute.xlu0 %661
    %663 = vrot.lane.b32.xlu0 %v98, 111
    %v664 = vpop.permute.xlu0 %663
    %665 = vrot.lane.b32.xlu0 %v102, 111
    %v666 = vpop.permute.xlu0 %665
    %667 = vrot.lane.b32.xlu0 %v106, 111
    %v668 = vpop.permute.xlu0 %667
    %669 = vrot.lane.b32.xlu0 %v110, 111
    %v670 = vpop.permute.xlu0 %669
    %vm671 = vcmp.lt.s32.totalorder %v152, 111
    %v672 = vsel %vm671, %v656, %v664
    %v673 = vsel %vm671, %v658, %v666
    %v674 = vsel %vm671, %v660, %v668
    %v675 = vsel %vm671, %v662, %v670
    %v676 = vsel %vm671, %v648, %v656
    %v677 = vsel %vm671, %v650, %v658
    %v678 = vsel %vm671, %v652, %v660
    %v679 = vsel %vm671, %v654, %v662
    %v680 = vsel %vm671, %v640, %v648
    %v681 = vsel %vm671, %v642, %v650
    %v682 = vsel %vm671, %v644, %v652
    %v683 = vsel %vm671, %v646, %v654
    %v684 = vsel %vm671, %v664, %v640
    %v685 = vsel %vm671, %v666, %v642
    %v686 = vsel %vm671, %v668, %v644
    %v687 = vsel %vm671, %v670, %v646
    %v689 = vperm.slane %v118, 0
    %v690 = vperm.slane %v118, 1
    %v691 = vperm.slane %v118, 2
    %v692 = vperm.slane %v118, 3
    %v697 = vmul.f32 %v680, %v689
    %v698 = vmul.f32 %v676, %v690
    %v699 = vmul.f32 %v672, %v691
    %v700 = vmul.f32 %v684, %v692
    %v701 = vmul.f32 %v681, %v689
    %v702 = vmul.f32 %v677, %v690
    %v703 = vmul.f32 %v673, %v691
    %v704 = vmul.f32 %v685, %v692
    %v705 = vmul.f32 %v682, %v689
    %v706 = vmul.f32 %v678, %v690
    %v707 = vmul.f32 %v674, %v691
    %v708 = vmul.f32 %v686, %v692
    %v709 = vmul.f32 %v683, %v689
    %v710 = vmul.f32 %v679, %v690
    %v711 = vmul.f32 %v675, %v691
    %v712 = vmul.f32 %v687, %v692
    %v713 = vld [vmem:[#allocation5] sm:$0xff]
    %v714 = vld [vmem:[#allocation5 + $0x8] sm:$0xff]
    %v715 = vld [vmem:[#allocation5 + $0x10] sm:$0xff]
    %v716 = vld [vmem:[#allocation5 + $0x18] sm:$0xff]
    %v717 = vld [vmem:[#allocation5 + $0x20] sm:$0xff]
    %v718 = vld [vmem:[#allocation5 + $0x28] sm:$0xff]
    %v719 = vld [vmem:[#allocation5 + $0x30] sm:$0xff]
    %v720 = vld [vmem:[#allocation5 + $0x38] sm:$0xff]
    %v721 = vld [vmem:[#allocation5 + $0x40] sm:$0xff]
    %v722 = vld [vmem:[#allocation5 + $0x48] sm:$0xff]
    %v723 = vld [vmem:[#allocation5 + $0x50] sm:$0xff]
    %v724 = vld [vmem:[#allocation5 + $0x58] sm:$0xff]
    %v725 = vld [vmem:[%s3] sm:$0xff]
    %v726 = vld [vmem:[%s3 + $0x8] sm:$0xff]
    %v727 = vld [vmem:[%s3 + $0x10] sm:$0xff]
    %v728 = vld [vmem:[%s3 + $0x18] sm:$0xff]
    %730 = vset.pattern.permute.xlu0 0
    %731 = vperm.xlu0 %730, %v725
    %v732 = vpop.permute.xlu0 %731
    %735 = vset.pattern.permute.xlu0 0
    %736 = vperm.xlu0 %735, %v726
    %v737 = vpop.permute.xlu0 %736
    %740 = vset.pattern.permute.xlu0 0
    %741 = vperm.xlu0 %740, %v727
    %v742 = vpop.permute.xlu0 %741
    %745 = vset.pattern.permute.xlu0 0
    %746 = vperm.xlu0 %745, %v728
    %v747 = vpop.permute.xlu0 %746
    %vm749 = vcmask 261120
    %v751 = vsel %vm749, %v715, 0
    %v754 = vsel %vm749, %v718, 0
    %v757 = vsel %vm749, %v721, 0
    %v760 = vsel %vm749, %v724, 0
    %762 = vmatpush.msra.mxu0 %v413
    %763 = vmatpush.msra.mxu0 %v409
    %764 = vmatpush.msra.mxu0 %v405
    %765 = vmatpush.msra.mxu0 %v401
    %766 = vmatpush.msra.mxu0 %v339
    %767 = vmatpush.msra.mxu0 %v335
    %768 = vmatpush.msra.mxu0 %v331
    %769 = vmatpush.msra.mxu0 %v327
    %770 = vmatpush.msra.mxu0 %v265
    %771 = vmatpush.msra.mxu0 %v261
    %772 = vmatpush.msra.mxu0 %v257
    %773 = vmatpush.msra.mxu0 %v253
    %774 = vmatpush.msra.mxu0 %v191
    %775 = vmatpush.msra.mxu0 %v187
    %776 = vmatpush.msra.mxu0 %v183
    %777 = vmatpush.msra.mxu0 %v179
    %778 = vmatmul.f32.gmra.mxu0 %v713
    %v779 = vpop.f32.mrf.mxu0
    %v780 = vadd.f32 %v732, %v779
    %781 = vmatmul.f32.gmra.mxu0 %v716
    %v782 = vpop.f32.mrf.mxu0
    %v783 = vadd.f32 %v737, %v782
    %784 = vmatmul.f32.gmra.mxu0 %v719
    %v785 = vpop.f32.mrf.mxu0
    %v786 = vadd.f32 %v742, %v785
    %787 = vmatmul.f32.gmra.mxu0 %v722
    %v788 = vpop.f32.mrf.mxu0
    %v789 = vadd.f32 %v747, %v788
    %790 = vdwg.mxu0
    %791 = vmatpush.msra.mxu0 %v635
    %792 = vmatpush.msra.mxu0 %v631
    %793 = vmatpush.msra.mxu0 %v627
    %794 = vmatpush.msra.mxu0 %v623
    %795 = vmatpush.msra.mxu0 %v561
    %796 = vmatpush.msra.mxu0 %v557
    %797 = vmatpush.msra.mxu0 %v553
    %798 = vmatpush.msra.mxu0 %v549
    %799 = vmatpush.msra.mxu0 %v487
    %800 = vmatpush.msra.mxu0 %v483
    %801 = vmatpush.msra.mxu0 %v479
    %802 = vmatpush.msra.mxu0 %v475
    %803 = vmatpush.msra.mxu0 %v107
    %804 = vmatpush.msra.mxu0 %v103
    %805 = vmatpush.msra.mxu0 %v99
    %806 = vmatpush.msra.mxu0 %v95
    %807 = vmatmul.f32.gmra.mxu0 %v714
    %v808 = vpop.f32.mrf.mxu0
    %v809 = vadd.f32 %v780, %v808
    %810 = vmatmul.f32.gmra.mxu0 %v717
    %v811 = vpop.f32.mrf.mxu0
    %v812 = vadd.f32 %v783, %v811
    %813 = vmatmul.f32.gmra.mxu0 %v720
    %v814 = vpop.f32.mrf.mxu0
    %v815 = vadd.f32 %v786, %v814
    %816 = vmatmul.f32.gmra.mxu0 %v723
    %v817 = vpop.f32.mrf.mxu0
    %v818 = vadd.f32 %v789, %v817
    %819 = vdwg.mxu0
    %820 = vmatpush.msra.mxu0 0.0
    %821 = vmatpush.msra.mxu0 0.0
    %822 = vmatpush.msra.mxu0 0.0
    %823 = vmatpush.msra.mxu0 0.0
    %824 = vmatpush.msra.mxu0 0.0
    %825 = vmatpush.msra.mxu0 0.0
    %826 = vmatpush.msra.mxu0 0.0
    %827 = vmatpush.msra.mxu0 0.0
    %828 = vmatpush.msra.mxu0 0.0
    %829 = vmatpush.msra.mxu0 0.0
    %830 = vmatpush.msra.mxu0 0.0
    %831 = vmatpush.msra.mxu0 0.0
    %832 = vmatpush.msra.mxu0 %v709
    %833 = vmatpush.msra.mxu0 %v705
    %834 = vmatpush.msra.mxu0 %v701
    %835 = vmatpush.msra.mxu0 %v697
    %836 = vmatmul.f32.gmra.mxu0 %v751
    %v837 = vpop.f32.mrf.mxu0
    %v838 = vadd.f32 %v809, %v837
    %839 = vmatmul.f32.gmra.mxu0 %v754
    %v840 = vpop.f32.mrf.mxu0
    %v841 = vadd.f32 %v812, %v840
    %842 = vmatmul.f32.gmra.mxu0 %v757
    %v843 = vpop.f32.mrf.mxu0
    %v844 = vadd.f32 %v815, %v843
    %845 = vmatmul.f32.gmra.mxu0 %v760
    %v846 = vpop.f32.mrf.mxu0
    %v847 = vadd.f32 %v818, %v846
    %848 = vdwg.mxu0
    %849 = vmatpush.msra.mxu0 %v414
    %850 = vmatpush.msra.mxu0 %v410
    %851 = vmatpush.msra.mxu0 %v406
    %852 = vmatpush.msra.mxu0 %v402
    %853 = vmatpush.msra.mxu0 %v340
    %854 = vmatpush.msra.mxu0 %v336
    %855 = vmatpush.msra.mxu0 %v332
    %856 = vmatpush.msra.mxu0 %v328
    %857 = vmatpush.msra.mxu0 %v266
    %858 = vmatpush.msra.mxu0 %v262
    %859 = vmatpush.msra.mxu0 %v258
    %860 = vmatpush.msra.mxu0 %v254
    %861 = vmatpush.msra.mxu0 %v192
    %862 = vmatpush.msra.mxu0 %v188
    %863 = vmatpush.msra.mxu0 %v184
    %864 = vmatpush.msra.mxu0 %v180
    %865 = vmatmul.f32.gmra.mxu0 %v713
    %v866 = vpop.f32.mrf.mxu0
    %v867 = vadd.f32 %v732, %v866
    %868 = vmatmul.f32.gmra.mxu0 %v716
    %v869 = vpop.f32.mrf.mxu0
    %v870 = vadd.f32 %v737, %v869
    %871 = vmatmul.f32.gmra.mxu0 %v719
    %v872 = vpop.f32.mrf.mxu0
    %v873 = vadd.f32 %v742, %v872
    %874 = vmatmul.f32.gmra.mxu0 %v722
    %v875 = vpop.f32.mrf.mxu0
    %v876 = vadd.f32 %v747, %v875
    %877 = vdwg.mxu0
    %878 = vmatpush.msra.mxu0 %v636
    %879 = vmatpush.msra.mxu0 %v632
    %880 = vmatpush.msra.mxu0 %v628
    %881 = vmatpush.msra.mxu0 %v624
    %882 = vmatpush.msra.mxu0 %v562
    %883 = vmatpush.msra.mxu0 %v558
    %884 = vmatpush.msra.mxu0 %v554
    %885 = vmatpush.msra.mxu0 %v550
    %886 = vmatpush.msra.mxu0 %v488
    %887 = vmatpush.msra.mxu0 %v484
    %888 = vmatpush.msra.mxu0 %v480
    %889 = vmatpush.msra.mxu0 %v476
    %890 = vmatpush.msra.mxu0 %v108
    %891 = vmatpush.msra.mxu0 %v104
    %892 = vmatpush.msra.mxu0 %v100
    %893 = vmatpush.msra.mxu0 %v96
    %894 = vmatmul.f32.gmra.mxu0 %v714
    %v895 = vpop.f32.mrf.mxu0
    %v896 = vadd.f32 %v867, %v895
    %897 = vmatmul.f32.gmra.mxu0 %v717
    %v898 = vpop.f32.mrf.mxu0
    %v899 = vadd.f32 %v870, %v898
    %900 = vmatmul.f32.gmra.mxu0 %v720
    %v901 = vpop.f32.mrf.mxu0
    %v902 = vadd.f32 %v873, %v901
    %903 = vmatmul.f32.gmra.mxu0 %v723
    %v904 = vpop.f32.mrf.mxu0
    %v905 = vadd.f32 %v876, %v904
    %906 = vdwg.mxu0
    %907 = vmatpush.msra.mxu0 0.0
    %908 = vmatpush.msra.mxu0 0.0
    %909 = vmatpush.msra.mxu0 0.0
    %910 = vmatpush.msra.mxu0 0.0
    %911 = vmatpush.msra.mxu0 0.0
    %912 = vmatpush.msra.mxu0 0.0
    %913 = vmatpush.msra.mxu0 0.0
    %914 = vmatpush.msra.mxu0 0.0
    %915 = vmatpush.msra.mxu0 0.0
    %916 = vmatpush.msra.mxu0 0.0
    %917 = vmatpush.msra.mxu0 0.0
    %918 = vmatpush.msra.mxu0 0.0
    %919 = vmatpush.msra.mxu0 %v710
    %920 = vmatpush.msra.mxu0 %v706
    %921 = vmatpush.msra.mxu0 %v702
    %922 = vmatpush.msra.mxu0 %v698
    %923 = vmatmul.f32.gmra.mxu0 %v751
    %v924 = vpop.f32.mrf.mxu0
    %v925 = vadd.f32 %v896, %v924
    %926 = vmatmul.f32.gmra.mxu0 %v754
    %v927 = vpop.f32.mrf.mxu0
    %v928 = vadd.f32 %v899, %v927
    %929 = vmatmul.f32.gmra.mxu0 %v757
    %v930 = vpop.f32.mrf.mxu0
    %v931 = vadd.f32 %v902, %v930
    %932 = vmatmul.f32.gmra.mxu0 %v760
    %v933 = vpop.f32.mrf.mxu0
    %v934 = vadd.f32 %v905, %v933
    %935 = vdwg.mxu0
    %936 = vmatpush.msra.mxu0 %v415
    %937 = vmatpush.msra.mxu0 %v411
    %938 = vmatpush.msra.mxu0 %v407
    %939 = vmatpush.msra.mxu0 %v403
    %940 = vmatpush.msra.mxu0 %v341
    %941 = vmatpush.msra.mxu0 %v337
    %942 = vmatpush.msra.mxu0 %v333
    %943 = vmatpush.msra.mxu0 %v329
    %944 = vmatpush.msra.mxu0 %v267
    %945 = vmatpush.msra.mxu0 %v263
    %946 = vmatpush.msra.mxu0 %v259
    %947 = vmatpush.msra.mxu0 %v255
    %948 = vmatpush.msra.mxu0 %v193
    %949 = vmatpush.msra.mxu0 %v189
    %950 = vmatpush.msra.mxu0 %v185
    %951 = vmatpush.msra.mxu0 %v181
    %952 = vmatmul.f32.gmra.mxu0 %v713
    %v953 = vpop.f32.mrf.mxu0
    %v954 = vadd.f32 %v732, %v953
    %955 = vmatmul.f32.gmra.mxu0 %v716
    %v956 = vpop.f32.mrf.mxu0
    %v957 = vadd.f32 %v737, %v956
    %958 = vmatmul.f32.gmra.mxu0 %v719
    %v959 = vpop.f32.mrf.mxu0
    %v960 = vadd.f32 %v742, %v959
    %961 = vmatmul.f32.gmra.mxu0 %v722
    %v962 = vpop.f32.mrf.mxu0
    %v963 = vadd.f32 %v747, %v962
    %964 = vdwg.mxu0
    %965 = vmatpush.msra.mxu0 %v637
    %966 = vmatpush.msra.mxu0 %v633
    %967 = vmatpush.msra.mxu0 %v629
    %968 = vmatpush.msra.mxu0 %v625
    %969 = vmatpush.msra.mxu0 %v563
    %970 = vmatpush.msra.mxu0 %v559
    %971 = vmatpush.msra.mxu0 %v555
    %972 = vmatpush.msra.mxu0 %v551
    %973 = vmatpush.msra.mxu0 %v489
    %974 = vmatpush.msra.mxu0 %v485
    %975 = vmatpush.msra.mxu0 %v481
    %976 = vmatpush.msra.mxu0 %v477
    %977 = vmatpush.msra.mxu0 %v109
    %978 = vmatpush.msra.mxu0 %v105
    %979 = vmatpush.msra.mxu0 %v101
    %980 = vmatpush.msra.mxu0 %v97
    %981 = vmatmul.f32.gmra.mxu0 %v714
    %v982 = vpop.f32.mrf.mxu0
    %v983 = vadd.f32 %v954, %v982
    %984 = vmatmul.f32.gmra.mxu0 %v717
    %v985 = vpop.f32.mrf.mxu0
    %v986 = vadd.f32 %v957, %v985
    %987 = vmatmul.f32.gmra.mxu0 %v720
    %v988 = vpop.f32.mrf.mxu0
    %v989 = vadd.f32 %v960, %v988
    %990 = vmatmul.f32.gmra.mxu0 %v723
    %v991 = vpop.f32.mrf.mxu0
    %v992 = vadd.f32 %v963, %v991
    %993 = vdwg.mxu0
    %994 = vmatpush.msra.mxu0 0.0
    %995 = vmatpush.msra.mxu0 0.0
    %996 = vmatpush.msra.mxu0 0.0
    %997 = vmatpush.msra.mxu0 0.0
    %998 = vmatpush.msra.mxu0 0.0
    %999 = vmatpush.msra.mxu0 0.0
    %1000 = vmatpush.msra.mxu0 0.0
    %1001 = vmatpush.msra.mxu0 0.0
    %1002 = vmatpush.msra.mxu0 0.0
    %1003 = vmatpush.msra.mxu0 0.0
    %1004 = vmatpush.msra.mxu0 0.0
    %1005 = vmatpush.msra.mxu0 0.0
    %1006 = vmatpush.msra.mxu0 %v711
    %1007 = vmatpush.msra.mxu0 %v707
    %1008 = vmatpush.msra.mxu0 %v703
    %1009 = vmatpush.msra.mxu0 %v699
    %1010 = vmatmul.f32.gmra.mxu0 %v751
    %v1011 = vpop.f32.mrf.mxu0
    %v1012 = vadd.f32 %v983, %v1011
    %1013 = vmatmul.f32.gmra.mxu0 %v754
    %v1014 = vpop.f32.mrf.mxu0
    %v1015 = vadd.f32 %v986, %v1014
    %1016 = vmatmul.f32.gmra.mxu0 %v757
    %v1017 = vpop.f32.mrf.mxu0
    %v1018 = vadd.f32 %v989, %v1017
    %1019 = vmatmul.f32.gmra.mxu0 %v760
    %v1020 = vpop.f32.mrf.mxu0
    %v1021 = vadd.f32 %v992, %v1020
    %1022 = vdwg.mxu0
    %1023 = vmatpush.msra.mxu0 %v416
    %1024 = vmatpush.msra.mxu0 %v412
    %1025 = vmatpush.msra.mxu0 %v408
    %1026 = vmatpush.msra.mxu0 %v404
    %1027 = vmatpush.msra.mxu0 %v342
    %1028 = vmatpush.msra.mxu0 %v338
    %1029 = vmatpush.msra.mxu0 %v334
    %1030 = vmatpush.msra.mxu0 %v330
    %1031 = vmatpush.msra.mxu0 %v268
    %1032 = vmatpush.msra.mxu0 %v264
    %1033 = vmatpush.msra.mxu0 %v260
    %1034 = vmatpush.msra.mxu0 %v256
    %1035 = vmatpush.msra.mxu0 %v194
    %1036 = vmatpush.msra.mxu0 %v190
    %1037 = vmatpush.msra.mxu0 %v186
    %1038 = vmatpush.msra.mxu0 %v182
    %1039 = vmatmul.f32.gmra.mxu0 %v713
    %v1040 = vpop.f32.mrf.mxu0
    %v1041 = vadd.f32 %v732, %v1040
    %1042 = vmatmul.f32.gmra.mxu0 %v716
    %v1043 = vpop.f32.mrf.mxu0
    %v1044 = vadd.f32 %v737, %v1043
    %1045 = vmatmul.f32.gmra.mxu0 %v719
    %v1046 = vpop.f32.mrf.mxu0
    %v1047 = vadd.f32 %v742, %v1046
    %1048 = vmatmul.f32.gmra.mxu0 %v722
    %v1049 = vpop.f32.mrf.mxu0
    %v1050 = vadd.f32 %v747, %v1049
    %1051 = vdwg.mxu0
    %1052 = vmatpush.msra.mxu0 %v638
    %1053 = vmatpush.msra.mxu0 %v634
    %1054 = vmatpush.msra.mxu0 %v630
    %1055 = vmatpush.msra.mxu0 %v626
    %1056 = vmatpush.msra.mxu0 %v564
    %1057 = vmatpush.msra.mxu0 %v560
    %1058 = vmatpush.msra.mxu0 %v556
    %1059 = vmatpush.msra.mxu0 %v552
    %1060 = vmatpush.msra.mxu0 %v490
    %1061 = vmatpush.msra.mxu0 %v486
    %1062 = vmatpush.msra.mxu0 %v482
    %1063 = vmatpush.msra.mxu0 %v478
    %1064 = vmatpush.msra.mxu0 %v110
    %1065 = vmatpush.msra.mxu0 %v106
    %1066 = vmatpush.msra.mxu0 %v102
    %1067 = vmatpush.msra.mxu0 %v98
    %1068 = vmatmul.f32.gmra.mxu0 %v714
    %v1069 = vpop.f32.mrf.mxu0
    %v1070 = vadd.f32 %v1041, %v1069
    %1071 = vmatmul.f32.gmra.mxu0 %v717
    %v1072 = vpop.f32.mrf.mxu0
    %v1073 = vadd.f32 %v1044, %v1072
    %1074 = vmatmul.f32.gmra.mxu0 %v720
    %v1075 = vpop.f32.mrf.mxu0
    %v1076 = vadd.f32 %v1047, %v1075
    %1077 = vmatmul.f32.gmra.mxu0 %v723
    %v1078 = vpop.f32.mrf.mxu0
    %v1079 = vadd.f32 %v1050, %v1078
    %1080 = vdwg.mxu0
    %1081 = vmatpush.msra.mxu0 0.0
    %1082 = vmatpush.msra.mxu0 0.0
    %1083 = vmatpush.msra.mxu0 0.0
    %1084 = vmatpush.msra.mxu0 0.0
    %1085 = vmatpush.msra.mxu0 0.0
    %1086 = vmatpush.msra.mxu0 0.0
    %1087 = vmatpush.msra.mxu0 0.0
    %1088 = vmatpush.msra.mxu0 0.0
    %1089 = vmatpush.msra.mxu0 0.0
    %1090 = vmatpush.msra.mxu0 0.0
    %1091 = vmatpush.msra.mxu0 0.0
    %1092 = vmatpush.msra.mxu0 0.0
    %1093 = vmatpush.msra.mxu0 %v712
    %1094 = vmatpush.msra.mxu0 %v708
    %1095 = vmatpush.msra.mxu0 %v704
    %1096 = vmatpush.msra.mxu0 %v700
    %1097 = vmatmul.f32.gmra.mxu0 %v751
    %v1098 = vpop.f32.mrf.mxu0
    %v1099 = vadd.f32 %v1070, %v1098
    %1100 = vmatmul.f32.gmra.mxu0 %v754
    %v1101 = vpop.f32.mrf.mxu0
    %v1102 = vadd.f32 %v1073, %v1101
    %1103 = vmatmul.f32.gmra.mxu0 %v757
    %v1104 = vpop.f32.mrf.mxu0
    %v1105 = vadd.f32 %v1076, %v1104
    %1106 = vmatmul.f32.gmra.mxu0 %v760
    %v1107 = vpop.f32.mrf.mxu0
    %v1108 = vadd.f32 %v1079, %v1107
    %1109 = vdwg.mxu0
    %v1110 = vmax.f32 %v838, 0.0
    %v1111 = vmax.f32 %v925, 0.0
    %v1112 = vmax.f32 %v1012, 0.0
    %v1113 = vmax.f32 %v1099, 0.0
    %v1114 = vmax.f32 %v841, 0.0
    %v1115 = vmax.f32 %v928, 0.0
    %v1116 = vmax.f32 %v1015, 0.0
    %v1117 = vmax.f32 %v1102, 0.0
    %v1118 = vmax.f32 %v844, 0.0
    %v1119 = vmax.f32 %v931, 0.0
    %v1120 = vmax.f32 %v1018, 0.0
    %v1121 = vmax.f32 %v1105, 0.0
    %v1122 = vmax.f32 %v847, 0.0
    %v1123 = vmax.f32 %v934, 0.0
    %v1124 = vmax.f32 %v1021, 0.0
    %v1125 = vmax.f32 %v1108, 0.0
    %1126 = vrot.lane.b32.xlu0 %v1110, 17
    %v1127 = vpop.permute.xlu0 %1126
    %1128 = vrot.lane.b32.xlu0 %v1114, 17
    %v1129 = vpop.permute.xlu0 %1128
    %1130 = vrot.lane.b32.xlu0 %v1118, 17
    %v1131 = vpop.permute.xlu0 %1130
    %1132 = vrot.lane.b32.xlu0 %v1122, 17
    %v1133 = vpop.permute.xlu0 %1132
    %1134 = vrot.lane.b32.xlu0 %v1111, 17
    %v1135 = vpop.permute.xlu0 %1134
    %1136 = vrot.lane.b32.xlu0 %v1115, 17
    %v1137 = vpop.permute.xlu0 %1136
    %1138 = vrot.lane.b32.xlu0 %v1119, 17
    %v1139 = vpop.permute.xlu0 %1138
    %1140 = vrot.lane.b32.xlu0 %v1123, 17
    %v1141 = vpop.permute.xlu0 %1140
    %1142 = vrot.lane.b32.xlu0 %v1112, 17
    %v1143 = vpop.permute.xlu0 %1142
    %1144 = vrot.lane.b32.xlu0 %v1116, 17
    %v1145 = vpop.permute.xlu0 %1144
    %1146 = vrot.lane.b32.xlu0 %v1120, 17
    %v1147 = vpop.permute.xlu0 %1146
    %1148 = vrot.lane.b32.xlu0 %v1124, 17
    %v1149 = vpop.permute.xlu0 %1148
    %1150 = vrot.lane.b32.xlu0 %v1113, 17
    %v1151 = vpop.permute.xlu0 %1150
    %1152 = vrot.lane.b32.xlu0 %v1117, 17
    %v1153 = vpop.permute.xlu0 %1152
    %1154 = vrot.lane.b32.xlu0 %v1121, 17
    %v1155 = vpop.permute.xlu0 %1154
    %1156 = vrot.lane.b32.xlu0 %v1125, 17
    %v1157 = vpop.permute.xlu0 %1156
    %v1158 = vsel %vm153, %v1143, %v1151
    %v1159 = vsel %vm153, %v1145, %v1153
    %v1160 = vsel %vm153, %v1147, %v1155
    %v1161 = vsel %vm153, %v1149, %v1157
    %v1162 = vsel %vm153, %v1135, %v1143
    %v1163 = vsel %vm153, %v1137, %v1145
    %v1164 = vsel %vm153, %v1139, %v1147
    %v1165 = vsel %vm153, %v1141, %v1149
    %v1166 = vsel %vm153, %v1127, %v1135
    %v1167 = vsel %vm153, %v1129, %v1137
    %v1168 = vsel %vm153, %v1131, %v1139
    %v1169 = vsel %vm153, %v1133, %v1141
    %v1170 = vsel %vm153, %v1151, %v1127
    %v1171 = vsel %vm153, %v1153, %v1129
    %v1172 = vsel %vm153, %v1155, %v1131
    %v1173 = vsel %vm153, %v1157, %v1133
    %v1174 = vmul.f32 %v1170, %v171
    %v1175 = vmul.f32 %v1166, %v172
    %v1176 = vmul.f32 %v1162, %v173
    %v1177 = vmul.f32 %v1158, %v174
    %v1178 = vmul.f32 %v1171, %v171
    %v1179 = vmul.f32 %v1167, %v172
    %v1180 = vmul.f32 %v1163, %v173
    %v1181 = vmul.f32 %v1159, %v174
    %v1182 = vmul.f32 %v1172, %v171
    %v1183 = vmul.f32 %v1168, %v172
    %v1184 = vmul.f32 %v1164, %v173
    %v1185 = vmul.f32 %v1160, %v174
    %v1186 = vmul.f32 %v1173, %v171
    %v1187 = vmul.f32 %v1169, %v172
    %v1188 = vmul.f32 %v1165, %v173
    %v1189 = vmul.f32 %v1161, %v174
    %1190 = vrot.lane.b32.xlu0 %v1110, 16
    %v1191 = vpop.permute.xlu0 %1190
    %1192 = vrot.lane.b32.xlu0 %v1114, 16
    %v1193 = vpop.permute.xlu0 %1192
    %1194 = vrot.lane.b32.xlu0 %v1118, 16
    %v1195 = vpop.permute.xlu0 %1194
    %1196 = vrot.lane.b32.xlu0 %v1122, 16
    %v1197 = vpop.permute.xlu0 %1196
    %1198 = vrot.lane.b32.xlu0 %v1111, 16
    %v1199 = vpop.permute.xlu0 %1198
    %1200 = vrot.lane.b32.xlu0 %v1115, 16
    %v1201 = vpop.permute.xlu0 %1200
    %1202 = vrot.lane.b32.xlu0 %v1119, 16
    %v1203 = vpop.permute.xlu0 %1202
    %1204 = vrot.lane.b32.xlu0 %v1123, 16
    %v1205 = vpop.permute.xlu0 %1204
    %1206 = vrot.lane.b32.xlu0 %v1112, 16
    %v1207 = vpop.permute.xlu0 %1206
    %1208 = vrot.lane.b32.xlu0 %v1116, 16
    %v1209 = vpop.permute.xlu0 %1208
    %1210 = vrot.lane.b32.xlu0 %v1120, 16
    %v1211 = vpop.permute.xlu0 %1210
    %1212 = vrot.lane.b32.xlu0 %v1124, 16
    %v1213 = vpop.permute.xlu0 %1212
    %1214 = vrot.lane.b32.xlu0 %v1113, 16
    %v1215 = vpop.permute.xlu0 %1214
    %1216 = vrot.lane.b32.xlu0 %v1117, 16
    %v1217 = vpop.permute.xlu0 %1216
    %1218 = vrot.lane.b32.xlu0 %v1121, 16
    %v1219 = vpop.permute.xlu0 %1218
    %1220 = vrot.lane.b32.xlu0 %v1125, 16
    %v1221 = vpop.permute.xlu0 %1220
    %v1222 = vsel %vm227, %v1207, %v1215
    %v1223 = vsel %vm227, %v1209, %v1217
    %v1224 = vsel %vm227, %v1211, %v1219
    %v1225 = vsel %vm227, %v1213, %v1221
    %v1226 = vsel %vm227, %v1199, %v1207
    %v1227 = vsel %vm227, %v1201, %v1209
    %v1228 = vsel %vm227, %v1203, %v1211
    %v1229 = vsel %vm227, %v1205, %v1213
    %v1230 = vsel %vm227, %v1191, %v1199
    %v1231 = vsel %vm227, %v1193, %v1201
    %v1232 = vsel %vm227, %v1195, %v1203
    %v1233 = vsel %vm227, %v1197, %v1205
    %v1234 = vsel %vm227, %v1215, %v1191
    %v1235 = vsel %vm227, %v1217, %v1193
    %v1236 = vsel %vm227, %v1219, %v1195
    %v1237 = vsel %vm227, %v1221, %v1197
    %v1238 = vmul.f32 %v1234, %v245
    %v1239 = vmul.f32 %v1230, %v246
    %v1240 = vmul.f32 %v1226, %v247
    %v1241 = vmul.f32 %v1222, %v248
    %v1242 = vmul.f32 %v1235, %v245
    %v1243 = vmul.f32 %v1231, %v246
    %v1244 = vmul.f32 %v1227, %v247
    %v1245 = vmul.f32 %v1223, %v248
    %v1246 = vmul.f32 %v1236, %v245
    %v1247 = vmul.f32 %v1232, %v246
    %v1248 = vmul.f32 %v1228, %v247
    %v1249 = vmul.f32 %v1224, %v248
    %v1250 = vmul.f32 %v1237, %v245
    %v1251 = vmul.f32 %v1233, %v246
    %v1252 = vmul.f32 %v1229, %v247
    %v1253 = vmul.f32 %v1225, %v248
    %1254 = vrot.lane.b32.xlu0 %v1110, 15
    %v1255 = vpop.permute.xlu0 %1254
    %1256 = vrot.lane.b32.xlu0 %v1114, 15
    %v1257 = vpop.permute.xlu0 %1256
    %1258 = vrot.lane.b32.xlu0 %v1118, 15
    %v1259 = vpop.permute.xlu0 %1258
    %1260 = vrot.lane.b32.xlu0 %v1122, 15
    %v1261 = vpop.permute.xlu0 %1260
    %1262 = vrot.lane.b32.xlu0 %v1111, 15
    %v1263 = vpop.permute.xlu0 %1262
    %1264 = vrot.lane.b32.xlu0 %v1115, 15
    %v1265 = vpop.permute.xlu0 %1264
    %1266 = vrot.lane.b32.xlu0 %v1119, 15
    %v1267 = vpop.permute.xlu0 %1266
    %1268 = vrot.lane.b32.xlu0 %v1123, 15
    %v1269 = vpop.permute.xlu0 %1268
    %1270 = vrot.lane.b32.xlu0 %v1112, 15
    %v1271 = vpop.permute.xlu0 %1270
    %1272 = vrot.lane.b32.xlu0 %v1116, 15
    %v1273 = vpop.permute.xlu0 %1272
    %1274 = vrot.lane.b32.xlu0 %v1120, 15
    %v1275 = vpop.permute.xlu0 %1274
    %1276 = vrot.lane.b32.xlu0 %v1124, 15
    %v1277 = vpop.permute.xlu0 %1276
    %1278 = vrot.lane.b32.xlu0 %v1113, 15
    %v1279 = vpop.permute.xlu0 %1278
    %1280 = vrot.lane.b32.xlu0 %v1117, 15
    %v1281 = vpop.permute.xlu0 %1280
    %1282 = vrot.lane.b32.xlu0 %v1121, 15
    %v1283 = vpop.permute.xlu0 %1282
    %1284 = vrot.lane.b32.xlu0 %v1125, 15
    %v1285 = vpop.permute.xlu0 %1284
    %v1286 = vsel %vm301, %v1271, %v1279
    %v1287 = vsel %vm301, %v1273, %v1281
    %v1288 = vsel %vm301, %v1275, %v1283
    %v1289 = vsel %vm301, %v1277, %v1285
    %v1290 = vsel %vm301, %v1263, %v1271
    %v1291 = vsel %vm301, %v1265, %v1273
    %v1292 = vsel %vm301, %v1267, %v1275
    %v1293 = vsel %vm301, %v1269, %v1277
    %v1294 = vsel %vm301, %v1255, %v1263
    %v1295 = vsel %vm301, %v1257, %v1265
    %v1296 = vsel %vm301, %v1259, %v1267
    %v1297 = vsel %vm301, %v1261, %v1269
    %v1298 = vsel %vm301, %v1279, %v1255
    %v1299 = vsel %vm301, %v1281, %v1257
    %v1300 = vsel %vm301, %v1283, %v1259
    %v1301 = vsel %vm301, %v1285, %v1261
    %v1302 = vmul.f32 %v1298, %v319
    %v1303 = vmul.f32 %v1294, %v320
    %v1304 = vmul.f32 %v1290, %v321
    %v1305 = vmul.f32 %v1286, %v322
    %v1306 = vmul.f32 %v1299, %v319
    %v1307 = vmul.f32 %v1295, %v320
    %v1308 = vmul.f32 %v1291, %v321
    %v1309 = vmul.f32 %v1287, %v322
    %v1310 = vmul.f32 %v1300, %v319
    %v1311 = vmul.f32 %v1296, %v320
    %v1312 = vmul.f32 %v1292, %v321
    %v1313 = vmul.f32 %v1288, %v322
    %v1314 = vmul.f32 %v1301, %v319
    %v1315 = vmul.f32 %v1297, %v320
    %v1316 = vmul.f32 %v1293, %v321
    %v1317 = vmul.f32 %v1289, %v322
    %1318 = vrot.lane.b32.xlu0 %v1110, 1
    %v1319 = vpop.permute.xlu0 %1318
    %1320 = vrot.lane.b32.xlu0 %v1114, 1
    %v1321 = vpop.permute.xlu0 %1320
    %1322 = vrot.lane.b32.xlu0 %v1118, 1
    %v1323 = vpop.permute.xlu0 %1322
    %1324 = vrot.lane.b32.xlu0 %v1122, 1
    %v1325 = vpop.permute.xlu0 %1324
    %1326 = vrot.lane.b32.xlu0 %v1111, 1
    %v1327 = vpop.permute.xlu0 %1326
    %1328 = vrot.lane.b32.xlu0 %v1115, 1
    %v1329 = vpop.permute.xlu0 %1328
    %1330 = vrot.lane.b32.xlu0 %v1119, 1
    %v1331 = vpop.permute.xlu0 %1330
    %1332 = vrot.lane.b32.xlu0 %v1123, 1
    %v1333 = vpop.permute.xlu0 %1332
    %1334 = vrot.lane.b32.xlu0 %v1112, 1
    %v1335 = vpop.permute.xlu0 %1334
    %1336 = vrot.lane.b32.xlu0 %v1116, 1
    %v1337 = vpop.permute.xlu0 %1336
    %1338 = vrot.lane.b32.xlu0 %v1120, 1
    %v1339 = vpop.permute.xlu0 %1338
    %1340 = vrot.lane.b32.xlu0 %v1124, 1
    %v1341 = vpop.permute.xlu0 %1340
    %1342 = vrot.lane.b32.xlu0 %v1113, 1
    %v1343 = vpop.permute.xlu0 %1342
    %1344 = vrot.lane.b32.xlu0 %v1117, 1
    %v1345 = vpop.permute.xlu0 %1344
    %1346 = vrot.lane.b32.xlu0 %v1121, 1
    %v1347 = vpop.permute.xlu0 %1346
    %1348 = vrot.lane.b32.xlu0 %v1125, 1
    %v1349 = vpop.permute.xlu0 %1348
    %v1350 = vsel %vm375, %v1335, %v1343
    %v1351 = vsel %vm375, %v1337, %v1345
    %v1352 = vsel %vm375, %v1339, %v1347
    %v1353 = vsel %vm375, %v1341, %v1349
    %v1354 = vsel %vm375, %v1327, %v1335
    %v1355 = vsel %vm375, %v1329, %v1337
    %v1356 = vsel %vm375, %v1331, %v1339
    %v1357 = vsel %vm375, %v1333, %v1341
    %v1358 = vsel %vm375, %v1319, %v1327
    %v1359 = vsel %vm375, %v1321, %v1329
    %v1360 = vsel %vm375, %v1323, %v1331
    %v1361 = vsel %vm375, %v1325, %v1333
    %v1362 = vsel %vm375, %v1343, %v1319
    %v1363 = vsel %vm375, %v1345, %v1321
    %v1364 = vsel %vm375, %v1347, %v1323
    %v1365 = vsel %vm375, %v1349, %v1325
    %v1366 = vmul.f32 %v1362, %v393
    %v1367 = vmul.f32 %v1358, %v394
    %v1368 = vmul.f32 %v1354, %v395
    %v1369 = vmul.f32 %v1350, %v396
    %v1370 = vmul.f32 %v1363, %v393
    %v1371 = vmul.f32 %v1359, %v394
    %v1372 = vmul.f32 %v1355, %v395
    %v1373 = vmul.f32 %v1351, %v396
    %v1374 = vmul.f32 %v1364, %v393
    %v1375 = vmul.f32 %v1360, %v394
    %v1376 = vmul.f32 %v1356, %v395
    %v1377 = vmul.f32 %v1352, %v396
    %v1378 = vmul.f32 %v1365, %v393
    %v1379 = vmul.f32 %v1361, %v394
    %v1380 = vmul.f32 %v1357, %v395
    %v1381 = vmul.f32 %v1353, %v396
    %1382 = vrot.lane.b32.xlu0 %v1110, 127
    %v1383 = vpop.permute.xlu0 %1382
    %1384 = vrot.lane.b32.xlu0 %v1114, 127
    %v1385 = vpop.permute.xlu0 %1384
    %1386 = vrot.lane.b32.xlu0 %v1118, 127
    %v1387 = vpop.permute.xlu0 %1386
    %1388 = vrot.lane.b32.xlu0 %v1122, 127
    %v1389 = vpop.permute.xlu0 %1388
    %1390 = vrot.lane.b32.xlu0 %v1111, 127
    %v1391 = vpop.permute.xlu0 %1390
    %1392 = vrot.lane.b32.xlu0 %v1115, 127
    %v1393 = vpop.permute.xlu0 %1392
    %1394 = vrot.lane.b32.xlu0 %v1119, 127
    %v1395 = vpop.permute.xlu0 %1394
    %1396 = vrot.lane.b32.xlu0 %v1123, 127
    %v1397 = vpop.permute.xlu0 %1396
    %1398 = vrot.lane.b32.xlu0 %v1112, 127
    %v1399 = vpop.permute.xlu0 %1398
    %1400 = vrot.lane.b32.xlu0 %v1116, 127
    %v1401 = vpop.permute.xlu0 %1400
    %1402 = vrot.lane.b32.xlu0 %v1120, 127
    %v1403 = vpop.permute.xlu0 %1402
    %1404 = vrot.lane.b32.xlu0 %v1124, 127
    %v1405 = vpop.permute.xlu0 %1404
    %1406 = vrot.lane.b32.xlu0 %v1113, 127
    %v1407 = vpop.permute.xlu0 %1406
    %1408 = vrot.lane.b32.xlu0 %v1117, 127
    %v1409 = vpop.permute.xlu0 %1408
    %1410 = vrot.lane.b32.xlu0 %v1121, 127
    %v1411 = vpop.permute.xlu0 %1410
    %1412 = vrot.lane.b32.xlu0 %v1125, 127
    %v1413 = vpop.permute.xlu0 %1412
    %v1414 = vsel %vm449, %v1399, %v1407
    %v1415 = vsel %vm449, %v1401, %v1409
    %v1416 = vsel %vm449, %v1403, %v1411
    %v1417 = vsel %vm449, %v1405, %v1413
    %v1418 = vsel %vm449, %v1391, %v1399
    %v1419 = vsel %vm449, %v1393, %v1401
    %v1420 = vsel %vm449, %v1395, %v1403
    %v1421 = vsel %vm449, %v1397, %v1405
    %v1422 = vsel %vm449, %v1383, %v1391
    %v1423 = vsel %vm449, %v1385, %v1393
    %v1424 = vsel %vm449, %v1387, %v1395
    %v1425 = vsel %vm449, %v1389, %v1397
    %v1426 = vsel %vm449, %v1407, %v1383
    %v1427 = vsel %vm449, %v1409, %v1385
    %v1428 = vsel %vm449, %v1411, %v1387
    %v1429 = vsel %vm449, %v1413, %v1389
    %v1430 = vmul.f32 %v1422, %v467
    %v1431 = vmul.f32 %v1418, %v468
    %v1432 = vmul.f32 %v1414, %v469
    %v1433 = vmul.f32 %v1426, %v470
    %v1434 = vmul.f32 %v1423, %v467
    %v1435 = vmul.f32 %v1419, %v468
    %v1436 = vmul.f32 %v1415, %v469
    %v1437 = vmul.f32 %v1427, %v470
    %v1438 = vmul.f32 %v1424, %v467
    %v1439 = vmul.f32 %v1420, %v468
    %v1440 = vmul.f32 %v1416, %v469
    %v1441 = vmul.f32 %v1428, %v470
    %v1442 = vmul.f32 %v1425, %v467
    %v1443 = vmul.f32 %v1421, %v468
    %v1444 = vmul.f32 %v1417, %v469
    %v1445 = vmul.f32 %v1429, %v470
    %1446 = vrot.lane.b32.xlu0 %v1110, 113
    %v1447 = vpop.permute.xlu0 %1446
    %1448 = vrot.lane.b32.xlu0 %v1114, 113
    %v1449 = vpop.permute.xlu0 %1448
    %1450 = vrot.lane.b32.xlu0 %v1118, 113
    %v1451 = vpop.permute.xlu0 %1450
    %1452 = vrot.lane.b32.xlu0 %v1122, 113
    %v1453 = vpop.permute.xlu0 %1452
    %1454 = vrot.lane.b32.xlu0 %v1111, 113
    %v1455 = vpop.permute.xlu0 %1454
    %1456 = vrot.lane.b32.xlu0 %v1115, 113
    %v1457 = vpop.permute.xlu0 %1456
    %1458 = vrot.lane.b32.xlu0 %v1119, 113
    %v1459 = vpop.permute.xlu0 %1458
    %1460 = vrot.lane.b32.xlu0 %v1123, 113
    %v1461 = vpop.permute.xlu0 %1460
    %1462 = vrot.lane.b32.xlu0 %v1112, 113
    %v1463 = vpop.permute.xlu0 %1462
    %1464 = vrot.lane.b32.xlu0 %v1116, 113
    %v1465 = vpop.permute.xlu0 %1464
    %1466 = vrot.lane.b32.xlu0 %v1120, 113
    %v1467 = vpop.permute.xlu0 %1466
    %1468 = vrot.lane.b32.xlu0 %v1124, 113
    %v1469 = vpop.permute.xlu0 %1468
    %1470 = vrot.lane.b32.xlu0 %v1113, 113
    %v1471 = vpop.permute.xlu0 %1470
    %1472 = vrot.lane.b32.xlu0 %v1117, 113
    %v1473 = vpop.permute.xlu0 %1472
    %1474 = vrot.lane.b32.xlu0 %v1121, 113
    %v1475 = vpop.permute.xlu0 %1474
    %1476 = vrot.lane.b32.xlu0 %v1125, 113
    %v1477 = vpop.permute.xlu0 %1476
    %v1478 = vsel %vm523, %v1463, %v1471
    %v1479 = vsel %vm523, %v1465, %v1473
    %v1480 = vsel %vm523, %v1467, %v1475
    %v1481 = vsel %vm523, %v1469, %v1477
    %v1482 = vsel %vm523, %v1455, %v1463
    %v1483 = vsel %vm523, %v1457, %v1465
    %v1484 = vsel %vm523, %v1459, %v1467
    %v1485 = vsel %vm523, %v1461, %v1469
    %v1486 = vsel %vm523, %v1447, %v1455
    %v1487 = vsel %vm523, %v1449, %v1457
    %v1488 = vsel %vm523, %v1451, %v1459
    %v1489 = vsel %vm523, %v1453, %v1461
    %v1490 = vsel %vm523, %v1471, %v1447
    %v1491 = vsel %vm523, %v1473, %v1449
    %v1492 = vsel %vm523, %v1475, %v1451
    %v1493 = vsel %vm523, %v1477, %v1453
    %v1494 = vmul.f32 %v1486, %v541
    %v1495 = vmul.f32 %v1482, %v542
    %v1496 = vmul.f32 %v1478, %v543
    %v1497 = vmul.f32 %v1490, %v544
    %v1498 = vmul.f32 %v1487, %v541
    %v1499 = vmul.f32 %v1483, %v542
    %v1500 = vmul.f32 %v1479, %v543
    %v1501 = vmul.f32 %v1491, %v544
    %v1502 = vmul.f32 %v1488, %v541
    %v1503 = vmul.f32 %v1484, %v542
    %v1504 = vmul.f32 %v1480, %v543
    %v1505 = vmul.f32 %v1492, %v544
    %v1506 = vmul.f32 %v1489, %v541
    %v1507 = vmul.f32 %v1485, %v542
    %v1508 = vmul.f32 %v1481, %v543
    %v1509 = vmul.f32 %v1493, %v544
    %1510 = vrot.lane.b32.xlu0 %v1110, 112
    %v1511 = vpop.permute.xlu0 %1510
    %1512 = vrot.lane.b32.xlu0 %v1114, 112
    %v1513 = vpop.permute.xlu0 %1512
    %1514 = vrot.lane.b32.xlu0 %v1118, 112
    %v1515 = vpop.permute.xlu0 %1514
    %1516 = vrot.lane.b32.xlu0 %v1122, 112
    %v1517 = vpop.permute.xlu0 %1516
    %1518 = vrot.lane.b32.xlu0 %v1111, 112
    %v1519 = vpop.permute.xlu0 %1518
    %1520 = vrot.lane.b32.xlu0 %v1115, 112
    %v1521 = vpop.permute.xlu0 %1520
    %1522 = vrot.lane.b32.xlu0 %v1119, 112
    %v1523 = vpop.permute.xlu0 %1522
    %1524 = vrot.lane.b32.xlu0 %v1123, 112
    %v1525 = vpop.permute.xlu0 %1524
    %1526 = vrot.lane.b32.xlu0 %v1112, 112
    %v1527 = vpop.permute.xlu0 %1526
    %1528 = vrot.lane.b32.xlu0 %v1116, 112
    %v1529 = vpop.permute.xlu0 %1528
    %1530 = vrot.lane.b32.xlu0 %v1120, 112
    %v1531 = vpop.permute.xlu0 %1530
    %1532 = vrot.lane.b32.xlu0 %v1124, 112
    %v1533 = vpop.permute.xlu0 %1532
    %1534 = vrot.lane.b32.xlu0 %v1113, 112
    %v1535 = vpop.permute.xlu0 %1534
    %1536 = vrot.lane.b32.xlu0 %v1117, 112
    %v1537 = vpop.permute.xlu0 %1536
    %1538 = vrot.lane.b32.xlu0 %v1121, 112
    %v1539 = vpop.permute.xlu0 %1538
    %1540 = vrot.lane.b32.xlu0 %v1125, 112
    %v1541 = vpop.permute.xlu0 %1540
    %v1542 = vsel %vm597, %v1527, %v1535
    %v1543 = vsel %vm597, %v1529, %v1537
    %v1544 = vsel %vm597, %v1531, %v1539
    %v1545 = vsel %vm597, %v1533, %v1541
    %v1546 = vsel %vm597, %v1519, %v1527
    %v1547 = vsel %vm597, %v1521, %v1529
    %v1548 = vsel %vm597, %v1523, %v1531
    %v1549 = vsel %vm597, %v1525, %v1533
    %v1550 = vsel %vm597, %v1511, %v1519
    %v1551 = vsel %vm597, %v1513, %v1521
    %v1552 = vsel %vm597, %v1515, %v1523
    %v1553 = vsel %vm597, %v1517, %v1525
    %v1554 = vsel %vm597, %v1535, %v1511
    %v1555 = vsel %vm597, %v1537, %v1513
    %v1556 = vsel %vm597, %v1539, %v1515
    %v1557 = vsel %vm597, %v1541, %v1517
    %v1558 = vmul.f32 %v1550, %v615
    %v1559 = vmul.f32 %v1546, %v616
    %v1560 = vmul.f32 %v1542, %v617
    %v1561 = vmul.f32 %v1554, %v618
    %v1562 = vmul.f32 %v1551, %v615
    %v1563 = vmul.f32 %v1547, %v616
    %v1564 = vmul.f32 %v1543, %v617
    %v1565 = vmul.f32 %v1555, %v618
    %v1566 = vmul.f32 %v1552, %v615
    %v1567 = vmul.f32 %v1548, %v616
    %v1568 = vmul.f32 %v1544, %v617
    %v1569 = vmul.f32 %v1556, %v618
    %v1570 = vmul.f32 %v1553, %v615
    %v1571 = vmul.f32 %v1549, %v616
    %v1572 = vmul.f32 %v1545, %v617
    %v1573 = vmul.f32 %v1557, %v618
    %1574 = vrot.lane.b32.xlu0 %v1110, 111
    %v1575 = vpop.permute.xlu0 %1574
    %1576 = vrot.lane.b32.xlu0 %v1114, 111
    %v1577 = vpop.permute.xlu0 %1576
    %1578 = vrot.lane.b32.xlu0 %v1118, 111
    %v1579 = vpop.permute.xlu0 %1578
    %1580 = vrot.lane.b32.xlu0 %v1122, 111
    %v1581 = vpop.permute.xlu0 %1580
    %1582 = vrot.lane.b32.xlu0 %v1111, 111
    %v1583 = vpop.permute.xlu0 %1582
    %1584 = vrot.lane.b32.xlu0 %v1115, 111
    %v1585 = vpop.permute.xlu0 %1584
    %1586 = vrot.lane.b32.xlu0 %v1119, 111
    %v1587 = vpop.permute.xlu0 %1586
    %1588 = vrot.lane.b32.xlu0 %v1123, 111
    %v1589 = vpop.permute.xlu0 %1588
    %1590 = vrot.lane.b32.xlu0 %v1112, 111
    %v1591 = vpop.permute.xlu0 %1590
    %1592 = vrot.lane.b32.xlu0 %v1116, 111
    %v1593 = vpop.permute.xlu0 %1592
    %1594 = vrot.lane.b32.xlu0 %v1120, 111
    %v1595 = vpop.permute.xlu0 %1594
    %1596 = vrot.lane.b32.xlu0 %v1124, 111
    %v1597 = vpop.permute.xlu0 %1596
    %1598 = vrot.lane.b32.xlu0 %v1113, 111
    %v1599 = vpop.permute.xlu0 %1598
    %1600 = vrot.lane.b32.xlu0 %v1117, 111
    %v1601 = vpop.permute.xlu0 %1600
    %1602 = vrot.lane.b32.xlu0 %v1121, 111
    %v1603 = vpop.permute.xlu0 %1602
    %1604 = vrot.lane.b32.xlu0 %v1125, 111
    %v1605 = vpop.permute.xlu0 %1604
    %v1606 = vsel %vm671, %v1591, %v1599
    %v1607 = vsel %vm671, %v1593, %v1601
    %v1608 = vsel %vm671, %v1595, %v1603
    %v1609 = vsel %vm671, %v1597, %v1605
    %v1610 = vsel %vm671, %v1583, %v1591
    %v1611 = vsel %vm671, %v1585, %v1593
    %v1612 = vsel %vm671, %v1587, %v1595
    %v1613 = vsel %vm671, %v1589, %v1597
    %v1614 = vsel %vm671, %v1575, %v1583
    %v1615 = vsel %vm671, %v1577, %v1585
    %v1616 = vsel %vm671, %v1579, %v1587
    %v1617 = vsel %vm671, %v1581, %v1589
    %v1618 = vsel %vm671, %v1599, %v1575
    %v1619 = vsel %vm671, %v1601, %v1577
    %v1620 = vsel %vm671, %v1603, %v1579
    %v1621 = vsel %vm671, %v1605, %v1581
    %v1622 = vmul.f32 %v1614, %v689
    %v1623 = vmul.f32 %v1610, %v690
    %v1624 = vmul.f32 %v1606, %v691
    %v1625 = vmul.f32 %v1618, %v692
    %v1626 = vmul.f32 %v1615, %v689
    %v1627 = vmul.f32 %v1611, %v690
    %v1628 = vmul.f32 %v1607, %v691
    %v1629 = vmul.f32 %v1619, %v692
    %v1630 = vmul.f32 %v1616, %v689
    %v1631 = vmul.f32 %v1612, %v690
    %v1632 = vmul.f32 %v1608, %v691
    %v1633 = vmul.f32 %v1620, %v692
    %v1634 = vmul.f32 %v1617, %v689
    %v1635 = vmul.f32 %v1613, %v690
    %v1636 = vmul.f32 %v1609, %v691
    %v1637 = vmul.f32 %v1621, %v692
    %v1638 = vld [vmem:[#allocation7] sm:$0xff]
    %v1639 = vld [vmem:[#allocation7 + $0x8] sm:$0xff]
    %v1640 = vld [vmem:[#allocation7 + $0x10] sm:$0xff]
    %v1641 = vld [vmem:[#allocation7 + $0x18] sm:$0xff]
    %v1642 = vld [vmem:[#allocation7 + $0x20] sm:$0xff]
    %v1643 = vld [vmem:[#allocation7 + $0x28] sm:$0xff]
    %v1644 = vld [vmem:[#allocation7 + $0x30] sm:$0xff]
    %v1645 = vld [vmem:[#allocation7 + $0x38] sm:$0xff]
    %v1646 = vld [vmem:[#allocation7 + $0x40] sm:$0xff]
    %v1647 = vld [vmem:[#allocation7 + $0x48] sm:$0xff]
    %v1648 = vld [vmem:[#allocation7 + $0x50] sm:$0xff]
    %v1649 = vld [vmem:[#allocation7 + $0x58] sm:$0xff]
    %v1650 = vld [vmem:[%s5] sm:$0xff]
    %v1651 = vld [vmem:[%s5 + $0x8] sm:$0xff]
    %v1652 = vld [vmem:[%s5 + $0x10] sm:$0xff]
    %v1653 = vld [vmem:[%s5 + $0x18] sm:$0xff]
    %1655 = vset.pattern.permute.xlu0 0
    %1656 = vperm.xlu0 %1655, %v1650
    %v1657 = vpop.permute.xlu0 %1656
    %1660 = vset.pattern.permute.xlu0 0
    %1661 = vperm.xlu0 %1660, %v1651
    %v1662 = vpop.permute.xlu0 %1661
    %1665 = vset.pattern.permute.xlu0 0
    %1666 = vperm.xlu0 %1665, %v1652
    %v1667 = vpop.permute.xlu0 %1666
    %1670 = vset.pattern.permute.xlu0 0
    %1671 = vperm.xlu0 %1670, %v1653
    %v1672 = vpop.permute.xlu0 %1671
    %v1675 = vsel %vm749, %v1640, 0
    %v1678 = vsel %vm749, %v1643, 0
    %v1681 = vsel %vm749, %v1646, 0
    %v1684 = vsel %vm749, %v1649, 0
    %1686 = vmatpush.msra.mxu0 %v1378
    %1687 = vmatpush.msra.mxu0 %v1374
    %1688 = vmatpush.msra.mxu0 %v1370
    %1689 = vmatpush.msra.mxu0 %v1366
    %1690 = vmatpush.msra.mxu0 %v1314
    %1691 = vmatpush.msra.mxu0 %v1310
    %1692 = vmatpush.msra.mxu0 %v1306
    %1693 = vmatpush.msra.mxu0 %v1302
    %1694 = vmatpush.msra.mxu0 %v1250
    %1695 = vmatpush.msra.mxu0 %v1246
    %1696 = vmatpush.msra.mxu0 %v1242
    %1697 = vmatpush.msra.mxu0 %v1238
    %1698 = vmatpush.msra.mxu0 %v1186
    %1699 = vmatpush.msra.mxu0 %v1182
    %1700 = vmatpush.msra.mxu0 %v1178
    %1701 = vmatpush.msra.mxu0 %v1174
    %1702 = vmatmul.f32.gmra.mxu0 %v1638
    %v1703 = vpop.f32.mrf.mxu0
    %v1704 = vadd.f32 %v1657, %v1703
    %1705 = vmatmul.f32.gmra.mxu0 %v1641
    %v1706 = vpop.f32.mrf.mxu0
    %v1707 = vadd.f32 %v1662, %v1706
    %1708 = vmatmul.f32.gmra.mxu0 %v1644
    %v1709 = vpop.f32.mrf.mxu0
    %v1710 = vadd.f32 %v1667, %v1709
    %1711 = vmatmul.f32.gmra.mxu0 %v1647
    %v1712 = vpop.f32.mrf.mxu0
    %v1713 = vadd.f32 %v1672, %v1712
    %1714 = vdwg.mxu0
    %1715 = vmatpush.msra.mxu0 %v1570
    %1716 = vmatpush.msra.mxu0 %v1566
    %1717 = vmatpush.msra.mxu0 %v1562
    %1718 = vmatpush.msra.mxu0 %v1558
    %1719 = vmatpush.msra.mxu0 %v1506
    %1720 = vmatpush.msra.mxu0 %v1502
    %1721 = vmatpush.msra.mxu0 %v1498
    %1722 = vmatpush.msra.mxu0 %v1494
    %1723 = vmatpush.msra.mxu0 %v1442
    %1724 = vmatpush.msra.mxu0 %v1438
    %1725 = vmatpush.msra.mxu0 %v1434
    %1726 = vmatpush.msra.mxu0 %v1430
    %1727 = vmatpush.msra.mxu0 %v1122
    %1728 = vmatpush.msra.mxu0 %v1118
    %1729 = vmatpush.msra.mxu0 %v1114
    %1730 = vmatpush.msra.mxu0 %v1110
    %1731 = vmatmul.f32.gmra.mxu0 %v1639
    %v1732 = vpop.f32.mrf.mxu0
    %v1733 = vadd.f32 %v1704, %v1732
    %1734 = vmatmul.f32.gmra.mxu0 %v1642
    %v1735 = vpop.f32.mrf.mxu0
    %v1736 = vadd.f32 %v1707, %v1735
    %1737 = vmatmul.f32.gmra.mxu0 %v1645
    %v1738 = vpop.f32.mrf.mxu0
    %v1739 = vadd.f32 %v1710, %v1738
    %1740 = vmatmul.f32.gmra.mxu0 %v1648
    %v1741 = vpop.f32.mrf.mxu0
    %v1742 = vadd.f32 %v1713, %v1741
    %1743 = vdwg.mxu0
    %1744 = vmatpush.msra.mxu0 0.0
    %1745 = vmatpush.msra.mxu0 0.0
    %1746 = vmatpush.msra.mxu0 0.0
    %1747 = vmatpush.msra.mxu0 0.0
    %1748 = vmatpush.msra.mxu0 0.0
    %1749 = vmatpush.msra.mxu0 0.0
    %1750 = vmatpush.msra.mxu0 0.0
    %1751 = vmatpush.msra.mxu0 0.0
    %1752 = vmatpush.msra.mxu0 0.0
    %1753 = vmatpush.msra.mxu0 0.0
    %1754 = vmatpush.msra.mxu0 0.0
    %1755 = vmatpush.msra.mxu0 0.0
    %1756 = vmatpush.msra.mxu0 %v1634
    %1757 = vmatpush.msra.mxu0 %v1630
    %1758 = vmatpush.msra.mxu0 %v1626
    %1759 = vmatpush.msra.mxu0 %v1622
    %1760 = vmatmul.f32.gmra.mxu0 %v1675
    %v1761 = vpop.f32.mrf.mxu0
    %v1762 = vadd.f32 %v1733, %v1761
    %1763 = vmatmul.f32.gmra.mxu0 %v1678
    %v1764 = vpop.f32.mrf.mxu0
    %v1765 = vadd.f32 %v1736, %v1764
    %1766 = vmatmul.f32.gmra.mxu0 %v1681
    %v1767 = vpop.f32.mrf.mxu0
    %v1768 = vadd.f32 %v1739, %v1767
    %1769 = vmatmul.f32.gmra.mxu0 %v1684
    %v1770 = vpop.f32.mrf.mxu0
    %v1771 = vadd.f32 %v1742, %v1770
    %1772 = vdwg.mxu0
    %1773 = vmatpush.msra.mxu0 %v1379
    %1774 = vmatpush.msra.mxu0 %v1375
    %1775 = vmatpush.msra.mxu0 %v1371
    %1776 = vmatpush.msra.mxu0 %v1367
    %1777 = vmatpush.msra.mxu0 %v1315
    %1778 = vmatpush.msra.mxu0 %v1311
    %1779 = vmatpush.msra.mxu0 %v1307
    %1780 = vmatpush.msra.mxu0 %v1303
    %1781 = vmatpush.msra.mxu0 %v1251
    %1782 = vmatpush.msra.mxu0 %v1247
    %1783 = vmatpush.msra.mxu0 %v1243
    %1784 = vmatpush.msra.mxu0 %v1239
    %1785 = vmatpush.msra.mxu0 %v1187
    %1786 = vmatpush.msra.mxu0 %v1183
    %1787 = vmatpush.msra.mxu0 %v1179
    %1788 = vmatpush.msra.mxu0 %v1175
    %1789 = vmatmul.f32.gmra.mxu0 %v1638
    %v1790 = vpop.f32.mrf.mxu0
    %v1791 = vadd.f32 %v1657, %v1790
    %1792 = vmatmul.f32.gmra.mxu0 %v1641
    %v1793 = vpop.f32.mrf.mxu0
    %v1794 = vadd.f32 %v1662, %v1793
    %1795 = vmatmul.f32.gmra.mxu0 %v1644
    %v1796 = vpop.f32.mrf.mxu0
    %v1797 = vadd.f32 %v1667, %v1796
    %1798 = vmatmul.f32.gmra.mxu0 %v1647
    %v1799 = vpop.f32.mrf.mxu0
    %v1800 = vadd.f32 %v1672, %v1799
    %1801 = vdwg.mxu0
    %1802 = vmatpush.msra.mxu0 %v1571
    %1803 = vmatpush.msra.mxu0 %v1567
    %1804 = vmatpush.msra.mxu0 %v1563
    %1805 = vmatpush.msra.mxu0 %v1559
    %1806 = vmatpush.msra.mxu0 %v1507
    %1807 = vmatpush.msra.mxu0 %v1503
    %1808 = vmatpush.msra.mxu0 %v1499
    %1809 = vmatpush.msra.mxu0 %v1495
    %1810 = vmatpush.msra.mxu0 %v1443
    %1811 = vmatpush.msra.mxu0 %v1439
    %1812 = vmatpush.msra.mxu0 %v1435
    %1813 = vmatpush.msra.mxu0 %v1431
    %1814 = vmatpush.msra.mxu0 %v1123
    %1815 = vmatpush.msra.mxu0 %v1119
    %1816 = vmatpush.msra.mxu0 %v1115
    %1817 = vmatpush.msra.mxu0 %v1111
    %1818 = vmatmul.f32.gmra.mxu0 %v1639
    %v1819 = vpop.f32.mrf.mxu0
    %v1820 = vadd.f32 %v1791, %v1819
    %1821 = vmatmul.f32.gmra.mxu0 %v1642
    %v1822 = vpop.f32.mrf.mxu0
    %v1823 = vadd.f32 %v1794, %v1822
    %1824 = vmatmul.f32.gmra.mxu0 %v1645
    %v1825 = vpop.f32.mrf.mxu0
    %v1826 = vadd.f32 %v1797, %v1825
    %1827 = vmatmul.f32.gmra.mxu0 %v1648
    %v1828 = vpop.f32.mrf.mxu0
    %v1829 = vadd.f32 %v1800, %v1828
    %1830 = vdwg.mxu0
    %1831 = vmatpush.msra.mxu0 0.0
    %1832 = vmatpush.msra.mxu0 0.0
    %1833 = vmatpush.msra.mxu0 0.0
    %1834 = vmatpush.msra.mxu0 0.0
    %1835 = vmatpush.msra.mxu0 0.0
    %1836 = vmatpush.msra.mxu0 0.0
    %1837 = vmatpush.msra.mxu0 0.0
    %1838 = vmatpush.msra.mxu0 0.0
    %1839 = vmatpush.msra.mxu0 0.0
    %1840 = vmatpush.msra.mxu0 0.0
    %1841 = vmatpush.msra.mxu0 0.0
    %1842 = vmatpush.msra.mxu0 0.0
    %1843 = vmatpush.msra.mxu0 %v1635
    %1844 = vmatpush.msra.mxu0 %v1631
    %1845 = vmatpush.msra.mxu0 %v1627
    %1846 = vmatpush.msra.mxu0 %v1623
    %1847 = vmatmul.f32.gmra.mxu0 %v1675
    %v1848 = vpop.f32.mrf.mxu0
    %v1849 = vadd.f32 %v1820, %v1848
    %1850 = vmatmul.f32.gmra.mxu0 %v1678
    %v1851 = vpop.f32.mrf.mxu0
    %v1852 = vadd.f32 %v1823, %v1851
    %1853 = vmatmul.f32.gmra.mxu0 %v1681
    %v1854 = vpop.f32.mrf.mxu0
    %v1855 = vadd.f32 %v1826, %v1854
    %1856 = vmatmul.f32.gmra.mxu0 %v1684
    %v1857 = vpop.f32.mrf.mxu0
    %v1858 = vadd.f32 %v1829, %v1857
    %1859 = vdwg.mxu0
    %1860 = vmatpush.msra.mxu0 %v1380
    %1861 = vmatpush.msra.mxu0 %v1376
    %1862 = vmatpush.msra.mxu0 %v1372
    %1863 = vmatpush.msra.mxu0 %v1368
    %1864 = vmatpush.msra.mxu0 %v1316
    %1865 = vmatpush.msra.mxu0 %v1312
    %1866 = vmatpush.msra.mxu0 %v1308
    %1867 = vmatpush.msra.mxu0 %v1304
    %1868 = vmatpush.msra.mxu0 %v1252
    %1869 = vmatpush.msra.mxu0 %v1248
    %1870 = vmatpush.msra.mxu0 %v1244
    %1871 = vmatpush.msra.mxu0 %v1240
    %1872 = vmatpush.msra.mxu0 %v1188
    %1873 = vmatpush.msra.mxu0 %v1184
    %1874 = vmatpush.msra.mxu0 %v1180
    %1875 = vmatpush.msra.mxu0 %v1176
    %1876 = vmatmul.f32.gmra.mxu0 %v1638
    %v1877 = vpop.f32.mrf.mxu0
    %v1878 = vadd.f32 %v1657, %v1877
    %1879 = vmatmul.f32.gmra.mxu0 %v1641
    %v1880 = vpop.f32.mrf.mxu0
    %v1881 = vadd.f32 %v1662, %v1880
    %1882 = vmatmul.f32.gmra.mxu0 %v1644
    %v1883 = vpop.f32.mrf.mxu0
    %v1884 = vadd.f32 %v1667, %v1883
    %1885 = vmatmul.f32.gmra.mxu0 %v1647
    %v1886 = vpop.f32.mrf.mxu0
    %v1887 = vadd.f32 %v1672, %v1886
    %1888 = vdwg.mxu0
    %1889 = vmatpush.msra.mxu0 %v1572
    %1890 = vmatpush.msra.mxu0 %v1568
    %1891 = vmatpush.msra.mxu0 %v1564
    %1892 = vmatpush.msra.mxu0 %v1560
    %1893 = vmatpush.msra.mxu0 %v1508
    %1894 = vmatpush.msra.mxu0 %v1504
    %1895 = vmatpush.msra.mxu0 %v1500
    %1896 = vmatpush.msra.mxu0 %v1496
    %1897 = vmatpush.msra.mxu0 %v1444
    %1898 = vmatpush.msra.mxu0 %v1440
    %1899 = vmatpush.msra.mxu0 %v1436
    %1900 = vmatpush.msra.mxu0 %v1432
    %1901 = vmatpush.msra.mxu0 %v1124
    %1902 = vmatpush.msra.mxu0 %v1120
    %1903 = vmatpush.msra.mxu0 %v1116
    %1904 = vmatpush.msra.mxu0 %v1112
    %1905 = vmatmul.f32.gmra.mxu0 %v1639
    %v1906 = vpop.f32.mrf.mxu0
    %v1907 = vadd.f32 %v1878, %v1906
    %1908 = vmatmul.f32.gmra.mxu0 %v1642
    %v1909 = vpop.f32.mrf.mxu0
    %v1910 = vadd.f32 %v1881, %v1909
    %1911 = vmatmul.f32.gmra.mxu0 %v1645
    %v1912 = vpop.f32.mrf.mxu0
    %v1913 = vadd.f32 %v1884, %v1912
    %1914 = vmatmul.f32.gmra.mxu0 %v1648
    %v1915 = vpop.f32.mrf.mxu0
    %v1916 = vadd.f32 %v1887, %v1915
    %1917 = vdwg.mxu0
    %1918 = vmatpush.msra.mxu0 0.0
    %1919 = vmatpush.msra.mxu0 0.0
    %1920 = vmatpush.msra.mxu0 0.0
    %1921 = vmatpush.msra.mxu0 0.0
    %1922 = vmatpush.msra.mxu0 0.0
    %1923 = vmatpush.msra.mxu0 0.0
    %1924 = vmatpush.msra.mxu0 0.0
    %1925 = vmatpush.msra.mxu0 0.0
    %1926 = vmatpush.msra.mxu0 0.0
    %1927 = vmatpush.msra.mxu0 0.0
    %1928 = vmatpush.msra.mxu0 0.0
    %1929 = vmatpush.msra.mxu0 0.0
    %1930 = vmatpush.msra.mxu0 %v1636
    %1931 = vmatpush.msra.mxu0 %v1632
    %1932 = vmatpush.msra.mxu0 %v1628
    %1933 = vmatpush.msra.mxu0 %v1624
    %1934 = vmatmul.f32.gmra.mxu0 %v1675
    %v1935 = vpop.f32.mrf.mxu0
    %v1936 = vadd.f32 %v1907, %v1935
    %1937 = vmatmul.f32.gmra.mxu0 %v1678
    %v1938 = vpop.f32.mrf.mxu0
    %v1939 = vadd.f32 %v1910, %v1938
    %1940 = vmatmul.f32.gmra.mxu0 %v1681
    %v1941 = vpop.f32.mrf.mxu0
    %v1942 = vadd.f32 %v1913, %v1941
    %1943 = vmatmul.f32.gmra.mxu0 %v1684
    %v1944 = vpop.f32.mrf.mxu0
    %v1945 = vadd.f32 %v1916, %v1944
    %1946 = vdwg.mxu0
    %1947 = vmatpush.msra.mxu0 %v1381
    %1948 = vmatpush.msra.mxu0 %v1377
    %1949 = vmatpush.msra.mxu0 %v1373
    %1950 = vmatpush.msra.mxu0 %v1369
    %1951 = vmatpush.msra.mxu0 %v1317
    %1952 = vmatpush.msra.mxu0 %v1313
    %1953 = vmatpush.msra.mxu0 %v1309
    %1954 = vmatpush.msra.mxu0 %v1305
    %1955 = vmatpush.msra.mxu0 %v1253
    %1956 = vmatpush.msra.mxu0 %v1249
    %1957 = vmatpush.msra.mxu0 %v1245
    %1958 = vmatpush.msra.mxu0 %v1241
    %1959 = vmatpush.msra.mxu0 %v1189
    %1960 = vmatpush.msra.mxu0 %v1185
    %1961 = vmatpush.msra.mxu0 %v1181
    %1962 = vmatpush.msra.mxu0 %v1177
    %1963 = vmatmul.f32.gmra.mxu0 %v1638
    %v1964 = vpop.f32.mrf.mxu0
    %v1965 = vadd.f32 %v1657, %v1964
    %1966 = vmatmul.f32.gmra.mxu0 %v1641
    %v1967 = vpop.f32.mrf.mxu0
    %v1968 = vadd.f32 %v1662, %v1967
    %1969 = vmatmul.f32.gmra.mxu0 %v1644
    %v1970 = vpop.f32.mrf.mxu0
    %v1971 = vadd.f32 %v1667, %v1970
    %1972 = vmatmul.f32.gmra.mxu0 %v1647
    %v1973 = vpop.f32.mrf.mxu0
    %v1974 = vadd.f32 %v1672, %v1973
    %1975 = vdwg.mxu0
    %1976 = vmatpush.msra.mxu0 %v1573
    %1977 = vmatpush.msra.mxu0 %v1569
    %1978 = vmatpush.msra.mxu0 %v1565
    %1979 = vmatpush.msra.mxu0 %v1561
    %1980 = vmatpush.msra.mxu0 %v1509
    %1981 = vmatpush.msra.mxu0 %v1505
    %1982 = vmatpush.msra.mxu0 %v1501
    %1983 = vmatpush.msra.mxu0 %v1497
    %1984 = vmatpush.msra.mxu0 %v1445
    %1985 = vmatpush.msra.mxu0 %v1441
    %1986 = vmatpush.msra.mxu0 %v1437
    %1987 = vmatpush.msra.mxu0 %v1433
    %1988 = vmatpush.msra.mxu0 %v1125
    %1989 = vmatpush.msra.mxu0 %v1121
    %1990 = vmatpush.msra.mxu0 %v1117
    %1991 = vmatpush.msra.mxu0 %v1113
    %1992 = vmatmul.f32.gmra.mxu0 %v1639
    %v1993 = vpop.f32.mrf.mxu0
    %v1994 = vadd.f32 %v1965, %v1993
    %1995 = vmatmul.f32.gmra.mxu0 %v1642
    %v1996 = vpop.f32.mrf.mxu0
    %v1997 = vadd.f32 %v1968, %v1996
    %1998 = vmatmul.f32.gmra.mxu0 %v1645
    %v1999 = vpop.f32.mrf.mxu0
    %v2000 = vadd.f32 %v1971, %v1999
    %2001 = vmatmul.f32.gmra.mxu0 %v1648
    %v2002 = vpop.f32.mrf.mxu0
    %v2003 = vadd.f32 %v1974, %v2002
    %2004 = vdwg.mxu0
    %2005 = vmatpush.msra.mxu0 0.0
    %2006 = vmatpush.msra.mxu0 0.0
    %2007 = vmatpush.msra.mxu0 0.0
    %2008 = vmatpush.msra.mxu0 0.0
    %2009 = vmatpush.msra.mxu0 0.0
    %2010 = vmatpush.msra.mxu0 0.0
    %2011 = vmatpush.msra.mxu0 0.0
    %2012 = vmatpush.msra.mxu0 0.0
    %2013 = vmatpush.msra.mxu0 0.0
    %2014 = vmatpush.msra.mxu0 0.0
    %2015 = vmatpush.msra.mxu0 0.0
    %2016 = vmatpush.msra.mxu0 0.0
    %2017 = vmatpush.msra.mxu0 %v1637
    %2018 = vmatpush.msra.mxu0 %v1633
    %2019 = vmatpush.msra.mxu0 %v1629
    %2020 = vmatpush.msra.mxu0 %v1625
    %2021 = vmatmul.f32.gmra.mxu0 %v1675
    %v2022 = vpop.f32.mrf.mxu0
    %v2023 = vadd.f32 %v1994, %v2022
    %2024 = vmatmul.f32.gmra.mxu0 %v1678
    %v2025 = vpop.f32.mrf.mxu0
    %v2026 = vadd.f32 %v1997, %v2025
    %2027 = vmatmul.f32.gmra.mxu0 %v1681
    %v2028 = vpop.f32.mrf.mxu0
    %v2029 = vadd.f32 %v2000, %v2028
    %2030 = vmatmul.f32.gmra.mxu0 %v1684
    %v2031 = vpop.f32.mrf.mxu0
    %v2032 = vadd.f32 %v2003, %v2031
    %2033 = vdwg.mxu0
    %v2034 = vmul.f32 %v1762, 0.1
    %v2035 = vmul.f32 %v1849, 0.1
    %v2036 = vmul.f32 %v1936, 0.1
    %v2037 = vmul.f32 %v2023, 0.1
    %v2038 = vmul.f32 %v1765, 0.1
    %v2039 = vmul.f32 %v1852, 0.1
    %v2040 = vmul.f32 %v1939, 0.1
    %v2041 = vmul.f32 %v2026, 0.1
    %v2042 = vmul.f32 %v1768, 0.1
    %v2043 = vmul.f32 %v1855, 0.1
    %v2044 = vmul.f32 %v1942, 0.1
    %v2045 = vmul.f32 %v2029, 0.1
    %v2046 = vmul.f32 %v1771, 0.1
    %v2047 = vmul.f32 %v1858, 0.1
    %v2048 = vmul.f32 %v1945, 0.1
    %v2049 = vmul.f32 %v2032, 0.1
    %v2050 = vadd.f32 %v95, %v2034
    %v2051 = vadd.f32 %v96, %v2035
    %v2052 = vadd.f32 %v97, %v2036
    %v2053 = vadd.f32 %v98, %v2037
    %v2054 = vadd.f32 %v99, %v2038
    %v2055 = vadd.f32 %v100, %v2039
    %v2056 = vadd.f32 %v101, %v2040
    %v2057 = vadd.f32 %v102, %v2041
    %v2058 = vadd.f32 %v103, %v2042
    %v2059 = vadd.f32 %v104, %v2043
    %v2060 = vadd.f32 %v105, %v2044
    %v2061 = vadd.f32 %v106, %v2045
    %v2062 = vadd.f32 %v107, %v2046
    %v2063 = vadd.f32 %v108, %v2047
    %v2064 = vadd.f32 %v109, %v2048
    %v2065 = vadd.f32 %v110, %v2049
    %v2066 = vld [vmem:[%s6] sm:$0xff]
    %v2067 = vld [vmem:[%s6 + $0x8] sm:$0xff]
    %v2068 = vld [vmem:[%s6 + $0x10] sm:$0xff]
    %v2069 = vld [vmem:[%s6 + $0x18] sm:$0xff]
    %v2070 = vld [vmem:[%s7] sm:$0xff]
    %v2071 = vld [vmem:[%s7 + $0x8] sm:$0xff]
    %v2072 = vld [vmem:[%s7 + $0x10] sm:$0xff]
    %v2073 = vld [vmem:[%s7 + $0x18] sm:$0xff]
    %2075 = vset.pattern.permute.xlu0 0
    %2076 = vperm.xlu0 %2075, %v2070
    %v2077 = vpop.permute.xlu0 %2076
    %2080 = vset.pattern.permute.xlu0 0
    %2081 = vperm.xlu0 %2080, %v2071
    %v2082 = vpop.permute.xlu0 %2081
    %2085 = vset.pattern.permute.xlu0 0
    %2086 = vperm.xlu0 %2085, %v2072
    %v2087 = vpop.permute.xlu0 %2086
    %2090 = vset.pattern.permute.xlu0 0
    %2091 = vperm.xlu0 %2090, %v2073
    %v2092 = vpop.permute.xlu0 %2091
    %v2095 = vsel %vm749, %v2066, 0
    %v2098 = vsel %vm749, %v2067, 0
    %v2101 = vsel %vm749, %v2068, 0
    %v2104 = vsel %vm749, %v2069, 0
    %2106 = vmatpush.msra.mxu0 0.0
    %2107 = vmatpush.msra.mxu0 0.0
    %2108 = vmatpush.msra.mxu0 0.0
    %2109 = vmatpush.msra.mxu0 0.0
    %2110 = vmatpush.msra.mxu0 0.0
    %2111 = vmatpush.msra.mxu0 0.0
    %2112 = vmatpush.msra.mxu0 0.0
    %2113 = vmatpush.msra.mxu0 0.0
    %2114 = vmatpush.msra.mxu0 0.0
    %2115 = vmatpush.msra.mxu0 0.0
    %2116 = vmatpush.msra.mxu0 0.0
    %2117 = vmatpush.msra.mxu0 0.0
    %2118 = vmatpush.msra.mxu0 %v2062
    %2119 = vmatpush.msra.mxu0 %v2058
    %2120 = vmatpush.msra.mxu0 %v2054
    %2121 = vmatpush.msra.mxu0 %v2050
    %2122 = vmatmul.f32.gmra.mxu0 %v2095
    %v2123 = vpop.f32.mrf.mxu0
    %v2124 = vadd.f32 %v2077, %v2123
    %2125 = vmatmul.f32.gmra.mxu0 %v2098
    %v2126 = vpop.f32.mrf.mxu0
    %v2127 = vadd.f32 %v2082, %v2126
    %2128 = vmatmul.f32.gmra.mxu0 %v2101
    %v2129 = vpop.f32.mrf.mxu0
    %v2130 = vadd.f32 %v2087, %v2129
    %2131 = vmatmul.f32.gmra.mxu0 %v2104
    %v2132 = vpop.f32.mrf.mxu0
    %v2133 = vadd.f32 %v2092, %v2132
    %2134 = vdwg.mxu0
    %2135 = vmatpush.msra.mxu0 0.0
    %2136 = vmatpush.msra.mxu0 0.0
    %2137 = vmatpush.msra.mxu0 0.0
    %2138 = vmatpush.msra.mxu0 0.0
    %2139 = vmatpush.msra.mxu0 0.0
    %2140 = vmatpush.msra.mxu0 0.0
    %2141 = vmatpush.msra.mxu0 0.0
    %2142 = vmatpush.msra.mxu0 0.0
    %2143 = vmatpush.msra.mxu0 0.0
    %2144 = vmatpush.msra.mxu0 0.0
    %2145 = vmatpush.msra.mxu0 0.0
    %2146 = vmatpush.msra.mxu0 0.0
    %2147 = vmatpush.msra.mxu0 %v2063
    %2148 = vmatpush.msra.mxu0 %v2059
    %2149 = vmatpush.msra.mxu0 %v2055
    %2150 = vmatpush.msra.mxu0 %v2051
    %2151 = vmatmul.f32.gmra.mxu0 %v2095
    %v2152 = vpop.f32.mrf.mxu0
    %v2153 = vadd.f32 %v2077, %v2152
    %2154 = vmatmul.f32.gmra.mxu0 %v2098
    %v2155 = vpop.f32.mrf.mxu0
    %v2156 = vadd.f32 %v2082, %v2155
    %2157 = vmatmul.f32.gmra.mxu0 %v2101
    %v2158 = vpop.f32.mrf.mxu0
    %v2159 = vadd.f32 %v2087, %v2158
    %2160 = vmatmul.f32.gmra.mxu0 %v2104
    %v2161 = vpop.f32.mrf.mxu0
    %v2162 = vadd.f32 %v2092, %v2161
    %2163 = vdwg.mxu0
    %2164 = vmatpush.msra.mxu0 0.0
    %2165 = vmatpush.msra.mxu0 0.0
    %2166 = vmatpush.msra.mxu0 0.0
    %2167 = vmatpush.msra.mxu0 0.0
    %2168 = vmatpush.msra.mxu0 0.0
    %2169 = vmatpush.msra.mxu0 0.0
    %2170 = vmatpush.msra.mxu0 0.0
    %2171 = vmatpush.msra.mxu0 0.0
    %2172 = vmatpush.msra.mxu0 0.0
    %2173 = vmatpush.msra.mxu0 0.0
    %2174 = vmatpush.msra.mxu0 0.0
    %2175 = vmatpush.msra.mxu0 0.0
    %2176 = vmatpush.msra.mxu0 %v2064
    %2177 = vmatpush.msra.mxu0 %v2060
    %2178 = vmatpush.msra.mxu0 %v2056
    %2179 = vmatpush.msra.mxu0 %v2052
    %2180 = vmatmul.f32.gmra.mxu0 %v2095
    %v2181 = vpop.f32.mrf.mxu0
    %v2182 = vadd.f32 %v2077, %v2181
    %2183 = vmatmul.f32.gmra.mxu0 %v2098
    %v2184 = vpop.f32.mrf.mxu0
    %v2185 = vadd.f32 %v2082, %v2184
    %2186 = vmatmul.f32.gmra.mxu0 %v2101
    %v2187 = vpop.f32.mrf.mxu0
    %v2188 = vadd.f32 %v2087, %v2187
    %2189 = vmatmul.f32.gmra.mxu0 %v2104
    %v2190 = vpop.f32.mrf.mxu0
    %v2191 = vadd.f32 %v2092, %v2190
    %2192 = vdwg.mxu0
    %2193 = vmatpush.msra.mxu0 0.0
    %2194 = vmatpush.msra.mxu0 0.0
    %2195 = vmatpush.msra.mxu0 0.0
    %2196 = vmatpush.msra.mxu0 0.0
    %2197 = vmatpush.msra.mxu0 0.0
    %2198 = vmatpush.msra.mxu0 0.0
    %2199 = vmatpush.msra.mxu0 0.0
    %2200 = vmatpush.msra.mxu0 0.0
    %2201 = vmatpush.msra.mxu0 0.0
    %2202 = vmatpush.msra.mxu0 0.0
    %2203 = vmatpush.msra.mxu0 0.0
    %2204 = vmatpush.msra.mxu0 0.0
    %2205 = vmatpush.msra.mxu0 %v2065
    %2206 = vmatpush.msra.mxu0 %v2061
    %2207 = vmatpush.msra.mxu0 %v2057
    %2208 = vmatpush.msra.mxu0 %v2053
    %2209 = vmatmul.f32.gmra.mxu0 %v2095
    %v2210 = vpop.f32.mrf.mxu0
    %v2211 = vadd.f32 %v2077, %v2210
    %2212 = vmatmul.f32.gmra.mxu0 %v2098
    %v2213 = vpop.f32.mrf.mxu0
    %v2214 = vadd.f32 %v2082, %v2213
    %2215 = vmatmul.f32.gmra.mxu0 %v2101
    %v2216 = vpop.f32.mrf.mxu0
    %v2217 = vadd.f32 %v2087, %v2216
    %2218 = vmatmul.f32.gmra.mxu0 %v2104
    %v2219 = vpop.f32.mrf.mxu0
    %v2220 = vadd.f32 %v2092, %v2219
    %2221 = vdwg.mxu0
    %v2222 = vmax.f32 %v2124, 0.0
    %v2223 = vmax.f32 %v2153, 0.0
    %v2224 = vmax.f32 %v2182, 0.0
    %v2225 = vmax.f32 %v2211, 0.0
    %v2226 = vmax.f32 %v2127, 0.0
    %v2227 = vmax.f32 %v2156, 0.0
    %v2228 = vmax.f32 %v2185, 0.0
    %v2229 = vmax.f32 %v2214, 0.0
    %v2230 = vmax.f32 %v2130, 0.0
    %v2231 = vmax.f32 %v2159, 0.0
    %v2232 = vmax.f32 %v2188, 0.0
    %v2233 = vmax.f32 %v2217, 0.0
    %v2234 = vmax.f32 %v2133, 0.0
    %v2235 = vmax.f32 %v2162, 0.0
    %v2236 = vmax.f32 %v2191, 0.0
    %v2237 = vmax.f32 %v2220, 0.0
    %v2238 = vld [vmem:[%s8] sm:$0xff]
    %v2239 = vld [vmem:[%s8 + $0x8] sm:$0xff]
    %v2240 = vld [vmem:[%s8 + $0x10] sm:$0xff]
    %v2241 = vld [vmem:[%s8 + $0x18] sm:$0xff]
    %v2242 = vld [vmem:[%s9] sm:$0xff]
    %v2243 = vld [vmem:[%s9 + $0x8] sm:$0xff]
    %v2244 = vld [vmem:[%s9 + $0x10] sm:$0xff]
    %v2245 = vld [vmem:[%s9 + $0x18] sm:$0xff]
    %2247 = vset.pattern.permute.xlu0 0
    %2248 = vperm.xlu0 %2247, %v2242
    %v2249 = vpop.permute.xlu0 %2248
    %2252 = vset.pattern.permute.xlu0 0
    %2253 = vperm.xlu0 %2252, %v2243
    %v2254 = vpop.permute.xlu0 %2253
    %2257 = vset.pattern.permute.xlu0 0
    %2258 = vperm.xlu0 %2257, %v2244
    %v2259 = vpop.permute.xlu0 %2258
    %2262 = vset.pattern.permute.xlu0 0
    %2263 = vperm.xlu0 %2262, %v2245
    %v2264 = vpop.permute.xlu0 %2263
    %v2267 = vsel %vm749, %v2238, 0
    %v2270 = vsel %vm749, %v2239, 0
    %v2273 = vsel %vm749, %v2240, 0
    %v2276 = vsel %vm749, %v2241, 0
    %2278 = vmatpush.msra.mxu0 0.0
    %2279 = vmatpush.msra.mxu0 0.0
    %2280 = vmatpush.msra.mxu0 0.0
    %2281 = vmatpush.msra.mxu0 0.0
    %2282 = vmatpush.msra.mxu0 0.0
    %2283 = vmatpush.msra.mxu0 0.0
    %2284 = vmatpush.msra.mxu0 0.0
    %2285 = vmatpush.msra.mxu0 0.0
    %2286 = vmatpush.msra.mxu0 0.0
    %2287 = vmatpush.msra.mxu0 0.0
    %2288 = vmatpush.msra.mxu0 0.0
    %2289 = vmatpush.msra.mxu0 0.0
    %2290 = vmatpush.msra.mxu0 %v2234
    %2291 = vmatpush.msra.mxu0 %v2230
    %2292 = vmatpush.msra.mxu0 %v2226
    %2293 = vmatpush.msra.mxu0 %v2222
    %2294 = vmatmul.f32.gmra.mxu0 %v2267
    %v2295 = vpop.f32.mrf.mxu0
    %v2296 = vadd.f32 %v2249, %v2295
    %2297 = vmatmul.f32.gmra.mxu0 %v2270
    %v2298 = vpop.f32.mrf.mxu0
    %v2299 = vadd.f32 %v2254, %v2298
    %2300 = vmatmul.f32.gmra.mxu0 %v2273
    %v2301 = vpop.f32.mrf.mxu0
    %v2302 = vadd.f32 %v2259, %v2301
    %2303 = vmatmul.f32.gmra.mxu0 %v2276
    %v2304 = vpop.f32.mrf.mxu0
    %v2305 = vadd.f32 %v2264, %v2304
    %2306 = vdwg.mxu0
    %2307 = vmatpush.msra.mxu0 0.0
    %2308 = vmatpush.msra.mxu0 0.0
    %2309 = vmatpush.msra.mxu0 0.0
    %2310 = vmatpush.msra.mxu0 0.0
    %2311 = vmatpush.msra.mxu0 0.0
    %2312 = vmatpush.msra.mxu0 0.0
    %2313 = vmatpush.msra.mxu0 0.0
    %2314 = vmatpush.msra.mxu0 0.0
    %2315 = vmatpush.msra.mxu0 0.0
    %2316 = vmatpush.msra.mxu0 0.0
    %2317 = vmatpush.msra.mxu0 0.0
    %2318 = vmatpush.msra.mxu0 0.0
    %2319 = vmatpush.msra.mxu0 %v2235
    %2320 = vmatpush.msra.mxu0 %v2231
    %2321 = vmatpush.msra.mxu0 %v2227
    %2322 = vmatpush.msra.mxu0 %v2223
    %2323 = vmatmul.f32.gmra.mxu0 %v2267
    %v2324 = vpop.f32.mrf.mxu0
    %v2325 = vadd.f32 %v2249, %v2324
    %2326 = vmatmul.f32.gmra.mxu0 %v2270
    %v2327 = vpop.f32.mrf.mxu0
    %v2328 = vadd.f32 %v2254, %v2327
    %2329 = vmatmul.f32.gmra.mxu0 %v2273
    %v2330 = vpop.f32.mrf.mxu0
    %v2331 = vadd.f32 %v2259, %v2330
    %2332 = vmatmul.f32.gmra.mxu0 %v2276
    %v2333 = vpop.f32.mrf.mxu0
    %v2334 = vadd.f32 %v2264, %v2333
    %2335 = vdwg.mxu0
    %2336 = vmatpush.msra.mxu0 0.0
    %2337 = vmatpush.msra.mxu0 0.0
    %2338 = vmatpush.msra.mxu0 0.0
    %2339 = vmatpush.msra.mxu0 0.0
    %2340 = vmatpush.msra.mxu0 0.0
    %2341 = vmatpush.msra.mxu0 0.0
    %2342 = vmatpush.msra.mxu0 0.0
    %2343 = vmatpush.msra.mxu0 0.0
    %2344 = vmatpush.msra.mxu0 0.0
    %2345 = vmatpush.msra.mxu0 0.0
    %2346 = vmatpush.msra.mxu0 0.0
    %2347 = vmatpush.msra.mxu0 0.0
    %2348 = vmatpush.msra.mxu0 %v2236
    %2349 = vmatpush.msra.mxu0 %v2232
    %2350 = vmatpush.msra.mxu0 %v2228
    %2351 = vmatpush.msra.mxu0 %v2224
    %2352 = vmatmul.f32.gmra.mxu0 %v2267
    %v2353 = vpop.f32.mrf.mxu0
    %v2354 = vadd.f32 %v2249, %v2353
    %2355 = vmatmul.f32.gmra.mxu0 %v2270
    %v2356 = vpop.f32.mrf.mxu0
    %v2357 = vadd.f32 %v2254, %v2356
    %2358 = vmatmul.f32.gmra.mxu0 %v2273
    %v2359 = vpop.f32.mrf.mxu0
    %v2360 = vadd.f32 %v2259, %v2359
    %2361 = vmatmul.f32.gmra.mxu0 %v2276
    %v2362 = vpop.f32.mrf.mxu0
    %v2363 = vadd.f32 %v2264, %v2362
    %2364 = vdwg.mxu0
    %2365 = vmatpush.msra.mxu0 0.0
    %2366 = vmatpush.msra.mxu0 0.0
    %2367 = vmatpush.msra.mxu0 0.0
    %2368 = vmatpush.msra.mxu0 0.0
    %2369 = vmatpush.msra.mxu0 0.0
    %2370 = vmatpush.msra.mxu0 0.0
    %2371 = vmatpush.msra.mxu0 0.0
    %2372 = vmatpush.msra.mxu0 0.0
    %2373 = vmatpush.msra.mxu0 0.0
    %2374 = vmatpush.msra.mxu0 0.0
    %2375 = vmatpush.msra.mxu0 0.0
    %2376 = vmatpush.msra.mxu0 0.0
    %2377 = vmatpush.msra.mxu0 %v2237
    %2378 = vmatpush.msra.mxu0 %v2233
    %2379 = vmatpush.msra.mxu0 %v2229
    %2380 = vmatpush.msra.mxu0 %v2225
    %2381 = vmatmul.f32.gmra.mxu0 %v2267
    %v2382 = vpop.f32.mrf.mxu0
    %v2383 = vadd.f32 %v2249, %v2382
    %2384 = vmatmul.f32.gmra.mxu0 %v2270
    %v2385 = vpop.f32.mrf.mxu0
    %v2386 = vadd.f32 %v2254, %v2385
    %2387 = vmatmul.f32.gmra.mxu0 %v2273
    %v2388 = vpop.f32.mrf.mxu0
    %v2389 = vadd.f32 %v2259, %v2388
    %2390 = vmatmul.f32.gmra.mxu0 %v2276
    %v2391 = vpop.f32.mrf.mxu0
    %v2392 = vadd.f32 %v2264, %v2391
    %2393 = vdwg.mxu0
    %v2394 = vld [vmem:[%s10] sm:$0xff]
    %v2395 = vld [vmem:[%s10 + $0x8] sm:$0xff]
    %v2396 = vld [vmem:[%s10 + $0x10] sm:$0xff]
    %v2397 = vld [vmem:[%s10 + $0x18] sm:$0xff]
    %v2398 = vld [vmem:[%s11] sm:$0x1]
    %v2399 = vld [vmem:[%s12] sm:$0xff]
    %v2400 = vld [vmem:[%s12 + $0x8] sm:$0xff]
    %v2401 = vld [vmem:[%s12 + $0x10] sm:$0xff]
    %v2402 = vld [vmem:[%s12 + $0x18] sm:$0xff]
    %v2403 = vld [vmem:[%s13] sm:$0xff]
    %v2404 = vld [vmem:[%s13 + $0x8] sm:$0xff]
    %v2405 = vld [vmem:[%s13 + $0x10] sm:$0xff]
    %v2406 = vld [vmem:[%s13 + $0x18] sm:$0xff]
    %v2407 = vadd.f32 %v2296, %v2325
    %2408 = vadd.xlane.f32.xlu0 %v2407
    %v2409 = vpop.xlane.xlu0 %2408
    %v2410 = vadd.f32 %v2299, %v2328
    %2411 = vadd.xlane.f32.xlu0 %v2410
    %v2412 = vpop.xlane.xlu0 %2411
    %v2413 = vadd.f32 %v2302, %v2331
    %2414 = vadd.xlane.f32.xlu0 %v2413
    %v2415 = vpop.xlane.xlu0 %2414
    %v2416 = vadd.f32 %v2305, %v2334
    %2417 = vadd.xlane.f32.xlu0 %v2416
    %v2418 = vpop.xlane.xlu0 %2417
    %v2419 = vmul.f32 %v2409, 0.00390625
    %v2420 = vmul.f32 %v2412, 0.00390625
    %v2421 = vmul.f32 %v2415, 0.00390625
    %v2422 = vmul.f32 %v2418, 0.00390625
    %v2423 = vmul.f32 %v2394, %v2419
    %v2424 = vmul.f32 %v2395, %v2420
    %v2425 = vmul.f32 %v2396, %v2421
    %v2426 = vmul.f32 %v2397, %v2422
    %vm2427 = vcmask 15360
    %v2428 = vsel %vm2427, %v2423, 0.0
    %v2429 = vsel %vm2427, %v2424, 0.0
    %v2430 = vadd.f32 %v2428, %v2429
    %v2431 = vsel %vm2427, %v2425, 0.0
    %v2432 = vadd.f32 %v2430, %v2431
    %v2433 = vsel %vm2427, %v2426, 0.0
    %v2434 = vadd.f32 %v2432, %v2433
    %v2435 = vrot.slane %v2434, 4
    %v2436 = vadd.f32 %v2434, %v2435
    %v2437 = vrot.slane %v2436, 2
    %v2438 = vadd.f32 %v2436, %v2437
    %v2439 = vrot.slane %v2438, 1
    %v2440 = vadd.f32 %v2438, %v2439
    %v2441 = vadd.f32 %v2440, %v2398
    %v2442 = vmax.f32 %v2441, 0.0
    %v2443 = vperm.slane %v2442, 0
    %v2444 = vmul.f32 %v2399, %v2443
    %v2445 = vmul.f32 %v2400, %v2443
    %v2446 = vmul.f32 %v2401, %v2443
    %v2447 = vmul.f32 %v2402, %v2443
    %v2448 = vsel %vm2427, %v2444, 0.0
    %2449 = vadd.xlane.f32.xlu0 %v2448
    %v2450 = vpop.xlane.xlu0 %2449
    %v2451 = vsel %vm2427, %v2445, 0.0
    %2452 = vadd.xlane.f32.xlu0 %v2451
    %v2453 = vpop.xlane.xlu0 %2452
    %v2454 = vsel %vm2427, %v2446, 0.0
    %2455 = vadd.xlane.f32.xlu0 %v2454
    %v2456 = vpop.xlane.xlu0 %2455
    %v2457 = vsel %vm2427, %v2447, 0.0
    %2458 = vadd.xlane.f32.xlu0 %v2457
    %v2459 = vpop.xlane.xlu0 %2458
    %v2460 = vadd.f32 %v2450, %v2403
    %v2461 = vadd.f32 %v2453, %v2404
    %v2462 = vadd.f32 %v2456, %v2405
    %v2463 = vadd.f32 %v2459, %v2406
    %v2464 = vxor.u32 %v2460, 2147483648
    %v2465 = vxor.u32 %v2461, 2147483648
    %v2466 = vxor.u32 %v2462, 2147483648
    %v2467 = vxor.u32 %v2463, 2147483648
    %v2468 = vmul.f32 %v2464, 1.442695
    %v2469 = vpow.pop %v2468
    %v2470 = vmul.f32 %v2465, 1.442695
    %v2471 = vpow.pop %v2470
    %v2472 = vmul.f32 %v2466, 1.442695
    %v2473 = vpow.pop %v2472
    %v2474 = vmul.f32 %v2467, 1.442695
    %v2475 = vpow.pop %v2474
    %v2476 = vadd.f32 %v2469, 1.0
    %v2477 = vadd.f32 %v2471, 1.0
    %v2478 = vadd.f32 %v2473, 1.0
    %v2479 = vadd.f32 %v2475, 1.0
    %v2480 = vrcp.pop %v2476
    %v2481 = vmul.f32 %v2476, %v2480
    %v2482 = vsub.f32 1.0, %v2481
    %v2483 = vmul.f32 %v2480, %v2482
    %v2484 = vadd.f32 %v2480, %v2483
    %vm2485 = vweird.f32 %v2476
    %vm2486 = vweird.f32 %v2480
    %vm2487 = vmor %vm2485, %vm2486
    %v2488 = vsel %vm2487, %v2480, %v2484
    %v2489 = vand.u32 2147483647, %v2476
    %vm2490 = vcmp.eq.f32.partialorder %v2489, 8.507059e+37
    %v2491 = vand.u32 %v2476, 2147483648
    %v2492 = vor.u32 1.1754944e-38, %v2491
    %v2493 = vsel %vm2490, %v2492, %v2488
    %v2494 = vmul.f32 1.0, %v2493
    %v2495 = vrcp.pop %v2477
    %v2496 = vmul.f32 %v2477, %v2495
    %v2497 = vsub.f32 1.0, %v2496
    %v2498 = vmul.f32 %v2495, %v2497
    %v2499 = vadd.f32 %v2495, %v2498
    %vm2500 = vweird.f32 %v2477
    %vm2501 = vweird.f32 %v2495
    %vm2502 = vmor %vm2500, %vm2501
    %v2503 = vsel %vm2502, %v2495, %v2499
    %v2504 = vand.u32 2147483647, %v2477
    %vm2505 = vcmp.eq.f32.partialorder %v2504, 8.507059e+37
    %v2506 = vand.u32 %v2477, 2147483648
    %v2507 = vor.u32 1.1754944e-38, %v2506
    %v2508 = vsel %vm2505, %v2507, %v2503
    %v2509 = vmul.f32 1.0, %v2508
    %v2510 = vrcp.pop %v2478
    %v2511 = vmul.f32 %v2478, %v2510
    %v2512 = vsub.f32 1.0, %v2511
    %v2513 = vmul.f32 %v2510, %v2512
    %v2514 = vadd.f32 %v2510, %v2513
    %vm2515 = vweird.f32 %v2478
    %vm2516 = vweird.f32 %v2510
    %vm2517 = vmor %vm2515, %vm2516
    %v2518 = vsel %vm2517, %v2510, %v2514
    %v2519 = vand.u32 2147483647, %v2478
    %vm2520 = vcmp.eq.f32.partialorder %v2519, 8.507059e+37
    %v2521 = vand.u32 %v2478, 2147483648
    %v2522 = vor.u32 1.1754944e-38, %v2521
    %v2523 = vsel %vm2520, %v2522, %v2518
    %v2524 = vmul.f32 1.0, %v2523
    %v2525 = vrcp.pop %v2479
    %v2526 = vmul.f32 %v2479, %v2525
    %v2527 = vsub.f32 1.0, %v2526
    %v2528 = vmul.f32 %v2525, %v2527
    %v2529 = vadd.f32 %v2525, %v2528
    %vm2530 = vweird.f32 %v2479
    %vm2531 = vweird.f32 %v2525
    %vm2532 = vmor %vm2530, %vm2531
    %v2533 = vsel %vm2532, %v2525, %v2529
    %v2534 = vand.u32 2147483647, %v2479
    %vm2535 = vcmp.eq.f32.partialorder %v2534, 8.507059e+37
    %v2536 = vand.u32 %v2479, 2147483648
    %v2537 = vor.u32 1.1754944e-38, %v2536
    %v2538 = vsel %vm2535, %v2537, %v2533
    %v2539 = vmul.f32 1.0, %v2538
    %2541 = vset.pattern.permute.xlu0 0
    %2542 = vperm.xlu0 %2541, %v2494
    %v2543 = vpop.permute.xlu0 %2542
    %2546 = vset.pattern.permute.xlu0 0
    %2547 = vperm.xlu0 %2546, %v2509
    %v2548 = vpop.permute.xlu0 %2547
    %2551 = vset.pattern.permute.xlu0 0
    %2552 = vperm.xlu0 %2551, %v2524
    %v2553 = vpop.permute.xlu0 %2552
    %2556 = vset.pattern.permute.xlu0 0
    %2557 = vperm.xlu0 %2556, %v2539
    %v2558 = vpop.permute.xlu0 %2557
    %v2560 = vadd.f32 %v2354, %v2383
    %2561 = vadd.xlane.f32.xlu0 %v2560
    %v2562 = vpop.xlane.xlu0 %2561
    %v2563 = vadd.f32 %v2357, %v2386
    %2564 = vadd.xlane.f32.xlu0 %v2563
    %v2565 = vpop.xlane.xlu0 %2564
    %v2566 = vadd.f32 %v2360, %v2389
    %2567 = vadd.xlane.f32.xlu0 %v2566
    %v2568 = vpop.xlane.xlu0 %2567
    %v2569 = vadd.f32 %v2363, %v2392
    %2570 = vadd.xlane.f32.xlu0 %v2569
    %v2571 = vpop.xlane.xlu0 %2570
    %v2572 = vmul.f32 %v2562, 0.00390625
    %v2573 = vmul.f32 %v2565, 0.00390625
    %v2574 = vmul.f32 %v2568, 0.00390625
    %v2575 = vmul.f32 %v2571, 0.00390625
    %v2576 = vmul.f32 %v2394, %v2572
    %v2577 = vmul.f32 %v2395, %v2573
    %v2578 = vmul.f32 %v2396, %v2574
    %v2579 = vmul.f32 %v2397, %v2575
    %v2580 = vsel %vm2427, %v2576, 0.0
    %v2581 = vsel %vm2427, %v2577, 0.0
    %v2582 = vadd.f32 %v2580, %v2581
    %v2583 = vsel %vm2427, %v2578, 0.0
    %v2584 = vadd.f32 %v2582, %v2583
    %v2585 = vsel %vm2427, %v2579, 0.0
    %v2586 = vadd.f32 %v2584, %v2585
    %v2587 = vrot.slane %v2586, 4
    %v2588 = vadd.f32 %v2586, %v2587
    %v2589 = vrot.slane %v2588, 2
    %v2590 = vadd.f32 %v2588, %v2589
    %v2591 = vrot.slane %v2590, 1
    %v2592 = vadd.f32 %v2590, %v2591
    %v2593 = vadd.f32 %v2592, %v2398
    %v2594 = vmax.f32 %v2593, 0.0
    %v2595 = vperm.slane %v2594, 0
    %v2596 = vmul.f32 %v2399, %v2595
    %v2597 = vmul.f32 %v2400, %v2595
    %v2598 = vmul.f32 %v2401, %v2595
    %v2599 = vmul.f32 %v2402, %v2595
    %v2600 = vsel %vm2427, %v2596, 0.0
    %2601 = vadd.xlane.f32.xlu0 %v2600
    %v2602 = vpop.xlane.xlu0 %2601
    %v2603 = vsel %vm2427, %v2597, 0.0
    %2604 = vadd.xlane.f32.xlu0 %v2603
    %v2605 = vpop.xlane.xlu0 %2604
    %v2606 = vsel %vm2427, %v2598, 0.0
    %2607 = vadd.xlane.f32.xlu0 %v2606
    %v2608 = vpop.xlane.xlu0 %2607
    %v2609 = vsel %vm2427, %v2599, 0.0
    %2610 = vadd.xlane.f32.xlu0 %v2609
    %v2611 = vpop.xlane.xlu0 %2610
    %v2612 = vadd.f32 %v2602, %v2403
    %v2613 = vadd.f32 %v2605, %v2404
    %v2614 = vadd.f32 %v2608, %v2405
    %v2615 = vadd.f32 %v2611, %v2406
    %v2616 = vxor.u32 %v2612, 2147483648
    %v2617 = vxor.u32 %v2613, 2147483648
    %v2618 = vxor.u32 %v2614, 2147483648
    %v2619 = vxor.u32 %v2615, 2147483648
    %v2620 = vmul.f32 %v2616, 1.442695
    %v2621 = vpow.pop %v2620
    %v2622 = vmul.f32 %v2617, 1.442695
    %v2623 = vpow.pop %v2622
    %v2624 = vmul.f32 %v2618, 1.442695
    %v2625 = vpow.pop %v2624
    %v2626 = vmul.f32 %v2619, 1.442695
    %v2627 = vpow.pop %v2626
    %v2628 = vadd.f32 %v2621, 1.0
    %v2629 = vadd.f32 %v2623, 1.0
    %v2630 = vadd.f32 %v2625, 1.0
    %v2631 = vadd.f32 %v2627, 1.0
    %v2632 = vrcp.pop %v2628
    %v2633 = vmul.f32 %v2628, %v2632
    %v2634 = vsub.f32 1.0, %v2633
    %v2635 = vmul.f32 %v2632, %v2634
    %v2636 = vadd.f32 %v2632, %v2635
    %vm2637 = vweird.f32 %v2628
    %vm2638 = vweird.f32 %v2632
    %vm2639 = vmor %vm2637, %vm2638
    %v2640 = vsel %vm2639, %v2632, %v2636
    %v2641 = vand.u32 2147483647, %v2628
    %vm2642 = vcmp.eq.f32.partialorder %v2641, 8.507059e+37
    %v2643 = vand.u32 %v2628, 2147483648
    %v2644 = vor.u32 1.1754944e-38, %v2643
    %v2645 = vsel %vm2642, %v2644, %v2640
    %v2646 = vmul.f32 1.0, %v2645
    %v2647 = vrcp.pop %v2629
    %v2648 = vmul.f32 %v2629, %v2647
    %v2649 = vsub.f32 1.0, %v2648
    %v2650 = vmul.f32 %v2647, %v2649
    %v2651 = vadd.f32 %v2647, %v2650
    %vm2652 = vweird.f32 %v2629
    %vm2653 = vweird.f32 %v2647
    %vm2654 = vmor %vm2652, %vm2653
    %v2655 = vsel %vm2654, %v2647, %v2651
    %v2656 = vand.u32 2147483647, %v2629
    %vm2657 = vcmp.eq.f32.partialorder %v2656, 8.507059e+37
    %v2658 = vand.u32 %v2629, 2147483648
    %v2659 = vor.u32 1.1754944e-38, %v2658
    %v2660 = vsel %vm2657, %v2659, %v2655
    %v2661 = vmul.f32 1.0, %v2660
    %v2662 = vrcp.pop %v2630
    %v2663 = vmul.f32 %v2630, %v2662
    %v2664 = vsub.f32 1.0, %v2663
    %v2665 = vmul.f32 %v2662, %v2664
    %v2666 = vadd.f32 %v2662, %v2665
    %vm2667 = vweird.f32 %v2630
    %vm2668 = vweird.f32 %v2662
    %vm2669 = vmor %vm2667, %vm2668
    %v2670 = vsel %vm2669, %v2662, %v2666
    %v2671 = vand.u32 2147483647, %v2630
    %vm2672 = vcmp.eq.f32.partialorder %v2671, 8.507059e+37
    %v2673 = vand.u32 %v2630, 2147483648
    %v2674 = vor.u32 1.1754944e-38, %v2673
    %v2675 = vsel %vm2672, %v2674, %v2670
    %v2676 = vmul.f32 1.0, %v2675
    %v2677 = vrcp.pop %v2631
    %v2678 = vmul.f32 %v2631, %v2677
    %v2679 = vsub.f32 1.0, %v2678
    %v2680 = vmul.f32 %v2677, %v2679
    %v2681 = vadd.f32 %v2677, %v2680
    %vm2682 = vweird.f32 %v2631
    %vm2683 = vweird.f32 %v2677
    %vm2684 = vmor %vm2682, %vm2683
    %v2685 = vsel %vm2684, %v2677, %v2681
    %v2686 = vand.u32 2147483647, %v2631
    %vm2687 = vcmp.eq.f32.partialorder %v2686, 8.507059e+37
    %v2688 = vand.u32 %v2631, 2147483648
    %v2689 = vor.u32 1.1754944e-38, %v2688
    %v2690 = vsel %vm2687, %v2689, %v2685
    %v2691 = vmul.f32 1.0, %v2690
    %2693 = vset.pattern.permute.xlu0 0
    %2694 = vperm.xlu0 %2693, %v2646
    %v2695 = vpop.permute.xlu0 %2694
    %2698 = vset.pattern.permute.xlu0 0
    %2699 = vperm.xlu0 %2698, %v2661
    %v2700 = vpop.permute.xlu0 %2699
    %2703 = vset.pattern.permute.xlu0 0
    %2704 = vperm.xlu0 %2703, %v2676
    %v2705 = vpop.permute.xlu0 %2704
    %2708 = vset.pattern.permute.xlu0 0
    %2709 = vperm.xlu0 %2708, %v2691
    %v2710 = vpop.permute.xlu0 %2709
    %v2712 = vmul.f32 %v2296, %v2543
    %v2713 = vmul.f32 %v2325, %v2543
    %v2714 = vmul.f32 %v2354, %v2695
    %v2715 = vmul.f32 %v2383, %v2695
    %v2716 = vmul.f32 %v2299, %v2548
    %v2717 = vmul.f32 %v2328, %v2548
    %v2718 = vmul.f32 %v2357, %v2700
    %v2719 = vmul.f32 %v2386, %v2700
    %v2720 = vmul.f32 %v2302, %v2553
    %v2721 = vmul.f32 %v2331, %v2553
    %v2722 = vmul.f32 %v2360, %v2705
    %v2723 = vmul.f32 %v2389, %v2705
    %v2724 = vmul.f32 %v2305, %v2558
    %v2725 = vmul.f32 %v2334, %v2558
    %v2726 = vmul.f32 %v2363, %v2710
    %v2727 = vmul.f32 %v2392, %v2710
    %v2728 = vmul.f32 %v2712, 0.1
    %v2729 = vmul.f32 %v2713, 0.1
    %v2730 = vmul.f32 %v2714, 0.1
    %v2731 = vmul.f32 %v2715, 0.1
    %v2732 = vmul.f32 %v2716, 0.1
    %v2733 = vmul.f32 %v2717, 0.1
    %v2734 = vmul.f32 %v2718, 0.1
    %v2735 = vmul.f32 %v2719, 0.1
    %v2736 = vmul.f32 %v2720, 0.1
    %v2737 = vmul.f32 %v2721, 0.1
    %v2738 = vmul.f32 %v2722, 0.1
    %v2739 = vmul.f32 %v2723, 0.1
    %v2740 = vmul.f32 %v2724, 0.1
    %v2741 = vmul.f32 %v2725, 0.1
    %v2742 = vmul.f32 %v2726, 0.1
    %v2743 = vmul.f32 %v2727, 0.1
    %v2744 = vadd.f32 %v2050, %v2728
    %v2745 = vadd.f32 %v2051, %v2729
    %v2746 = vadd.f32 %v2052, %v2730
    %v2747 = vadd.f32 %v2053, %v2731
    %v2748 = vadd.f32 %v2054, %v2732
    %v2749 = vadd.f32 %v2055, %v2733
    %v2750 = vadd.f32 %v2056, %v2734
    %v2751 = vadd.f32 %v2057, %v2735
    %v2752 = vadd.f32 %v2058, %v2736
    %v2753 = vadd.f32 %v2059, %v2737
    %v2754 = vadd.f32 %v2060, %v2738
    %v2755 = vadd.f32 %v2061, %v2739
    %v2756 = vadd.f32 %v2062, %v2740
    %v2757 = vadd.f32 %v2063, %v2741
    %v2758 = vadd.f32 %v2064, %v2742
    %v2759 = vadd.f32 %v2065, %v2743
    %2760 = vst [vmem:[#allocation8] sm:$0xff] %v2744
    %2761 = vst [vmem:[#allocation8 + $0x8] sm:$0xff] %v2745
    %2762 = vst [vmem:[#allocation8 + $0x10] sm:$0xff] %v2746
    %2763 = vst [vmem:[#allocation8 + $0x18] sm:$0xff] %v2747
    %2764 = vst [vmem:[#allocation8 + $0x20] sm:$0xff] %v2748
    %2765 = vst [vmem:[#allocation8 + $0x28] sm:$0xff] %v2749
    %2766 = vst [vmem:[#allocation8 + $0x30] sm:$0xff] %v2750
    %2767 = vst [vmem:[#allocation8 + $0x38] sm:$0xff] %v2751
    %2768 = vst [vmem:[#allocation8 + $0x40] sm:$0xff] %v2752
    %2769 = vst [vmem:[#allocation8 + $0x48] sm:$0xff] %v2753
    %2770 = vst [vmem:[#allocation8 + $0x50] sm:$0xff] %v2754
    %2771 = vst [vmem:[#allocation8 + $0x58] sm:$0xff] %v2755
    %2772 = vst [vmem:[#allocation8 + $0x60] sm:$0xff] %v2756
    %2773 = vst [vmem:[#allocation8 + $0x68] sm:$0xff] %v2757
    %2774 = vst [vmem:[#allocation8 + $0x70] sm:$0xff] %v2758
    %2775 = vst [vmem:[#allocation8 + $0x78] sm:$0xff] %v2759
    // Predicated region
    $region70: #{tpu_custom_call.1} parent=1 // pred_check
      _
    $region71: #{tpu_custom_call.1} parent=1 // pred_check_branch
      %2777 = sbr.rel (0) target = $region73
    $region72: #{tpu_custom_call.1} parent=1 // pred_region
      %2779 = vsyncadd [#allocation4], 0
      %s2780 = sshll.u32 [#allocation8], 4
      %s2781 = int_to_ptr.vmem [resolvable:$true] %s2780
      %s2782 = sshll.u32 %s14, 4
      %s2783 = int_to_ptr.hbm [resolvable:$true] %s2782
      %2788 = dma.vmem_to_hbm [thread:$0]  %s2781, 2048, %s2783, [#allocation4], 512, 512, 32
    $region73: #{tpu_custom_call.1} parent=1 // pred_fallthru
      _
    // Predicated region
    $region74: #{tpu_custom_call.1} parent=1 // pred_check
      _
    $region75: #{tpu_custom_call.1} parent=1 // pred_check_branch
      %2790 = sbr.rel (0) target = $region77
    $region76: #{tpu_custom_call.1} parent=1 // pred_region
      %2792 = dma.done [#allocation4], 2048
    $region77: #{tpu_custom_call.1} parent=1 // pred_fallthru
      _
    %2793 = vsyncpa [#allocation3], 1
    %2794 = vsyncpa [#allocation6], 1
    %2795 = vsyncpa [#allocation4], 1

</llo_original>
